<compile_context>
chip_gen: v5e
topology: v5e:2x2
jax: 0.10.0
libtpu: 0.0.40
codegen_flags: <defaults>
</compile_context>

<pallas_src>
import functools

import jax
import jax.numpy as jnp
from jax import lax
from jax.experimental import pallas as pl
from jax.experimental.pallas import tpu as pltpu

n_embed = 384
block_size = 256
dropout_p = 0.2  # nn.Dropout(0.2) is identity in eval mode; see TODO below.

_LOG2E = 1.4426950408889634  # log2(e); folded into W_q so the kernel uses exp2


def head_kernel(q_ref, k_ref, v_ref, o_ref, m_sc, l_sc, acc_sc, *, tile, num_kv):
    """One grid step = one query tile, all batch elements.

    q_ref : (B, TQ, H) bf16   query tile, pre-scaled by C**-0.5 * log2(e)
    k_ref : (B, T,  H) bf16   all keys   (block constant across the grid)
    v_ref : (B, T,  H) bf16   all values (block constant across the grid)
    o_ref : (B, TQ, H) bf16   output tile
    m/l_sc : (B, TQ, 1) f32 ; acc_sc : (B, TQ, H) f32   online-softmax state
    """
    qi = pl.program_id(0)
    TQ = TK = tile
    q = q_ref[...]                                           # (B, TQ, H) bf16

    m_sc[...] = jnp.full_like(m_sc, -jnp.inf)
    l_sc[...] = jnp.zeros_like(l_sc)
    acc_sc[...] = jnp.zeros_like(acc_sc)

    def attend(k_tile, v_tile, mask):
        # Scores in log2 space (scale * log2(e) folded into q); f32 accumulate.
        s = jnp.einsum('bqd,bkd->bqk', q, k_tile,
                       preferred_element_type=jnp.float32)    # (B, TQ, TK)
        if mask is not None:
            s = jnp.where(mask, s, -jnp.inf)
        m_prev = m_sc[...]
        m_new = jnp.maximum(m_prev, jnp.max(s, axis=-1, keepdims=True))
        alpha = jnp.exp2(m_prev - m_new)                       # (B, TQ, 1) f32
        # exp2 on bf16 arguments: p is consumed by the bf16 PV matmul anyway;
        # the row-sum is accumulated in f32.  (v5e has no bf16 EUP and simply
        # upcasts internally; v6e/v7x get the ~2x bf16 EUP throughput.)
        p = jnp.exp2((s - m_new).astype(jnp.bfloat16))         # (B,TQ,TK) bf16
        l_sc[...] = alpha * l_sc[...] + jnp.sum(
            p, axis=-1, keepdims=True, dtype=jnp.float32)
        acc_sc[...] = alpha * acc_sc[...] + jnp.einsum(
            'bqk,bkd->bqd', p, v_tile, preferred_element_type=jnp.float32)
        m_sc[...] = m_new

    # ---- off-diagonal key tiles (kj < qi): fully unmasked -----------------
    # Static Python unroll (num_kv <= 2 for block_size = 256) + pl.when
    # predication: static trip count for the scheduler, future tiles skipped.
    for kj in range(num_kv - 1):
        @pl.when(kj < qi)
        def _(kj=kj):
            attend(k_ref[:, kj * TK:(kj + 1) * TK, :],
                   v_ref[:, kj * TK:(kj + 1) * TK, :], mask=None)

    # ---- diagonal key tile (kj == qi): the only masked tile ---------------
    # With TQ == TK the causal condition reduces to intra-tile j <= i, so the
    # mask is built once per step from two small iotas (qi-independent).
    row = lax.broadcasted_iota(jnp.int32, (TQ, 1), 0)
    col = lax.broadcasted_iota(jnp.int32, (1, TK), 1)
    d_off = pl.multiple_of(qi * TK, TK)
    attend(k_ref[:, pl.ds(d_off, TK), :],
           v_ref[:, pl.ds(d_off, TK), :], mask=col <= row)

    # TODO(synk): nn.Dropout(0.2) on the attention weights is identity in eval
    # mode; training-mode stochastic dropout (pltpu.prng_random_bits) omitted.

    out = acc_sc[...] * pl.reciprocal(l_sc[...], approx=True)
    o_ref[...] = out.astype(o_ref.dtype)


def head_forward(x, w_key, w_query, w_value):
    """x: (B, T, C) f32; w_*: (C, H) f32 (pre-transposed Linear weights).

    Returns (B, T, H) bf16 — the compute path is bf16-MXU / f32-accumulate
    throughout, so a bf16 result loses no additional accuracy.
    """
    B, T, C = x.shape
    H = w_key.shape[1]
    TQ = min(128, T)
    assert T % TQ == 0, "sequence length must be divisible by the query tile"
    num_kv = T // TQ

    # nanoGPT Head scales scores by C**-0.5 with C = n_embed (not head_size).
    # Fold that scale and log2(e) into W_q, fuse the three projections into a
    # single (C, 3H) matmul done by XLA outside the attention kernel.
    scale = float(C) ** -0.5 * _LOG2E
    w_kqv = jnp.concatenate(
        [w_key, w_query * scale, w_value], axis=1).astype(jnp.bfloat16)
    kqv = jnp.matmul(x.astype(jnp.bfloat16), w_kqv)          # (B, T, 3H) bf16
    k, q, v = jnp.split(kqv, 3, axis=-1)                     # each (B, T, H)

    kernel = functools.partial(head_kernel, tile=TQ, num_kv=num_kv)
    return pl.pallas_call(
        kernel,
        out_shape=jax.ShapeDtypeStruct((B, T, H), jnp.bfloat16),
        grid_spec=pltpu.PrefetchScalarGridSpec(
            num_scalar_prefetch=0,
            grid=(num_kv,),
            in_specs=[
                pl.BlockSpec((B, TQ, H), lambda qi: (0, qi, 0)),  # Q tile
                pl.BlockSpec((B, T, H), lambda qi: (0, 0, 0)),    # all K
                pl.BlockSpec((B, T, H), lambda qi: (0, 0, 0)),    # all V
            ],
            out_specs=pl.BlockSpec((B, TQ, H), lambda qi: (0, qi, 0)),
            scratch_shapes=[
                pltpu.VMEM((B, TQ, 1), jnp.float32),   # running max
                pltpu.VMEM((B, TQ, 1), jnp.float32),   # running denom
                pltpu.VMEM((B, TQ, H), jnp.float32),   # output accumulator
            ],
        ),
        compiler_params=pltpu.CompilerParams(
            # No cross-step state (scratch is re-initialized every step), so
            # the query-tile axis is freely shardable across TensorCores.
            dimension_semantics=("parallel",),
        ),
    )(q, k, v)


def head_reference(x, w_key, w_query, w_value):
    B, T, C = x.shape
    k = x @ w_key
    q = x @ w_query
    v = x @ w_value
    wei = (q @ jnp.swapaxes(k, -2, -1)) * (C ** -0.5)
    mask = jnp.tril(jnp.ones((T, T), dtype=bool))
    wei = jnp.where(mask, wei, -jnp.inf)
    wei = jax.nn.softmax(wei, axis=-1)
    return wei @ v


if __name__ == "__main__":
    # head_size = n_embed // n_head = 384 // 6 = 64; T = block_size exercises
    # the (8,128) tiling, both query tiles, and the causal-skip path.
    B, T, C, head_size = 2, block_size, n_embed, 64
    assert T <= block_size

    key = jax.random.PRNGKey(0)
    kx, kk, kq, kv = jax.random.split(key, 4)

    x = jax.random.normal(kx, (B, T, C), dtype=jnp.float32)
    wscale = 1.0 / (C ** 0.5)
    w_key = jax.random.normal(kk, (C, head_size), dtype=jnp.float32) * wscale
    w_query = jax.random.normal(kq, (C, head_size), dtype=jnp.float32) * wscale
    w_value = jax.random.normal(kv, (C, head_size), dtype=jnp.float32) * wscale

    out = head_forward(x, w_key, w_query, w_value)
    out = jax.block_until_ready(out)

    ref = head_reference(x, w_key, w_query, w_value)
    assert out.shape == (B, T, head_size)
    # bf16 MXU operands, bf16 exp2 arguments, approx reciprocal, bf16 output
    # => bf16-level tolerance against the f32 reference.
    err = float(jnp.max(jnp.abs(out.astype(jnp.float32) - ref)))
    assert err < 2.5e-2, err

    print("KERNEL_OK")
</pallas_src>

<mosaic_0001>
module attributes {stable_mosaic.version = 11 : i64} {
  func.func @head_kernel(%arg0: i32, %arg1: memref<2x128x64xbf16, #tpu.memory_space<vmem>>, %arg2: memref<2x256x64xbf16, #tpu.memory_space<vmem>>, %arg3: memref<2x256x64xbf16, #tpu.memory_space<vmem>>, %arg4: memref<2x128x64xbf16, #tpu.memory_space<vmem>>, %arg5: memref<2x128x1xf32, #tpu.memory_space<vmem>>, %arg6: memref<2x128x1xf32, #tpu.memory_space<vmem>>, %arg7: memref<2x128x64xf32, #tpu.memory_space<vmem>>) attributes {dimension_semantics = [#tpu.dimension_semantics<parallel>], iteration_bounds = array<i64: 2>, scalar_prefetch = 0 : i64, scratch_operands = 3 : i64, tpu.core_type = #tpu.core_type<tc>, window_params = [{transform_indices = @transform_0, window_bounds = array<i64: 2, 128, 64>}, {pipeline_mode = #tpu.pipeline_mode<synchronous>, transform_indices = @transform_1, window_bounds = array<i64: 2, 256, 64>}, {pipeline_mode = #tpu.pipeline_mode<synchronous>, transform_indices = @transform_2, window_bounds = array<i64: 2, 256, 64>}, {transform_indices = @transform_3, window_bounds = array<i64: 2, 128, 64>}]} {
    %c0 = arith.constant 0 : index
    %c0_0 = arith.constant 0 : index
    %c0_1 = arith.constant 0 : index
    %0 = vector.load %arg1[%c0, %c0_0, %c0_1] : memref<2x128x64xbf16, #tpu.memory_space<vmem>>, vector<2x128x64xbf16>
    %cst = arith.constant 0xFF800000 : f32
    %1 = vector.broadcast %cst : f32 to vector<2x128x1xf32>
    %c0_2 = arith.constant 0 : index
    %c0_3 = arith.constant 0 : index
    %c0_4 = arith.constant 0 : index
    %2 = vector.load %arg5[%c0_2, %c0_3, %c0_4] : memref<2x128x1xf32, #tpu.memory_space<vmem>>, vector<2x128x1xf32>
    tpu.vector_store %arg5[%c0_2, %c0_3, %c0_4], %1 {strides = array<i32>} : memref<2x128x1xf32, #tpu.memory_space<vmem>>, vector<2x128x1xf32>,
    %cst_5 = arith.constant 0.000000e+00 : f32
    %3 = vector.broadcast %cst_5 : f32 to vector<2x128x1xf32>
    %c0_6 = arith.constant 0 : index
    %c0_7 = arith.constant 0 : index
    %c0_8 = arith.constant 0 : index
    %4 = vector.load %arg6[%c0_6, %c0_7, %c0_8] : memref<2x128x1xf32, #tpu.memory_space<vmem>>, vector<2x128x1xf32>
    tpu.vector_store %arg6[%c0_6, %c0_7, %c0_8], %3 {strides = array<i32>} : memref<2x128x1xf32, #tpu.memory_space<vmem>>, vector<2x128x1xf32>,
    %cst_9 = arith.constant 0.000000e+00 : f32
    %5 = vector.broadcast %cst_9 : f32 to vector<2x128x64xf32>
    %c0_10 = arith.constant 0 : index
    %c0_11 = arith.constant 0 : index
    %c0_12 = arith.constant 0 : index
    %6 = vector.load %arg7[%c0_10, %c0_11, %c0_12] : memref<2x128x64xf32, #tpu.memory_space<vmem>>, vector<2x128x64xf32>
    tpu.vector_store %arg7[%c0_10, %c0_11, %c0_12], %5 {strides = array<i32>} : memref<2x128x64xf32, #tpu.memory_space<vmem>>, vector<2x128x64xf32>,
    %c0_i32 = arith.constant 0 : i32
    %7 = arith.cmpi sgt, %arg0, %c0_i32 : i32
    %8 = arith.extui %7 : i1 to i32
    %c0_i32_13 = arith.constant 0 : i32
    %9 = arith.cmpi ne, %8, %c0_i32_13 : i32
    scf.if %9 {
      %c0_50 = arith.constant 0 : index
      %c0_51 = arith.constant 0 : index
      %c0_52 = arith.constant 0 : index
      %57 = vector.load %arg2[%c0_50, %c0_51, %c0_52] : memref<2x256x64xbf16, #tpu.memory_space<vmem>>, vector<2x128x64xbf16>
      %c0_53 = arith.constant 0 : index
      %c0_54 = arith.constant 0 : index
      %c0_55 = arith.constant 0 : index
      %58 = vector.load %arg3[%c0_53, %c0_54, %c0_55] : memref<2x256x64xbf16, #tpu.memory_space<vmem>>, vector<2x128x64xbf16>
      "tpu.trace_start"() <{level = 10 : i32, message = "bqd,bkd->bqk"}> : () -> ()
      %cst_56 = arith.constant dense<0.000000e+00> : vector<2x128x128xf32>
      %59 = tpu.matmul %0, %57, %cst_56 {dimension_numbers = #tpu.dot_dimension_numbers<[2], [2], [1], [1], [0, 0, 0, 1, 1, 1], [0], [0]>} : vector<2x128x64xbf16>, vector<2x128x64xbf16>, vector<2x128x128xf32> -> vector<2x128x128xf32>
      "tpu.trace_stop"() : () -> ()
      %c0_57 = arith.constant 0 : index
      %c0_58 = arith.constant 0 : index
      %c0_59 = arith.constant 0 : index
      %60 = vector.load %arg5[%c0_57, %c0_58, %c0_59] : memref<2x128x1xf32, #tpu.memory_space<vmem>>, vector<2x128x1xf32>
      %cst_60 = arith.constant dense<0xFF800000> : vector<2x128xf32>
      %61 = vector.multi_reduction <maximumf>, %59, %cst_60 [2] : vector<2x128x128xf32> to vector<2x128xf32>
      %62 = vector.shape_cast %61 : vector<2x128xf32> to vector<2x128x1xf32>
      %63 = arith.maximumf %60, %62 : vector<2x128x1xf32>
      %64 = arith.subf %60, %63 : vector<2x128x1xf32>
      %65 = math.exp2 %64 : vector<2x128x1xf32>
      %66 = vector.broadcast %63 : vector<2x128x1xf32> to vector<2x128x128xf32>
      %67 = arith.subf %59, %66 : vector<2x128x128xf32>
      %68 = arith.truncf %67 : vector<2x128x128xf32> to vector<2x128x128xbf16>
      %69 = math.exp2 %68 : vector<2x128x128xbf16>
      %c0_61 = arith.constant 0 : index
      %c0_62 = arith.constant 0 : index
      %c0_63 = arith.constant 0 : index
      %70 = vector.load %arg6[%c0_61, %c0_62, %c0_63] : memref<2x128x1xf32, #tpu.memory_space<vmem>>, vector<2x128x1xf32>
      %71 = arith.mulf %65, %70 : vector<2x128x1xf32>
      %72 = arith.extf %69 : vector<2x128x128xbf16> to vector<2x128x128xf32>
      %cst_64 = arith.constant dense<0.000000e+00> : vector<2x128xf32>
      %73 = vector.multi_reduction <add>, %72, %cst_64 [2] : vector<2x128x128xf32> to vector<2x128xf32>
      %74 = vector.shape_cast %73 : vector<2x128xf32> to vector<2x128x1xf32>
      %75 = arith.addf %71, %74 : vector<2x128x1xf32>
      %c0_65 = arith.constant 0 : index
      %c0_66 = arith.constant 0 : index
      %c0_67 = arith.constant 0 : index
      %76 = vector.load %arg6[%c0_65, %c0_66, %c0_67] : memref<2x128x1xf32, #tpu.memory_space<vmem>>, vector<2x128x1xf32>
      tpu.vector_store %arg6[%c0_65, %c0_66, %c0_67], %75 {strides = array<i32>} : memref<2x128x1xf32, #tpu.memory_space<vmem>>, vector<2x128x1xf32>,
      %c0_68 = arith.constant 0 : index
      %c0_69 = arith.constant 0 : index
      %c0_70 = arith.constant 0 : index
      %77 = vector.load %arg7[%c0_68, %c0_69, %c0_70] : memref<2x128x64xf32, #tpu.memory_space<vmem>>, vector<2x128x64xf32>
      %78 = vector.broadcast %65 : vector<2x128x1xf32> to vector<2x128x64xf32>
      %79 = arith.mulf %78, %77 : vector<2x128x64xf32>
      "tpu.trace_start"() <{level = 10 : i32, message = "bqk,bkd->bqd"}> : () -> ()
      %cst_71 = arith.constant dense<0.000000e+00> : vector<2x128x64xf32>
      %80 = tpu.matmul %69, %58, %cst_71 {dimension_numbers = #tpu.dot_dimension_numbers<[2], [1], [1], [2], [0, 0, 0, 1, 1, 2], [0], [0]>} : vector<2x128x128xbf16>, vector<2x128x64xbf16>, vector<2x128x64xf32> -> vector<2x128x64xf32>
      "tpu.trace_stop"() : () -> ()
      %81 = arith.addf %79, %80 : vector<2x128x64xf32>
      %c0_72 = arith.constant 0 : index
      %c0_73 = arith.constant 0 : index
      %c0_74 = arith.constant 0 : index
      %82 = vector.load %arg7[%c0_72, %c0_73, %c0_74] : memref<2x128x64xf32, #tpu.memory_space<vmem>>, vector<2x128x64xf32>
      tpu.vector_store %arg7[%c0_72, %c0_73, %c0_74], %81 {strides = array<i32>} : memref<2x128x64xf32, #tpu.memory_space<vmem>>, vector<2x128x64xf32>,
      %c0_75 = arith.constant 0 : index
      %c0_76 = arith.constant 0 : index
      %c0_77 = arith.constant 0 : index
      %83 = vector.load %arg5[%c0_75, %c0_76, %c0_77] : memref<2x128x1xf32, #tpu.memory_space<vmem>>, vector<2x128x1xf32>
      tpu.vector_store %arg5[%c0_75, %c0_76, %c0_77], %63 {strides = array<i32>} : memref<2x128x1xf32, #tpu.memory_space<vmem>>, vector<2x128x1xf32>,
    } else {
    }
    %10 = tpu.iota {dimensions = array<i32: 0>} : vector<128x1xi32>
    %11 = tpu.iota {dimensions = array<i32: 1>} : vector<1x128xi32>
    %c128_i32 = arith.constant 128 : i32
    %12 = arith.muli %arg0, %c128_i32 : i32
    %13 = tpu.assume_multiple %12, 128 : i32
    %c0_14 = arith.constant 0 : index
    %14 = arith.index_cast %13 : i32 to index
    %c0_15 = arith.constant 0 : index
    %15 = vector.load %arg2[%c0_14, %14, %c0_15] : memref<2x256x64xbf16, #tpu.memory_space<vmem>>, vector<2x128x64xbf16>
    %c0_16 = arith.constant 0 : index
    %16 = arith.index_cast %13 : i32 to index
    %c0_17 = arith.constant 0 : index
    %17 = vector.load %arg3[%c0_16, %16, %c0_17] : memref<2x256x64xbf16, #tpu.memory_space<vmem>>, vector<2x128x64xbf16>
    %18 = vector.broadcast %11 : vector<1x128xi32> to vector<128x128xi32>
    %19 = vector.broadcast %10 : vector<128x1xi32> to vector<128x128xi32>
    %20 = arith.cmpi sle, %18, %19 : vector<128x128xi32>
    "tpu.trace_start"() <{level = 10 : i32, message = "bqd,bkd->bqk"}> : () -> ()
    %cst_18 = arith.constant dense<0.000000e+00> : vector<2x128x128xf32>
    %21 = tpu.matmul %0, %15, %cst_18 {dimension_numbers = #tpu.dot_dimension_numbers<[2], [2], [1], [1], [0, 0, 0, 1, 1, 1], [0], [0]>} : vector<2x128x64xbf16>, vector<2x128x64xbf16>, vector<2x128x128xf32> -> vector<2x128x128xf32>
    %cst_19 = arith.constant 0xFF800000 : f32
    "tpu.trace_stop"() : () -> ()
    %22 = vector.shape_cast %20 : vector<128x128xi1> to vector<1x128x128xi1>
    %23 = vector.broadcast %22 : vector<1x128x128xi1> to vector<2x128x128xi1>
    %24 = vector.broadcast %cst_19 : f32 to vector<2x128x128xf32>
    %25 = arith.select %23, %21, %24 : vector<2x128x128xi1>, vector<2x128x128xf32>
    %c0_20 = arith.constant 0 : index
    %c0_21 = arith.constant 0 : index
    %c0_22 = arith.constant 0 : index
    %26 = vector.load %arg5[%c0_20, %c0_21, %c0_22] : memref<2x128x1xf32, #tpu.memory_space<vmem>>, vector<2x128x1xf32>
    %cst_23 = arith.constant dense<0xFF800000> : vector<2x128xf32>
    %27 = vector.multi_reduction <maximumf>, %25, %cst_23 [2] : vector<2x128x128xf32> to vector<2x128xf32>
    %28 = vector.shape_cast %27 : vector<2x128xf32> to vector<2x128x1xf32>
    %29 = arith.maximumf %26, %28 : vector<2x128x1xf32>
    %30 = arith.subf %26, %29 : vector<2x128x1xf32>
    %31 = math.exp2 %30 : vector<2x128x1xf32>
    %32 = vector.broadcast %29 : vector<2x128x1xf32> to vector<2x128x128xf32>
    %33 = arith.subf %25, %32 : vector<2x128x128xf32>
    %34 = arith.truncf %33 : vector<2x128x128xf32> to vector<2x128x128xbf16>
    %35 = math.exp2 %34 : vector<2x128x128xbf16>
    %c0_24 = arith.constant 0 : index
    %c0_25 = arith.constant 0 : index
    %c0_26 = arith.constant 0 : index
    %36 = vector.load %arg6[%c0_24, %c0_25, %c0_26] : memref<2x128x1xf32, #tpu.memory_space<vmem>>, vector<2x128x1xf32>
    %37 = arith.mulf %31, %36 : vector<2x128x1xf32>
    %38 = arith.extf %35 : vector<2x128x128xbf16> to vector<2x128x128xf32>
    %cst_27 = arith.constant dense<0.000000e+00> : vector<2x128xf32>
    %39 = vector.multi_reduction <add>, %38, %cst_27 [2] : vector<2x128x128xf32> to vector<2x128xf32>
    %40 = vector.shape_cast %39 : vector<2x128xf32> to vector<2x128x1xf32>
    %41 = arith.addf %37, %40 : vector<2x128x1xf32>
    %c0_28 = arith.constant 0 : index
    %c0_29 = arith.constant 0 : index
    %c0_30 = arith.constant 0 : index
    %42 = vector.load %arg6[%c0_28, %c0_29, %c0_30] : memref<2x128x1xf32, #tpu.memory_space<vmem>>, vector<2x128x1xf32>
    tpu.vector_store %arg6[%c0_28, %c0_29, %c0_30], %41 {strides = array<i32>} : memref<2x128x1xf32, #tpu.memory_space<vmem>>, vector<2x128x1xf32>,
    %c0_31 = arith.constant 0 : index
    %c0_32 = arith.constant 0 : index
    %c0_33 = arith.constant 0 : index
    %43 = vector.load %arg7[%c0_31, %c0_32, %c0_33] : memref<2x128x64xf32, #tpu.memory_space<vmem>>, vector<2x128x64xf32>
    %44 = vector.broadcast %31 : vector<2x128x1xf32> to vector<2x128x64xf32>
    %45 = arith.mulf %44, %43 : vector<2x128x64xf32>
    "tpu.trace_start"() <{level = 10 : i32, message = "bqk,bkd->bqd"}> : () -> ()
    %cst_34 = arith.constant dense<0.000000e+00> : vector<2x128x64xf32>
    %46 = tpu.matmul %35, %17, %cst_34 {dimension_numbers = #tpu.dot_dimension_numbers<[2], [1], [1], [2], [0, 0, 0, 1, 1, 2], [0], [0]>} : vector<2x128x128xbf16>, vector<2x128x64xbf16>, vector<2x128x64xf32> -> vector<2x128x64xf32>
    "tpu.trace_stop"() : () -> ()
    %47 = arith.addf %45, %46 : vector<2x128x64xf32>
    %c0_35 = arith.constant 0 : index
    %c0_36 = arith.constant 0 : index
    %c0_37 = arith.constant 0 : index
    %48 = vector.load %arg7[%c0_35, %c0_36, %c0_37] : memref<2x128x64xf32, #tpu.memory_space<vmem>>, vector<2x128x64xf32>
    tpu.vector_store %arg7[%c0_35, %c0_36, %c0_37], %47 {strides = array<i32>} : memref<2x128x64xf32, #tpu.memory_space<vmem>>, vector<2x128x64xf32>,
    %c0_38 = arith.constant 0 : index
    %c0_39 = arith.constant 0 : index
    %c0_40 = arith.constant 0 : index
    %49 = vector.load %arg5[%c0_38, %c0_39, %c0_40] : memref<2x128x1xf32, #tpu.memory_space<vmem>>, vector<2x128x1xf32>
    tpu.vector_store %arg5[%c0_38, %c0_39, %c0_40], %29 {strides = array<i32>} : memref<2x128x1xf32, #tpu.memory_space<vmem>>, vector<2x128x1xf32>,
    %c0_41 = arith.constant 0 : index
    %c0_42 = arith.constant 0 : index
    %c0_43 = arith.constant 0 : index
    %50 = vector.load %arg7[%c0_41, %c0_42, %c0_43] : memref<2x128x64xf32, #tpu.memory_space<vmem>>, vector<2x128x64xf32>
    %c0_44 = arith.constant 0 : index
    %c0_45 = arith.constant 0 : index
    %c0_46 = arith.constant 0 : index
    %51 = vector.load %arg6[%c0_44, %c0_45, %c0_46] : memref<2x128x1xf32, #tpu.memory_space<vmem>>, vector<2x128x1xf32>
    %52 = tpu.reciprocal %51 {approx = true} : vector<2x128x1xf32> -> vector<2x128x1xf32>
    %53 = vector.broadcast %52 : vector<2x128x1xf32> to vector<2x128x64xf32>
    %54 = arith.mulf %50, %53 : vector<2x128x64xf32>
    %55 = arith.truncf %54 : vector<2x128x64xf32> to vector<2x128x64xbf16>
    %c0_47 = arith.constant 0 : index
    %c0_48 = arith.constant 0 : index
    %c0_49 = arith.constant 0 : index
    %56 = vector.load %arg4[%c0_47, %c0_48, %c0_49] : memref<2x128x64xbf16, #tpu.memory_space<vmem>>, vector<2x128x64xbf16>
    tpu.vector_store %arg4[%c0_47, %c0_48, %c0_49], %55 {strides = array<i32>} : memref<2x128x64xbf16, #tpu.memory_space<vmem>>, vector<2x128x64xbf16>,
    return
  }
  func.func @transform_0(%arg0: i32) -> (i32, i32, i32) {
    %c0_i32 = arith.constant 0 : i32
    %c0_i32_0 = arith.constant 0 : i32
    %c0_i32_1 = arith.constant 0 : i32
    return %c0_i32, %arg0, %c0_i32_0 : i32, i32, i32
  }
  func.func @transform_1(%arg0: i32) -> (i32, i32, i32) {
    %c0_i32 = arith.constant 0 : i32
    %c0_i32_0 = arith.constant 0 : i32
    %c0_i32_1 = arith.constant 0 : i32
    %c0_i32_2 = arith.constant 0 : i32
    return %c0_i32, %c0_i32_0, %c0_i32_1 : i32, i32, i32
  }
  func.func @transform_2(%arg0: i32) -> (i32, i32, i32) {
    %c0_i32 = arith.constant 0 : i32
    %c0_i32_0 = arith.constant 0 : i32
    %c0_i32_1 = arith.constant 0 : i32
    %c0_i32_2 = arith.constant 0 : i32
    return %c0_i32, %c0_i32_0, %c0_i32_1 : i32, i32, i32
  }
  func.func @transform_3(%arg0: i32) -> (i32, i32, i32) {
    %c0_i32 = arith.constant 0 : i32
    %c0_i32_0 = arith.constant 0 : i32
    %c0_i32_1 = arith.constant 0 : i32
    return %c0_i32, %arg0, %c0_i32_0 : i32, i32, i32
  }
}

</mosaic_0001>

<llo_original>
// kernel: tpu_custom_call.1
$region0: #{tpu_custom_call.1}
  #allocation0 [shape = 'u32[]', space=smem, size = 0x4, offset = 0x4, fixed_abs, tag = 'smem constant byte address 0x4 - core index']
  #allocation1 [shape = 'u32[72,128]{1,0:T(1,128)}', space=vmem, size = 0x9000, scoped, tag = 'internal scratch']
  #allocation2 [shape = 'f32[2,128,1]{2,1,0:T(8,128)}', space=vmem, size = 0x20000, scoped, tag = 'scratch operand']
  #allocation3 [shape = 'f32[2,128,1]{2,1,0:T(8,128)}', space=vmem, size = 0x20000, scoped, tag = 'scratch operand']
  #allocation4 [shape = 'f32[2,128,64]{2,1,0:T(8,128)}', space=vmem, size = 0x20000, scoped, tag = 'scratch operand']
  %s0 = inlined_call_operand.vmem [shape: bf16[2,256,64], index: 0, kind: input, shape index: {}]
  %s1 = inlined_call_operand.vmem [shape: bf16[2,256,64], index: 1, kind: input, shape index: {}]
  %s2 = inlined_call_operand.vmem [shape: bf16[2,256,64], index: 2, kind: input, shape index: {}]
  %s3 = inlined_call_operand.vmem [shape: bf16[2,256,64], index: 3, kind: output, shape index: {}]
  %s4 = sld [smem:[#allocation0]]
  $region127: #{tpu_custom_call.1} parent=0
    _
  %s6 = ssub.s32 1, %s4
  %s7 = scalar_select 0, %s6, %s4
  $region1: #{tpu_custom_call.1} parent=0
    #allocation5 [shape = 'u8[131072]{0}', space=vmem, size = 0x20000, scoped, tag = 'input window, operand 0']
    #allocation6 [shape = 'u8[131072]{0}', space=vmem, size = 0x20000, scoped, tag = 'output window, operand 0']
    loop: start=0, step=1, limit=4
    $region2: #{tpu_custom_call.1} parent=1 // loop_pre_header
      _
    $region3: #{tpu_custom_call.1} parent=1 // loop_header
      %s9 = sphi 0, %s13
      %p10 = scmp.ge.s32.totalorder %s9, 4
      %s19 = sphi 0, %s21
      %s22 = sphi 0, %s19
      %s23 = sphi 0, %s22
      %s39 = sphi 0, %s23
      %s43 = sphi 0, %s43
      %s45 = sphi 0, %s43
      %s46 = sphi 0, %s45
      %s60 = sphi 0, %s46
      %s64 = sphi 0, %s64
      %s66 = sphi 0, %s64
      %s67 = sphi 0, %s66
      %s81 = sphi 0, %s67
      %s87 = sphi 0, %s89
      %s90 = sphi 0, %s87
      %s91 = sphi 0, %s90
      %s107 = sphi 0, %s91
    $region4: #{tpu_custom_call.1} parent=1 // loop_header_branch
      %12 = sbr.rel (%p10) target = $region8
    $region5: #{tpu_custom_call.1} parent=1 // loop_body
      %s14 = ssub.s32 %s9, 1
      %s15 = ssub.s32 %s9, 2
      %s16 = sadd.s32 %s9, 1
      %s17 = ssub.s32 %s9, %s16
      %p18 = scmp.eq.s32.totalorder %s17, 0
      %s20 = sadd.s32 %s19, 1
      %s21 = scalar_select %p18, %s19, %s20
      %p24 = pneg %p18
      %p25 = scmp.eq.s32.totalorder %s9, 1
      %p26 = por %p24, %p25
      %p27 = scmp.ne.s32.totalorder %s19, %s22
      %p28 = scmp.eq.s32.totalorder %s9, 0
      %p29 = por %p27, %p28
      %p30 = scmp.ne.s32.totalorder %s19, %s22
      %p31 = scmp.eq.s32.totalorder %s14, 1
      %p32 = por %p30, %p31
      %p33 = scmp.ne.s32.totalorder %s22, %s23
      %p34 = scmp.eq.s32.totalorder %s14, 0
      %p35 = por %p33, %p34
      %p36 = scmp.ne.s32.totalorder %s22, %s23
      %p37 = scmp.eq.s32.totalorder %s15, 1
      %p38 = por %p36, %p37
      %p40 = scmp.ne.s32.totalorder %s23, %s39
      %p41 = scmp.eq.s32.totalorder %s15, 0
      %p42 = por %p40, %p41
      %s44 = sadd.s32 %s43, 1
      %p47 = scmp.eq.s32.totalorder %s9, 1
      %p48 = scmp.ne.s32.totalorder %s43, %s45
      %p49 = scmp.eq.s32.totalorder %s9, 0
      %p50 = por %p48, %p49
      %p51 = scmp.ne.s32.totalorder %s43, %s45
      %p52 = scmp.eq.s32.totalorder %s14, 1
      %p53 = por %p51, %p52
      %p54 = scmp.ne.s32.totalorder %s45, %s46
      %p55 = scmp.eq.s32.totalorder %s14, 0
      %p56 = por %p54, %p55
      %p57 = scmp.ne.s32.totalorder %s45, %s46
      %p58 = scmp.eq.s32.totalorder %s15, 1
      %p59 = por %p57, %p58
      %p61 = scmp.ne.s32.totalorder %s46, %s60
      %p62 = scmp.eq.s32.totalorder %s15, 0
      %p63 = por %p61, %p62
      %s65 = sadd.s32 %s64, 1
      %p68 = scmp.eq.s32.totalorder %s9, 1
      %p69 = scmp.ne.s32.totalorder %s64, %s66
      %p70 = scmp.eq.s32.totalorder %s9, 0
      %p71 = por %p69, %p70
      %p72 = scmp.ne.s32.totalorder %s64, %s66
      %p73 = scmp.eq.s32.totalorder %s14, 1
      %p74 = por %p72, %p73
      %p75 = scmp.ne.s32.totalorder %s66, %s67
      %p76 = scmp.eq.s32.totalorder %s14, 0
      %p77 = por %p75, %p76
      %p78 = scmp.ne.s32.totalorder %s66, %s67
      %p79 = scmp.eq.s32.totalorder %s15, 1
      %p80 = por %p78, %p79
      %p82 = scmp.ne.s32.totalorder %s67, %s81
      %p83 = scmp.eq.s32.totalorder %s15, 0
      %p84 = por %p82, %p83
      %s85 = ssub.s32 %s9, %s16
      %p86 = scmp.eq.s32.totalorder %s85, 0
      %s88 = sadd.s32 %s87, 1
      %s89 = scalar_select %p86, %s87, %s88
      %p92 = pneg %p86
      %p93 = scmp.eq.s32.totalorder %s9, 1
      %p94 = por %p92, %p93
      %p95 = scmp.ne.s32.totalorder %s87, %s90
      %p96 = scmp.eq.s32.totalorder %s9, 0
      %p97 = por %p95, %p96
      %p98 = scmp.ne.s32.totalorder %s87, %s90
      %p99 = scmp.eq.s32.totalorder %s14, 1
      %p100 = por %p98, %p99
      %p101 = scmp.ne.s32.totalorder %s90, %s91
      %p102 = scmp.eq.s32.totalorder %s14, 0
      %p103 = por %p101, %p102
      %p104 = scmp.ne.s32.totalorder %s90, %s91
      %p105 = scmp.eq.s32.totalorder %s15, 1
      %p106 = por %p104, %p105
      %p108 = scmp.ne.s32.totalorder %s91, %s107
      %p109 = scmp.eq.s32.totalorder %s15, 0
      %p110 = por %p108, %p109
      %p111 = scmp.le.s32.totalorder 1, %s9
      %p112 = scmp.lt.s32.totalorder %s9, 3
      %p113 = pnand %p111, %p112
      %p114 = pneg %p113
      // Predicated region
      $region9: #{tpu_custom_call.1} parent=5 // pred_check
        _
      $region10: #{tpu_custom_call.1} parent=5 // pred_check_branch
        %116 = sbr.rel (%p113) target = $region12
      $region11: #{tpu_custom_call.1} parent=5 // pred_region
        %s117 = ssub.s32 %s9, 1
        // Predicated region
        $region13: #{tpu_custom_call.1} parent=11 // pred_check
          %p118 = pneg %p56
        $region14: #{tpu_custom_call.1} parent=11 // pred_check_branch
          %120 = sbr.rel (%p118) target = $region16
        $region15: #{tpu_custom_call.1} parent=11 // pred_region
          _
        $region16: #{tpu_custom_call.1} parent=11 // pred_fallthru
          _
        // Predicated region
        $region17: #{tpu_custom_call.1} parent=11 // pred_check
          %p121 = pneg %p77
        $region18: #{tpu_custom_call.1} parent=11 // pred_check_branch
          %123 = sbr.rel (%p121) target = $region20
        $region19: #{tpu_custom_call.1} parent=11 // pred_region
          _
        $region20: #{tpu_custom_call.1} parent=11 // pred_fallthru
          _
      $region12: #{tpu_custom_call.1} parent=5 // pred_fallthru
        _
      %p124 = scmp.lt.s32.totalorder %s9, 2
      // Predicated region
      $region21: #{tpu_custom_call.1} parent=5 // pred_check
        %p125 = pneg %p124
      $region22: #{tpu_custom_call.1} parent=5 // pred_check_branch
        %127 = sbr.rel (%p125) target = $region24
      $region23: #{tpu_custom_call.1} parent=5 // pred_region
        // Predicated region
        $region25: #{tpu_custom_call.1} parent=23 // pred_check
          %p128 = pneg %p29
        $region26: #{tpu_custom_call.1} parent=23 // pred_check_branch
          %130 = sbr.rel (%p128) target = $region28
        $region27: #{tpu_custom_call.1} parent=23 // pred_region
          %s131 = sand.u32 %s19, 1
          %s132 = sand.u32 %s19, 1
          %s133 = smul.addr %s132, 128
          %s134 = scalar_lea.vmem [#allocation5], %s133
          %s135 = smul.u32 16, %s9
          %s136 = smul.addr %s135, 4
          %s137 = scalar_lea.vmem %s0, %s136
          // Predicated region
          $region29: #{tpu_custom_call.1} parent=27 // pred_check
            _
          $region30: #{tpu_custom_call.1} parent=27 // pred_check_branch
            %139 = sbr.rel (0) target = $region32
          $region31: #{tpu_custom_call.1} parent=27 // pred_region
            // Predicated region
            $region33: #{tpu_custom_call.1} parent=31 // pred_check
              _
            $region34: #{tpu_custom_call.1} parent=31 // pred_check_branch
              %141 = sbr.rel target = $region36
            $region35: #{tpu_custom_call.1} parent=31 // pred_region
              // Predicated region
              $region48: #{tpu_custom_call.1} parent=35 // pred_check
                _
              $region49: #{tpu_custom_call.1} parent=35 // pred_check_branch
                %219 = sbr.rel (0) target = $region51
              $region50: #{tpu_custom_call.1} parent=35 // pred_region
                loop: start=0, step=1, limit=1
                $region52: #{tpu_custom_call.1} parent=50 // loop_pre_header
                  _
                $region53: #{tpu_custom_call.1} parent=50 // loop_header
                  %s221 = sphi 0, %s225
                  %p222 = scmp.ge.s32.totalorder %s221, 1
                  %s226 = sphi %s137, %s137
                  %s227 = sphi %s134, %s134
                $region54: #{tpu_custom_call.1} parent=50 // loop_header_branch
                  %224 = sbr.rel (%p222) target = $region58
                $region55: #{tpu_custom_call.1} parent=50 // loop_body
                  _
                $region56: #{tpu_custom_call.1} parent=50 // loop_footer
                  %s225 = sadd.s32 1, %s221
                $region57: #{tpu_custom_call.1} parent=50 // loop_footer_branch
                  %220 = sbr.rel target = $region53
                $region58: #{tpu_custom_call.1} parent=50 // loop_exit
                  _
                %s229 = ssub.s32 16, 1
                loop: start=0, step=1, limit=1
                $region59: #{tpu_custom_call.1} parent=50 // loop_pre_header
                  _
                $region60: #{tpu_custom_call.1} parent=50 // loop_header
                  %s231 = sphi 0, %s235
                  %p232 = scmp.ge.s32.totalorder %s231, 1
                  %s236 = sphi %s137, %s137
                  %s237 = sphi %s134, %s134
                $region61: #{tpu_custom_call.1} parent=50 // loop_header_branch
                  %234 = sbr.rel (%p232) target = $region65
                $region62: #{tpu_custom_call.1} parent=50 // loop_body
                  %v238 = vld [vmem:[%s236] sm:%s229]
                  %239 = vst [vmem:[%s237] sm:%s229] %v238
                  %v240 = vld [vmem:[%s236 + $0x4] sm:%s229]
                  %241 = vst [vmem:[%s237 + $0x4] sm:%s229] %v240
                  %v242 = vld [vmem:[%s236 + $0x8] sm:%s229]
                  %243 = vst [vmem:[%s237 + $0x8] sm:%s229] %v242
                  %v244 = vld [vmem:[%s236 + $0xc] sm:%s229]
                  %245 = vst [vmem:[%s237 + $0xc] sm:%s229] %v244
                  %v246 = vld [vmem:[%s236 + $0x10] sm:%s229]
                  %247 = vst [vmem:[%s237 + $0x10] sm:%s229] %v246
                  %v248 = vld [vmem:[%s236 + $0x14] sm:%s229]
                  %249 = vst [vmem:[%s237 + $0x14] sm:%s229] %v248
                  %v250 = vld [vmem:[%s236 + $0x18] sm:%s229]
                  %251 = vst [vmem:[%s237 + $0x18] sm:%s229] %v250
                  %v252 = vld [vmem:[%s236 + $0x1c] sm:%s229]
                  %253 = vst [vmem:[%s237 + $0x1c] sm:%s229] %v252
                  %v254 = vld [vmem:[%s236 + $0x20] sm:%s229]
                  %255 = vst [vmem:[%s237 + $0x20] sm:%s229] %v254
                  %v256 = vld [vmem:[%s236 + $0x24] sm:%s229]
                  %257 = vst [vmem:[%s237 + $0x24] sm:%s229] %v256
                  %v258 = vld [vmem:[%s236 + $0x28] sm:%s229]
                  %259 = vst [vmem:[%s237 + $0x28] sm:%s229] %v258
                  %v260 = vld [vmem:[%s236 + $0x2c] sm:%s229]
                  %261 = vst [vmem:[%s237 + $0x2c] sm:%s229] %v260
                  %v262 = vld [vmem:[%s236 + $0x30] sm:%s229]
                  %263 = vst [vmem:[%s237 + $0x30] sm:%s229] %v262
                  %v264 = vld [vmem:[%s236 + $0x34] sm:%s229]
                  %265 = vst [vmem:[%s237 + $0x34] sm:%s229] %v264
                  %v266 = vld [vmem:[%s236 + $0x38] sm:%s229]
                  %267 = vst [vmem:[%s237 + $0x38] sm:%s229] %v266
                  %v268 = vld [vmem:[%s236 + $0x3c] sm:%s229]
                  %269 = vst [vmem:[%s237 + $0x3c] sm:%s229] %v268
                  %v270 = vld [vmem:[%s236 + $0x80] sm:%s229]
                  %271 = vst [vmem:[%s237 + $0x40] sm:%s229] %v270
                  %v272 = vld [vmem:[%s236 + $0x84] sm:%s229]
                  %273 = vst [vmem:[%s237 + $0x44] sm:%s229] %v272
                  %v274 = vld [vmem:[%s236 + $0x88] sm:%s229]
                  %275 = vst [vmem:[%s237 + $0x48] sm:%s229] %v274
                  %v276 = vld [vmem:[%s236 + $0x8c] sm:%s229]
                  %277 = vst [vmem:[%s237 + $0x4c] sm:%s229] %v276
                  %v278 = vld [vmem:[%s236 + $0x90] sm:%s229]
                  %279 = vst [vmem:[%s237 + $0x50] sm:%s229] %v278
                  %v280 = vld [vmem:[%s236 + $0x94] sm:%s229]
                  %281 = vst [vmem:[%s237 + $0x54] sm:%s229] %v280
                  %v282 = vld [vmem:[%s236 + $0x98] sm:%s229]
                  %283 = vst [vmem:[%s237 + $0x58] sm:%s229] %v282
                  %v284 = vld [vmem:[%s236 + $0x9c] sm:%s229]
                  %285 = vst [vmem:[%s237 + $0x5c] sm:%s229] %v284
                  %v286 = vld [vmem:[%s236 + $0xa0] sm:%s229]
                  %287 = vst [vmem:[%s237 + $0x60] sm:%s229] %v286
                  %v288 = vld [vmem:[%s236 + $0xa4] sm:%s229]
                  %289 = vst [vmem:[%s237 + $0x64] sm:%s229] %v288
                  %v290 = vld [vmem:[%s236 + $0xa8] sm:%s229]
                  %291 = vst [vmem:[%s237 + $0x68] sm:%s229] %v290
                  %v292 = vld [vmem:[%s236 + $0xac] sm:%s229]
                  %293 = vst [vmem:[%s237 + $0x6c] sm:%s229] %v292
                  %v294 = vld [vmem:[%s236 + $0xb0] sm:%s229]
                  %295 = vst [vmem:[%s237 + $0x70] sm:%s229] %v294
                  %v296 = vld [vmem:[%s236 + $0xb4] sm:%s229]
                  %297 = vst [vmem:[%s237 + $0x74] sm:%s229] %v296
                  %v298 = vld [vmem:[%s236 + $0xb8] sm:%s229]
                  %299 = vst [vmem:[%s237 + $0x78] sm:%s229] %v298
                  %v300 = vld [vmem:[%s236 + $0xbc] sm:%s229]
                  %301 = vst [vmem:[%s237 + $0x7c] sm:%s229] %v300
                $region63: #{tpu_custom_call.1} parent=50 // loop_footer
                  %s235 = sadd.s32 1, %s231
                $region64: #{tpu_custom_call.1} parent=50 // loop_footer_branch
                  %230 = sbr.rel target = $region60
                $region65: #{tpu_custom_call.1} parent=50 // loop_exit
                  _
              $region51: #{tpu_custom_call.1} parent=35 // pred_fallthru
                _
            $region36: #{tpu_custom_call.1} parent=31 // pred_fallthru
              _
            // Predicated region
            $region37: #{tpu_custom_call.1} parent=31 // pred_check
              _
            $region38: #{tpu_custom_call.1} parent=31 // pred_check_branch
              %143 = sbr.rel (0) target = $region40
            $region39: #{tpu_custom_call.1} parent=31 // pred_region
              %s145 = ssub.s32 16, 1
              loop: start=0, step=1, limit=1
              $region41: #{tpu_custom_call.1} parent=39 // loop_pre_header
                _
              $region42: #{tpu_custom_call.1} parent=39 // loop_header
                %s147 = sphi 0, %s151
                %p148 = scmp.ge.s32.totalorder %s147, 1
                %s152 = sphi %s137, %s137
                %s153 = sphi %s134, %s134
              $region43: #{tpu_custom_call.1} parent=39 // loop_header_branch
                %150 = sbr.rel (%p148) target = $region47
              $region44: #{tpu_custom_call.1} parent=39 // loop_body
                %v154 = vld [vmem:[%s152] sm:%s145]
                %155 = vst [vmem:[%s153] sm:%s145] %v154
                %v156 = vld [vmem:[%s152 + $0x4] sm:%s145]
                %157 = vst [vmem:[%s153 + $0x4] sm:%s145] %v156
                %v158 = vld [vmem:[%s152 + $0x8] sm:%s145]
                %159 = vst [vmem:[%s153 + $0x8] sm:%s145] %v158
                %v160 = vld [vmem:[%s152 + $0xc] sm:%s145]
                %161 = vst [vmem:[%s153 + $0xc] sm:%s145] %v160
                %v162 = vld [vmem:[%s152 + $0x10] sm:%s145]
                %163 = vst [vmem:[%s153 + $0x10] sm:%s145] %v162
                %v164 = vld [vmem:[%s152 + $0x14] sm:%s145]
                %165 = vst [vmem:[%s153 + $0x14] sm:%s145] %v164
                %v166 = vld [vmem:[%s152 + $0x18] sm:%s145]
                %167 = vst [vmem:[%s153 + $0x18] sm:%s145] %v166
                %v168 = vld [vmem:[%s152 + $0x1c] sm:%s145]
                %169 = vst [vmem:[%s153 + $0x1c] sm:%s145] %v168
                %v170 = vld [vmem:[%s152 + $0x20] sm:%s145]
                %171 = vst [vmem:[%s153 + $0x20] sm:%s145] %v170
                %v172 = vld [vmem:[%s152 + $0x24] sm:%s145]
                %173 = vst [vmem:[%s153 + $0x24] sm:%s145] %v172
                %v174 = vld [vmem:[%s152 + $0x28] sm:%s145]
                %175 = vst [vmem:[%s153 + $0x28] sm:%s145] %v174
                %v176 = vld [vmem:[%s152 + $0x2c] sm:%s145]
                %177 = vst [vmem:[%s153 + $0x2c] sm:%s145] %v176
                %v178 = vld [vmem:[%s152 + $0x30] sm:%s145]
                %179 = vst [vmem:[%s153 + $0x30] sm:%s145] %v178
                %v180 = vld [vmem:[%s152 + $0x34] sm:%s145]
                %181 = vst [vmem:[%s153 + $0x34] sm:%s145] %v180
                %v182 = vld [vmem:[%s152 + $0x38] sm:%s145]
                %183 = vst [vmem:[%s153 + $0x38] sm:%s145] %v182
                %v184 = vld [vmem:[%s152 + $0x3c] sm:%s145]
                %185 = vst [vmem:[%s153 + $0x3c] sm:%s145] %v184
                %v186 = vld [vmem:[%s152 + $0x80] sm:%s145]
                %187 = vst [vmem:[%s153 + $0x40] sm:%s145] %v186
                %v188 = vld [vmem:[%s152 + $0x84] sm:%s145]
                %189 = vst [vmem:[%s153 + $0x44] sm:%s145] %v188
                %v190 = vld [vmem:[%s152 + $0x88] sm:%s145]
                %191 = vst [vmem:[%s153 + $0x48] sm:%s145] %v190
                %v192 = vld [vmem:[%s152 + $0x8c] sm:%s145]
                %193 = vst [vmem:[%s153 + $0x4c] sm:%s145] %v192
                %v194 = vld [vmem:[%s152 + $0x90] sm:%s145]
                %195 = vst [vmem:[%s153 + $0x50] sm:%s145] %v194
                %v196 = vld [vmem:[%s152 + $0x94] sm:%s145]
                %197 = vst [vmem:[%s153 + $0x54] sm:%s145] %v196
                %v198 = vld [vmem:[%s152 + $0x98] sm:%s145]
                %199 = vst [vmem:[%s153 + $0x58] sm:%s145] %v198
                %v200 = vld [vmem:[%s152 + $0x9c] sm:%s145]
                %201 = vst [vmem:[%s153 + $0x5c] sm:%s145] %v200
                %v202 = vld [vmem:[%s152 + $0xa0] sm:%s145]
                %203 = vst [vmem:[%s153 + $0x60] sm:%s145] %v202
                %v204 = vld [vmem:[%s152 + $0xa4] sm:%s145]
                %205 = vst [vmem:[%s153 + $0x64] sm:%s145] %v204
                %v206 = vld [vmem:[%s152 + $0xa8] sm:%s145]
                %207 = vst [vmem:[%s153 + $0x68] sm:%s145] %v206
                %v208 = vld [vmem:[%s152 + $0xac] sm:%s145]
                %209 = vst [vmem:[%s153 + $0x6c] sm:%s145] %v208
                %v210 = vld [vmem:[%s152 + $0xb0] sm:%s145]
                %211 = vst [vmem:[%s153 + $0x70] sm:%s145] %v210
                %v212 = vld [vmem:[%s152 + $0xb4] sm:%s145]
                %213 = vst [vmem:[%s153 + $0x74] sm:%s145] %v212
                %v214 = vld [vmem:[%s152 + $0xb8] sm:%s145]
                %215 = vst [vmem:[%s153 + $0x78] sm:%s145] %v214
                %v216 = vld [vmem:[%s152 + $0xbc] sm:%s145]
                %217 = vst [vmem:[%s153 + $0x7c] sm:%s145] %v216
              $region45: #{tpu_custom_call.1} parent=39 // loop_footer
                %s151 = sadd.s32 1, %s147
              $region46: #{tpu_custom_call.1} parent=39 // loop_footer_branch
                %146 = sbr.rel target = $region42
              $region47: #{tpu_custom_call.1} parent=39 // loop_exit
                _
            $region40: #{tpu_custom_call.1} parent=31 // pred_fallthru
              _
          $region32: #{tpu_custom_call.1} parent=27 // pred_fallthru
            _
          %302 = vnop
        $region28: #{tpu_custom_call.1} parent=23 // pred_fallthru
          _
      $region24: #{tpu_custom_call.1} parent=5 // pred_fallthru
        _
      %p303 = scmp.le.s32.totalorder 1, %s9
      %p304 = scmp.lt.s32.totalorder %s9, 3
      %p305 = pnand %p303, %p304
      %p306 = pneg %p305
      // Predicated region
      $region66: #{tpu_custom_call.1} parent=5 // pred_check
        _
      $region67: #{tpu_custom_call.1} parent=5 // pred_check_branch
        %308 = sbr.rel (%p305) target = $region69
      $region68: #{tpu_custom_call.1} parent=5 // pred_region
        %s309 = ssub.s32 %s9, 1
        %s310 = sand.u32 %s22, 1
        %s311 = sand.u32 %s22, 1
        %s312 = smul.addr %s311, 128
        %s313 = scalar_lea.vmem [#allocation5], %s312
        // Predicated region
        $region70: #{tpu_custom_call.1} parent=68 // pred_check
          %p314 = pneg %p35
        $region71: #{tpu_custom_call.1} parent=68 // pred_check_branch
          %316 = sbr.rel (%p314) target = $region73
        $region72: #{tpu_custom_call.1} parent=68 // pred_region
          _
        $region73: #{tpu_custom_call.1} parent=68 // pred_fallthru
          _
        %s317 = sand.u32 %s22, 1
        %s318 = sand.u32 %s22, 1
        %s319 = smul.addr %s318, 128
        %s320 = scalar_lea.vmem [#allocation5], %s319
        %p321 = pneg %p35
        %p322 = pneg %p32
        %p323 = pneg %p56
        %p324 = pneg %p53
        %p325 = pneg %p77
        %p326 = pneg %p74
        %p327 = pneg %p103
        %p328 = pneg %p100
        %s329 = sand.u32 %s90, 1
        %s330 = sand.u32 %s90, 1
        %s331 = smul.addr %s330, 128
        %s332 = scalar_lea.vmem [#allocation6], %s331
        %s333 = smul.u32 16, %s14
        %s334 = smul.u32 16, %s14
        %v335 = vld [vmem:[%s313] sm:$0xf]
        %v336 = vld [vmem:[%s313 + $0x4] sm:$0xf]
        %v337 = vld [vmem:[%s313 + $0x8] sm:$0xf]
        %v338 = vld [vmem:[%s313 + $0xc] sm:$0xf]
        %v339 = vld [vmem:[%s313 + $0x10] sm:$0xf]
        %v340 = vld [vmem:[%s313 + $0x14] sm:$0xf]
        %v341 = vld [vmem:[%s313 + $0x18] sm:$0xf]
        %v342 = vld [vmem:[%s313 + $0x1c] sm:$0xf]
        %v343 = vld [vmem:[%s313 + $0x20] sm:$0xf]
        %v344 = vld [vmem:[%s313 + $0x24] sm:$0xf]
        %v345 = vld [vmem:[%s313 + $0x28] sm:$0xf]
        %v346 = vld [vmem:[%s313 + $0x2c] sm:$0xf]
        %v347 = vld [vmem:[%s313 + $0x30] sm:$0xf]
        %v348 = vld [vmem:[%s313 + $0x34] sm:$0xf]
        %v349 = vld [vmem:[%s313 + $0x38] sm:$0xf]
        %v350 = vld [vmem:[%s313 + $0x3c] sm:$0xf]
        %v351 = vld [vmem:[%s313 + $0x40] sm:$0xf]
        %v352 = vld [vmem:[%s313 + $0x44] sm:$0xf]
        %v353 = vld [vmem:[%s313 + $0x48] sm:$0xf]
        %v354 = vld [vmem:[%s313 + $0x4c] sm:$0xf]
        %v355 = vld [vmem:[%s313 + $0x50] sm:$0xf]
        %v356 = vld [vmem:[%s313 + $0x54] sm:$0xf]
        %v357 = vld [vmem:[%s313 + $0x58] sm:$0xf]
        %v358 = vld [vmem:[%s313 + $0x5c] sm:$0xf]
        %v359 = vld [vmem:[%s313 + $0x60] sm:$0xf]
        %v360 = vld [vmem:[%s313 + $0x64] sm:$0xf]
        %v361 = vld [vmem:[%s313 + $0x68] sm:$0xf]
        %v362 = vld [vmem:[%s313 + $0x6c] sm:$0xf]
        %v363 = vld [vmem:[%s313 + $0x70] sm:$0xf]
        %v364 = vld [vmem:[%s313 + $0x74] sm:$0xf]
        %v365 = vld [vmem:[%s313 + $0x78] sm:$0xf]
        %v366 = vld [vmem:[%s313 + $0x7c] sm:$0xf]
        %vm367 = vcmask 7168
        %368 = vst.msk [vmem:[#allocation2] sm:$0xff] %vm367, -inf
        %369 = vst.msk [vmem:[#allocation2 + $0x8] sm:$0xff] %vm367, -inf
        %370 = vst.msk [vmem:[#allocation2 + $0x10] sm:$0xff] %vm367, -inf
        %371 = vst.msk [vmem:[#allocation2 + $0x18] sm:$0xff] %vm367, -inf
        %372 = vst.msk [vmem:[#allocation2 + $0x20] sm:$0xff] %vm367, -inf
        %373 = vst.msk [vmem:[#allocation2 + $0x28] sm:$0xff] %vm367, -inf
        %374 = vst.msk [vmem:[#allocation2 + $0x30] sm:$0xff] %vm367, -inf
        %375 = vst.msk [vmem:[#allocation2 + $0x38] sm:$0xff] %vm367, -inf
        %376 = vst.msk [vmem:[#allocation2 + $0x40] sm:$0xff] %vm367, -inf
        %377 = vst.msk [vmem:[#allocation2 + $0x48] sm:$0xff] %vm367, -inf
        %378 = vst.msk [vmem:[#allocation2 + $0x50] sm:$0xff] %vm367, -inf
        %379 = vst.msk [vmem:[#allocation2 + $0x58] sm:$0xff] %vm367, -inf
        %380 = vst.msk [vmem:[#allocation2 + $0x60] sm:$0xff] %vm367, -inf
        %381 = vst.msk [vmem:[#allocation2 + $0x68] sm:$0xff] %vm367, -inf
        %382 = vst.msk [vmem:[#allocation2 + $0x70] sm:$0xff] %vm367, -inf
        %383 = vst.msk [vmem:[#allocation2 + $0x78] sm:$0xff] %vm367, -inf
        %384 = vst.msk [vmem:[#allocation2 + $0x80] sm:$0xff] %vm367, -inf
        %385 = vst.msk [vmem:[#allocation2 + $0x88] sm:$0xff] %vm367, -inf
        %386 = vst.msk [vmem:[#allocation2 + $0x90] sm:$0xff] %vm367, -inf
        %387 = vst.msk [vmem:[#allocation2 + $0x98] sm:$0xff] %vm367, -inf
        %388 = vst.msk [vmem:[#allocation2 + $0xa0] sm:$0xff] %vm367, -inf
        %389 = vst.msk [vmem:[#allocation2 + $0xa8] sm:$0xff] %vm367, -inf
        %390 = vst.msk [vmem:[#allocation2 + $0xb0] sm:$0xff] %vm367, -inf
        %391 = vst.msk [vmem:[#allocation2 + $0xb8] sm:$0xff] %vm367, -inf
        %392 = vst.msk [vmem:[#allocation2 + $0xc0] sm:$0xff] %vm367, -inf
        %393 = vst.msk [vmem:[#allocation2 + $0xc8] sm:$0xff] %vm367, -inf
        %394 = vst.msk [vmem:[#allocation2 + $0xd0] sm:$0xff] %vm367, -inf
        %395 = vst.msk [vmem:[#allocation2 + $0xd8] sm:$0xff] %vm367, -inf
        %396 = vst.msk [vmem:[#allocation2 + $0xe0] sm:$0xff] %vm367, -inf
        %397 = vst.msk [vmem:[#allocation2 + $0xe8] sm:$0xff] %vm367, -inf
        %398 = vst.msk [vmem:[#allocation2 + $0xf0] sm:$0xff] %vm367, -inf
        %399 = vst.msk [vmem:[#allocation2 + $0xf8] sm:$0xff] %vm367, -inf
        %400 = vst.msk [vmem:[#allocation3] sm:$0xff] %vm367, 0.0
        %401 = vst.msk [vmem:[#allocation3 + $0x8] sm:$0xff] %vm367, 0.0
        %402 = vst.msk [vmem:[#allocation3 + $0x10] sm:$0xff] %vm367, 0.0
        %403 = vst.msk [vmem:[#allocation3 + $0x18] sm:$0xff] %vm367, 0.0
        %404 = vst.msk [vmem:[#allocation3 + $0x20] sm:$0xff] %vm367, 0.0
        %405 = vst.msk [vmem:[#allocation3 + $0x28] sm:$0xff] %vm367, 0.0
        %406 = vst.msk [vmem:[#allocation3 + $0x30] sm:$0xff] %vm367, 0.0
        %407 = vst.msk [vmem:[#allocation3 + $0x38] sm:$0xff] %vm367, 0.0
        %408 = vst.msk [vmem:[#allocation3 + $0x40] sm:$0xff] %vm367, 0.0
        %409 = vst.msk [vmem:[#allocation3 + $0x48] sm:$0xff] %vm367, 0.0
        %410 = vst.msk [vmem:[#allocation3 + $0x50] sm:$0xff] %vm367, 0.0
        %411 = vst.msk [vmem:[#allocation3 + $0x58] sm:$0xff] %vm367, 0.0
        %412 = vst.msk [vmem:[#allocation3 + $0x60] sm:$0xff] %vm367, 0.0
        %413 = vst.msk [vmem:[#allocation3 + $0x68] sm:$0xff] %vm367, 0.0
        %414 = vst.msk [vmem:[#allocation3 + $0x70] sm:$0xff] %vm367, 0.0
        %415 = vst.msk [vmem:[#allocation3 + $0x78] sm:$0xff] %vm367, 0.0
        %416 = vst.msk [vmem:[#allocation3 + $0x80] sm:$0xff] %vm367, 0.0
        %417 = vst.msk [vmem:[#allocation3 + $0x88] sm:$0xff] %vm367, 0.0
        %418 = vst.msk [vmem:[#allocation3 + $0x90] sm:$0xff] %vm367, 0.0
        %419 = vst.msk [vmem:[#allocation3 + $0x98] sm:$0xff] %vm367, 0.0
        %420 = vst.msk [vmem:[#allocation3 + $0xa0] sm:$0xff] %vm367, 0.0
        %421 = vst.msk [vmem:[#allocation3 + $0xa8] sm:$0xff] %vm367, 0.0
        %422 = vst.msk [vmem:[#allocation3 + $0xb0] sm:$0xff] %vm367, 0.0
        %423 = vst.msk [vmem:[#allocation3 + $0xb8] sm:$0xff] %vm367, 0.0
        %424 = vst.msk [vmem:[#allocation3 + $0xc0] sm:$0xff] %vm367, 0.0
        %425 = vst.msk [vmem:[#allocation3 + $0xc8] sm:$0xff] %vm367, 0.0
        %426 = vst.msk [vmem:[#allocation3 + $0xd0] sm:$0xff] %vm367, 0.0
        %427 = vst.msk [vmem:[#allocation3 + $0xd8] sm:$0xff] %vm367, 0.0
        %428 = vst.msk [vmem:[#allocation3 + $0xe0] sm:$0xff] %vm367, 0.0
        %429 = vst.msk [vmem:[#allocation3 + $0xe8] sm:$0xff] %vm367, 0.0
        %430 = vst.msk [vmem:[#allocation3 + $0xf0] sm:$0xff] %vm367, 0.0
        %431 = vst.msk [vmem:[#allocation3 + $0xf8] sm:$0xff] %vm367, 0.0
        %vm432 = vcmask 523264
        %433 = vst.msk [vmem:[#allocation4] sm:$0xff] %vm432, 0.0
        %434 = vst.msk [vmem:[#allocation4 + $0x8] sm:$0xff] %vm432, 0.0
        %435 = vst.msk [vmem:[#allocation4 + $0x10] sm:$0xff] %vm432, 0.0
        %436 = vst.msk [vmem:[#allocation4 + $0x18] sm:$0xff] %vm432, 0.0
        %437 = vst.msk [vmem:[#allocation4 + $0x20] sm:$0xff] %vm432, 0.0
        %438 = vst.msk [vmem:[#allocation4 + $0x28] sm:$0xff] %vm432, 0.0
        %439 = vst.msk [vmem:[#allocation4 + $0x30] sm:$0xff] %vm432, 0.0
        %440 = vst.msk [vmem:[#allocation4 + $0x38] sm:$0xff] %vm432, 0.0
        %441 = vst.msk [vmem:[#allocation4 + $0x40] sm:$0xff] %vm432, 0.0
        %442 = vst.msk [vmem:[#allocation4 + $0x48] sm:$0xff] %vm432, 0.0
        %443 = vst.msk [vmem:[#allocation4 + $0x50] sm:$0xff] %vm432, 0.0
        %444 = vst.msk [vmem:[#allocation4 + $0x58] sm:$0xff] %vm432, 0.0
        %445 = vst.msk [vmem:[#allocation4 + $0x60] sm:$0xff] %vm432, 0.0
        %446 = vst.msk [vmem:[#allocation4 + $0x68] sm:$0xff] %vm432, 0.0
        %447 = vst.msk [vmem:[#allocation4 + $0x70] sm:$0xff] %vm432, 0.0
        %448 = vst.msk [vmem:[#allocation4 + $0x78] sm:$0xff] %vm432, 0.0
        %449 = vst.msk [vmem:[#allocation4 + $0x80] sm:$0xff] %vm432, 0.0
        %450 = vst.msk [vmem:[#allocation4 + $0x88] sm:$0xff] %vm432, 0.0
        %451 = vst.msk [vmem:[#allocation4 + $0x90] sm:$0xff] %vm432, 0.0
        %452 = vst.msk [vmem:[#allocation4 + $0x98] sm:$0xff] %vm432, 0.0
        %453 = vst.msk [vmem:[#allocation4 + $0xa0] sm:$0xff] %vm432, 0.0
        %454 = vst.msk [vmem:[#allocation4 + $0xa8] sm:$0xff] %vm432, 0.0
        %455 = vst.msk [vmem:[#allocation4 + $0xb0] sm:$0xff] %vm432, 0.0
        %456 = vst.msk [vmem:[#allocation4 + $0xb8] sm:$0xff] %vm432, 0.0
        %457 = vst.msk [vmem:[#allocation4 + $0xc0] sm:$0xff] %vm432, 0.0
        %458 = vst.msk [vmem:[#allocation4 + $0xc8] sm:$0xff] %vm432, 0.0
        %459 = vst.msk [vmem:[#allocation4 + $0xd0] sm:$0xff] %vm432, 0.0
        %460 = vst.msk [vmem:[#allocation4 + $0xd8] sm:$0xff] %vm432, 0.0
        %461 = vst.msk [vmem:[#allocation4 + $0xe0] sm:$0xff] %vm432, 0.0
        %462 = vst.msk [vmem:[#allocation4 + $0xe8] sm:$0xff] %vm432, 0.0
        %463 = vst.msk [vmem:[#allocation4 + $0xf0] sm:$0xff] %vm432, 0.0
        %464 = vst.msk [vmem:[#allocation4 + $0xf8] sm:$0xff] %vm432, 0.0
        %p465 = scmp.gt.s32.totalorder %s14, 0
        // Predicated region
        $region74: #{tpu_custom_call.1} parent=68 // pred_check
          %p466 = pneg %p465
        $region75: #{tpu_custom_call.1} parent=68 // pred_check_branch
          %468 = sbr.rel (%p466) target = $region77
        $region76: #{tpu_custom_call.1} parent=68 // pred_region
          %v469 = vld [vmem:[%s1] sm:$0xf]
          %v470 = vld [vmem:[%s1 + $0x4] sm:$0xf]
          %v471 = vld [vmem:[%s1 + $0x8] sm:$0xf]
          %v472 = vld [vmem:[%s1 + $0xc] sm:$0xf]
          %v473 = vld [vmem:[%s1 + $0x10] sm:$0xf]
          %v474 = vld [vmem:[%s1 + $0x14] sm:$0xf]
          %v475 = vld [vmem:[%s1 + $0x18] sm:$0xf]
          %v476 = vld [vmem:[%s1 + $0x1c] sm:$0xf]
          %v477 = vld [vmem:[%s1 + $0x20] sm:$0xf]
          %v478 = vld [vmem:[%s1 + $0x24] sm:$0xf]
          %v479 = vld [vmem:[%s1 + $0x28] sm:$0xf]
          %v480 = vld [vmem:[%s1 + $0x2c] sm:$0xf]
          %v481 = vld [vmem:[%s1 + $0x30] sm:$0xf]
          %v482 = vld [vmem:[%s1 + $0x34] sm:$0xf]
          %v483 = vld [vmem:[%s1 + $0x38] sm:$0xf]
          %v484 = vld [vmem:[%s1 + $0x3c] sm:$0xf]
          %v485 = vld [vmem:[%s1 + $0x80] sm:$0xf]
          %v486 = vld [vmem:[%s1 + $0x84] sm:$0xf]
          %v487 = vld [vmem:[%s1 + $0x88] sm:$0xf]
          %v488 = vld [vmem:[%s1 + $0x8c] sm:$0xf]
          %v489 = vld [vmem:[%s1 + $0x90] sm:$0xf]
          %v490 = vld [vmem:[%s1 + $0x94] sm:$0xf]
          %v491 = vld [vmem:[%s1 + $0x98] sm:$0xf]
          %v492 = vld [vmem:[%s1 + $0x9c] sm:$0xf]
          %v493 = vld [vmem:[%s1 + $0xa0] sm:$0xf]
          %v494 = vld [vmem:[%s1 + $0xa4] sm:$0xf]
          %v495 = vld [vmem:[%s1 + $0xa8] sm:$0xf]
          %v496 = vld [vmem:[%s1 + $0xac] sm:$0xf]
          %v497 = vld [vmem:[%s1 + $0xb0] sm:$0xf]
          %v498 = vld [vmem:[%s1 + $0xb4] sm:$0xf]
          %v499 = vld [vmem:[%s1 + $0xb8] sm:$0xf]
          %v500 = vld [vmem:[%s1 + $0xbc] sm:$0xf]
          %v501 = vld [vmem:[%s2] sm:$0xf]
          %v502 = vld [vmem:[%s2 + $0x4] sm:$0xf]
          %v503 = vld [vmem:[%s2 + $0x8] sm:$0xf]
          %v504 = vld [vmem:[%s2 + $0xc] sm:$0xf]
          %v505 = vld [vmem:[%s2 + $0x10] sm:$0xf]
          %v506 = vld [vmem:[%s2 + $0x14] sm:$0xf]
          %v507 = vld [vmem:[%s2 + $0x18] sm:$0xf]
          %v508 = vld [vmem:[%s2 + $0x1c] sm:$0xf]
          %v509 = vld [vmem:[%s2 + $0x20] sm:$0xf]
          %v510 = vld [vmem:[%s2 + $0x24] sm:$0xf]
          %v511 = vld [vmem:[%s2 + $0x28] sm:$0xf]
          %v512 = vld [vmem:[%s2 + $0x2c] sm:$0xf]
          %v513 = vld [vmem:[%s2 + $0x30] sm:$0xf]
          %v514 = vld [vmem:[%s2 + $0x34] sm:$0xf]
          %v515 = vld [vmem:[%s2 + $0x38] sm:$0xf]
          %v516 = vld [vmem:[%s2 + $0x3c] sm:$0xf]
          %v517 = vld [vmem:[%s2 + $0x80] sm:$0xf]
          %v518 = vld [vmem:[%s2 + $0x84] sm:$0xf]
          %v519 = vld [vmem:[%s2 + $0x88] sm:$0xf]
          %v520 = vld [vmem:[%s2 + $0x8c] sm:$0xf]
          %v521 = vld [vmem:[%s2 + $0x90] sm:$0xf]
          %v522 = vld [vmem:[%s2 + $0x94] sm:$0xf]
          %v523 = vld [vmem:[%s2 + $0x98] sm:$0xf]
          %v524 = vld [vmem:[%s2 + $0x9c] sm:$0xf]
          %v525 = vld [vmem:[%s2 + $0xa0] sm:$0xf]
          %v526 = vld [vmem:[%s2 + $0xa4] sm:$0xf]
          %v527 = vld [vmem:[%s2 + $0xa8] sm:$0xf]
          %v528 = vld [vmem:[%s2 + $0xac] sm:$0xf]
          %v529 = vld [vmem:[%s2 + $0xb0] sm:$0xf]
          %v530 = vld [vmem:[%s2 + $0xb4] sm:$0xf]
          %v531 = vld [vmem:[%s2 + $0xb8] sm:$0xf]
          %v532 = vld [vmem:[%s2 + $0xbc] sm:$0xf]
          %v549 = vunpack.c.l.b16 %v335
          %v550 = vunpack.c.l.b16 %v336
          %v551 = vunpack.c.l.b16 %v337
          %v552 = vunpack.c.l.b16 %v338
          %v553 = vunpack.c.l.b16 %v339
          %v554 = vunpack.c.l.b16 %v340
          %v555 = vunpack.c.l.b16 %v341
          %v556 = vunpack.c.l.b16 %v342
          %v557 = vunpack.c.l.b16 %v343
          %v558 = vunpack.c.l.b16 %v344
          %v559 = vunpack.c.l.b16 %v345
          %v560 = vunpack.c.l.b16 %v346
          %v561 = vunpack.c.l.b16 %v347
          %v562 = vunpack.c.l.b16 %v348
          %v563 = vunpack.c.l.b16 %v349
          %v564 = vunpack.c.l.b16 %v350
          %v565 = vpack.c.b16 %v550, %v549
          %v566 = vpack.c.b16 %v552, %v551
          %v567 = vpack.c.b16 %v554, %v553
          %v568 = vpack.c.b16 %v556, %v555
          %v569 = vpack.c.b16 %v558, %v557
          %v570 = vpack.c.b16 %v560, %v559
          %v571 = vpack.c.b16 %v562, %v561
          %v572 = vpack.c.b16 %v564, %v563
          %v589 = vunpack.c.l.b16 %v469
          %v590 = vunpack.c.l.b16 %v470
          %v591 = vunpack.c.l.b16 %v471
          %v592 = vunpack.c.l.b16 %v472
          %v593 = vunpack.c.l.b16 %v473
          %v594 = vunpack.c.l.b16 %v474
          %v595 = vunpack.c.l.b16 %v475
          %v596 = vunpack.c.l.b16 %v476
          %v597 = vunpack.c.l.b16 %v477
          %v598 = vunpack.c.l.b16 %v478
          %v599 = vunpack.c.l.b16 %v479
          %v600 = vunpack.c.l.b16 %v480
          %v601 = vunpack.c.l.b16 %v481
          %v602 = vunpack.c.l.b16 %v482
          %v603 = vunpack.c.l.b16 %v483
          %v604 = vunpack.c.l.b16 %v484
          %v605 = vpack.c.b16 %v590, %v589
          %v606 = vpack.c.b16 %v592, %v591
          %v607 = vpack.c.b16 %v594, %v593
          %v608 = vpack.c.b16 %v596, %v595
          %v609 = vpack.c.b16 %v598, %v597
          %v610 = vpack.c.b16 %v600, %v599
          %v611 = vpack.c.b16 %v602, %v601
          %v612 = vpack.c.b16 %v604, %v603
          %v614 = vsel %vm432, %v565, 0
          %v617 = vsel %vm432, %v566, 0
          %v620 = vsel %vm432, %v567, 0
          %v623 = vsel %vm432, %v568, 0
          %v626 = vsel %vm432, %v569, 0
          %v629 = vsel %vm432, %v570, 0
          %v632 = vsel %vm432, %v571, 0
          %v635 = vsel %vm432, %v572, 0
          %v638 = vsel %vm432, %v605, 0
          %v641 = vsel %vm432, %v606, 0
          %v644 = vsel %vm432, %v607, 0
          %v647 = vsel %vm432, %v608, 0
          %v650 = vsel %vm432, %v609, 0
          %v653 = vsel %vm432, %v610, 0
          %v656 = vsel %vm432, %v611, 0
          %v659 = vsel %vm432, %v612, 0
          %661 = vmatpush.bf16.xpose.msra.mxu0 %v659
          %662 = vmatpush.bf16.xpose.msra.mxu0 %v656
          %663 = vmatpush.bf16.xpose.msra.mxu0 %v653
          %664 = vmatpush.bf16.xpose.msra.mxu0 %v650
          %665 = vmatpush.bf16.xpose.msra.mxu0 %v647
          %666 = vmatpush.bf16.xpose.msra.mxu0 %v644
          %667 = vmatpush.bf16.xpose.msra.mxu0 %v641
          %668 = vmatpush.bf16.xpose.msra.mxu0 %v638
          %669 = vmatmul.bf16.gmra.mxu0 %v614
          %v670 = vpop.f32.mrf.mxu0
          %v671 = vadd.f32 0.0, %v670
          %v672 = vpop.f32.mrf.mxu0
          %v673 = vadd.f32 0.0, %v672
          %674 = vmatmul.bf16.gmra.mxu0 %v617
          %v675 = vpop.f32.mrf.mxu0
          %v676 = vadd.f32 0.0, %v675
          %v677 = vpop.f32.mrf.mxu0
          %v678 = vadd.f32 0.0, %v677
          %679 = vmatmul.bf16.gmra.mxu0 %v620
          %v680 = vpop.f32.mrf.mxu0
          %v681 = vadd.f32 0.0, %v680
          %v682 = vpop.f32.mrf.mxu0
          %v683 = vadd.f32 0.0, %v682
          %684 = vmatmul.bf16.gmra.mxu0 %v623
          %v685 = vpop.f32.mrf.mxu0
          %v686 = vadd.f32 0.0, %v685
          %v687 = vpop.f32.mrf.mxu0
          %v688 = vadd.f32 0.0, %v687
          %689 = vmatmul.bf16.gmra.mxu0 %v626
          %v690 = vpop.f32.mrf.mxu0
          %v691 = vadd.f32 0.0, %v690
          %v692 = vpop.f32.mrf.mxu0
          %v693 = vadd.f32 0.0, %v692
          %694 = vmatmul.bf16.gmra.mxu0 %v629
          %v695 = vpop.f32.mrf.mxu0
          %v696 = vadd.f32 0.0, %v695
          %v697 = vpop.f32.mrf.mxu0
          %v698 = vadd.f32 0.0, %v697
          %699 = vmatmul.bf16.gmra.mxu0 %v632
          %v700 = vpop.f32.mrf.mxu0
          %v701 = vadd.f32 0.0, %v700
          %v702 = vpop.f32.mrf.mxu0
          %v703 = vadd.f32 0.0, %v702
          %704 = vmatmul.bf16.gmra.mxu0 %v635
          %v705 = vpop.f32.mrf.mxu0
          %v706 = vadd.f32 0.0, %v705
          %v707 = vpop.f32.mrf.mxu0
          %v708 = vadd.f32 0.0, %v707
          %709 = vdwg.mxu0
          %v726 = vunpack.c.l.b16 %v351
          %v727 = vunpack.c.l.b16 %v352
          %v728 = vunpack.c.l.b16 %v353
          %v729 = vunpack.c.l.b16 %v354
          %v730 = vunpack.c.l.b16 %v355
          %v731 = vunpack.c.l.b16 %v356
          %v732 = vunpack.c.l.b16 %v357
          %v733 = vunpack.c.l.b16 %v358
          %v734 = vunpack.c.l.b16 %v359
          %v735 = vunpack.c.l.b16 %v360
          %v736 = vunpack.c.l.b16 %v361
          %v737 = vunpack.c.l.b16 %v362
          %v738 = vunpack.c.l.b16 %v363
          %v739 = vunpack.c.l.b16 %v364
          %v740 = vunpack.c.l.b16 %v365
          %v741 = vunpack.c.l.b16 %v366
          %v742 = vpack.c.b16 %v727, %v726
          %v743 = vpack.c.b16 %v729, %v728
          %v744 = vpack.c.b16 %v731, %v730
          %v745 = vpack.c.b16 %v733, %v732
          %v746 = vpack.c.b16 %v735, %v734
          %v747 = vpack.c.b16 %v737, %v736
          %v748 = vpack.c.b16 %v739, %v738
          %v749 = vpack.c.b16 %v741, %v740
          %v766 = vunpack.c.l.b16 %v485
          %v767 = vunpack.c.l.b16 %v486
          %v768 = vunpack.c.l.b16 %v487
          %v769 = vunpack.c.l.b16 %v488
          %v770 = vunpack.c.l.b16 %v489
          %v771 = vunpack.c.l.b16 %v490
          %v772 = vunpack.c.l.b16 %v491
          %v773 = vunpack.c.l.b16 %v492
          %v774 = vunpack.c.l.b16 %v493
          %v775 = vunpack.c.l.b16 %v494
          %v776 = vunpack.c.l.b16 %v495
          %v777 = vunpack.c.l.b16 %v496
          %v778 = vunpack.c.l.b16 %v497
          %v779 = vunpack.c.l.b16 %v498
          %v780 = vunpack.c.l.b16 %v499
          %v781 = vunpack.c.l.b16 %v500
          %v782 = vpack.c.b16 %v767, %v766
          %v783 = vpack.c.b16 %v769, %v768
          %v784 = vpack.c.b16 %v771, %v770
          %v785 = vpack.c.b16 %v773, %v772
          %v786 = vpack.c.b16 %v775, %v774
          %v787 = vpack.c.b16 %v777, %v776
          %v788 = vpack.c.b16 %v779, %v778
          %v789 = vpack.c.b16 %v781, %v780
          %v791 = vsel %vm432, %v742, 0
          %v794 = vsel %vm432, %v743, 0
          %v797 = vsel %vm432, %v744, 0
          %v800 = vsel %vm432, %v745, 0
          %v803 = vsel %vm432, %v746, 0
          %v806 = vsel %vm432, %v747, 0
          %v809 = vsel %vm432, %v748, 0
          %v812 = vsel %vm432, %v749, 0
          %v815 = vsel %vm432, %v782, 0
          %v818 = vsel %vm432, %v783, 0
          %v821 = vsel %vm432, %v784, 0
          %v824 = vsel %vm432, %v785, 0
          %v827 = vsel %vm432, %v786, 0
          %v830 = vsel %vm432, %v787, 0
          %v833 = vsel %vm432, %v788, 0
          %v836 = vsel %vm432, %v789, 0
          %838 = vmatpush.bf16.xpose.msra.mxu0 %v836
          %839 = vmatpush.bf16.xpose.msra.mxu0 %v833
          %840 = vmatpush.bf16.xpose.msra.mxu0 %v830
          %841 = vmatpush.bf16.xpose.msra.mxu0 %v827
          %842 = vmatpush.bf16.xpose.msra.mxu0 %v824
          %843 = vmatpush.bf16.xpose.msra.mxu0 %v821
          %844 = vmatpush.bf16.xpose.msra.mxu0 %v818
          %845 = vmatpush.bf16.xpose.msra.mxu0 %v815
          %846 = vmatmul.bf16.gmra.mxu0 %v791
          %v847 = vpop.f32.mrf.mxu0
          %v848 = vadd.f32 0.0, %v847
          %v849 = vpop.f32.mrf.mxu0
          %v850 = vadd.f32 0.0, %v849
          %851 = vmatmul.bf16.gmra.mxu0 %v794
          %v852 = vpop.f32.mrf.mxu0
          %v853 = vadd.f32 0.0, %v852
          %v854 = vpop.f32.mrf.mxu0
          %v855 = vadd.f32 0.0, %v854
          %856 = vmatmul.bf16.gmra.mxu0 %v797
          %v857 = vpop.f32.mrf.mxu0
          %v858 = vadd.f32 0.0, %v857
          %v859 = vpop.f32.mrf.mxu0
          %v860 = vadd.f32 0.0, %v859
          %861 = vmatmul.bf16.gmra.mxu0 %v800
          %v862 = vpop.f32.mrf.mxu0
          %v863 = vadd.f32 0.0, %v862
          %v864 = vpop.f32.mrf.mxu0
          %v865 = vadd.f32 0.0, %v864
          %866 = vmatmul.bf16.gmra.mxu0 %v803
          %v867 = vpop.f32.mrf.mxu0
          %v868 = vadd.f32 0.0, %v867
          %v869 = vpop.f32.mrf.mxu0
          %v870 = vadd.f32 0.0, %v869
          %871 = vmatmul.bf16.gmra.mxu0 %v806
          %v872 = vpop.f32.mrf.mxu0
          %v873 = vadd.f32 0.0, %v872
          %v874 = vpop.f32.mrf.mxu0
          %v875 = vadd.f32 0.0, %v874
          %876 = vmatmul.bf16.gmra.mxu0 %v809
          %v877 = vpop.f32.mrf.mxu0
          %v878 = vadd.f32 0.0, %v877
          %v879 = vpop.f32.mrf.mxu0
          %v880 = vadd.f32 0.0, %v879
          %881 = vmatmul.bf16.gmra.mxu0 %v812
          %v882 = vpop.f32.mrf.mxu0
          %v883 = vadd.f32 0.0, %v882
          %v884 = vpop.f32.mrf.mxu0
          %v885 = vadd.f32 0.0, %v884
          %886 = vdwg.mxu0
          %v887 = vld [vmem:[#allocation2] sm:$0xff]
          %v888 = vld [vmem:[#allocation2 + $0x8] sm:$0xff]
          %v889 = vld [vmem:[#allocation2 + $0x10] sm:$0xff]
          %v890 = vld [vmem:[#allocation2 + $0x18] sm:$0xff]
          %v891 = vld [vmem:[#allocation2 + $0x20] sm:$0xff]
          %v892 = vld [vmem:[#allocation2 + $0x28] sm:$0xff]
          %v893 = vld [vmem:[#allocation2 + $0x30] sm:$0xff]
          %v894 = vld [vmem:[#allocation2 + $0x38] sm:$0xff]
          %v895 = vld [vmem:[#allocation2 + $0x40] sm:$0xff]
          %v896 = vld [vmem:[#allocation2 + $0x48] sm:$0xff]
          %v897 = vld [vmem:[#allocation2 + $0x50] sm:$0xff]
          %v898 = vld [vmem:[#allocation2 + $0x58] sm:$0xff]
          %v899 = vld [vmem:[#allocation2 + $0x60] sm:$0xff]
          %v900 = vld [vmem:[#allocation2 + $0x68] sm:$0xff]
          %v901 = vld [vmem:[#allocation2 + $0x70] sm:$0xff]
          %v902 = vld [vmem:[#allocation2 + $0x78] sm:$0xff]
          %v903 = vld [vmem:[#allocation2 + $0x80] sm:$0xff]
          %v904 = vld [vmem:[#allocation2 + $0x88] sm:$0xff]
          %v905 = vld [vmem:[#allocation2 + $0x90] sm:$0xff]
          %v906 = vld [vmem:[#allocation2 + $0x98] sm:$0xff]
          %v907 = vld [vmem:[#allocation2 + $0xa0] sm:$0xff]
          %v908 = vld [vmem:[#allocation2 + $0xa8] sm:$0xff]
          %v909 = vld [vmem:[#allocation2 + $0xb0] sm:$0xff]
          %v910 = vld [vmem:[#allocation2 + $0xb8] sm:$0xff]
          %v911 = vld [vmem:[#allocation2 + $0xc0] sm:$0xff]
          %v912 = vld [vmem:[#allocation2 + $0xc8] sm:$0xff]
          %v913 = vld [vmem:[#allocation2 + $0xd0] sm:$0xff]
          %v914 = vld [vmem:[#allocation2 + $0xd8] sm:$0xff]
          %v915 = vld [vmem:[#allocation2 + $0xe0] sm:$0xff]
          %v916 = vld [vmem:[#allocation2 + $0xe8] sm:$0xff]
          %v917 = vld [vmem:[#allocation2 + $0xf0] sm:$0xff]
          %v918 = vld [vmem:[#allocation2 + $0xf8] sm:$0xff]
          %919 = vmax.xlane.f32.xlu0 %v671
          %v920 = vpop.xlane.xlu0 %919
          %921 = vmax.xlane.f32.xlu0 %v673
          %v922 = vpop.xlane.xlu0 %921
          %923 = vmax.xlane.f32.xlu0 %v676
          %v924 = vpop.xlane.xlu0 %923
          %925 = vmax.xlane.f32.xlu0 %v678
          %v926 = vpop.xlane.xlu0 %925
          %927 = vmax.xlane.f32.xlu0 %v681
          %v928 = vpop.xlane.xlu0 %927
          %929 = vmax.xlane.f32.xlu0 %v683
          %v930 = vpop.xlane.xlu0 %929
          %931 = vmax.xlane.f32.xlu0 %v686
          %v932 = vpop.xlane.xlu0 %931
          %933 = vmax.xlane.f32.xlu0 %v688
          %v934 = vpop.xlane.xlu0 %933
          %935 = vmax.xlane.f32.xlu0 %v691
          %v936 = vpop.xlane.xlu0 %935
          %937 = vmax.xlane.f32.xlu0 %v693
          %v938 = vpop.xlane.xlu0 %937
          %939 = vmax.xlane.f32.xlu0 %v696
          %v940 = vpop.xlane.xlu0 %939
          %941 = vmax.xlane.f32.xlu0 %v698
          %v942 = vpop.xlane.xlu0 %941
          %943 = vmax.xlane.f32.xlu0 %v701
          %v944 = vpop.xlane.xlu0 %943
          %945 = vmax.xlane.f32.xlu0 %v703
          %v946 = vpop.xlane.xlu0 %945
          %947 = vmax.xlane.f32.xlu0 %v706
          %v948 = vpop.xlane.xlu0 %947
          %949 = vmax.xlane.f32.xlu0 %v708
          %v950 = vpop.xlane.xlu0 %949
          %951 = vmax.xlane.f32.xlu0 %v848
          %v952 = vpop.xlane.xlu0 %951
          %953 = vmax.xlane.f32.xlu0 %v850
          %v954 = vpop.xlane.xlu0 %953
          %955 = vmax.xlane.f32.xlu0 %v853
          %v956 = vpop.xlane.xlu0 %955
          %957 = vmax.xlane.f32.xlu0 %v855
          %v958 = vpop.xlane.xlu0 %957
          %959 = vmax.xlane.f32.xlu0 %v858
          %v960 = vpop.xlane.xlu0 %959
          %961 = vmax.xlane.f32.xlu0 %v860
          %v962 = vpop.xlane.xlu0 %961
          %963 = vmax.xlane.f32.xlu0 %v863
          %v964 = vpop.xlane.xlu0 %963
          %965 = vmax.xlane.f32.xlu0 %v865
          %v966 = vpop.xlane.xlu0 %965
          %967 = vmax.xlane.f32.xlu0 %v868
          %v968 = vpop.xlane.xlu0 %967
          %969 = vmax.xlane.f32.xlu0 %v870
          %v970 = vpop.xlane.xlu0 %969
          %971 = vmax.xlane.f32.xlu0 %v873
          %v972 = vpop.xlane.xlu0 %971
          %973 = vmax.xlane.f32.xlu0 %v875
          %v974 = vpop.xlane.xlu0 %973
          %975 = vmax.xlane.f32.xlu0 %v878
          %v976 = vpop.xlane.xlu0 %975
          %977 = vmax.xlane.f32.xlu0 %v880
          %v978 = vpop.xlane.xlu0 %977
          %979 = vmax.xlane.f32.xlu0 %v883
          %v980 = vpop.xlane.xlu0 %979
          %981 = vmax.xlane.f32.xlu0 %v885
          %v982 = vpop.xlane.xlu0 %981
          %v983 = vmax.f32 %v887, %v920
          %v984 = vmax.f32 %v888, %v922
          %v985 = vmax.f32 %v889, %v924
          %v986 = vmax.f32 %v890, %v926
          %v987 = vmax.f32 %v891, %v928
          %v988 = vmax.f32 %v892, %v930
          %v989 = vmax.f32 %v893, %v932
          %v990 = vmax.f32 %v894, %v934
          %v991 = vmax.f32 %v895, %v936
          %v992 = vmax.f32 %v896, %v938
          %v993 = vmax.f32 %v897, %v940
          %v994 = vmax.f32 %v898, %v942
          %v995 = vmax.f32 %v899, %v944
          %v996 = vmax.f32 %v900, %v946
          %v997 = vmax.f32 %v901, %v948
          %v998 = vmax.f32 %v902, %v950
          %v999 = vmax.f32 %v903, %v952
          %v1000 = vmax.f32 %v904, %v954
          %v1001 = vmax.f32 %v905, %v956
          %v1002 = vmax.f32 %v906, %v958
          %v1003 = vmax.f32 %v907, %v960
          %v1004 = vmax.f32 %v908, %v962
          %v1005 = vmax.f32 %v909, %v964
          %v1006 = vmax.f32 %v910, %v966
          %v1007 = vmax.f32 %v911, %v968
          %v1008 = vmax.f32 %v912, %v970
          %v1009 = vmax.f32 %v913, %v972
          %v1010 = vmax.f32 %v914, %v974
          %v1011 = vmax.f32 %v915, %v976
          %v1012 = vmax.f32 %v916, %v978
          %v1013 = vmax.f32 %v917, %v980
          %v1014 = vmax.f32 %v918, %v982
          %v1015 = vsub.f32 %v887, %v983
          %v1016 = vsub.f32 %v888, %v984
          %v1017 = vsub.f32 %v889, %v985
          %v1018 = vsub.f32 %v890, %v986
          %v1019 = vsub.f32 %v891, %v987
          %v1020 = vsub.f32 %v892, %v988
          %v1021 = vsub.f32 %v893, %v989
          %v1022 = vsub.f32 %v894, %v990
          %v1023 = vsub.f32 %v895, %v991
          %v1024 = vsub.f32 %v896, %v992
          %v1025 = vsub.f32 %v897, %v993
          %v1026 = vsub.f32 %v898, %v994
          %v1027 = vsub.f32 %v899, %v995
          %v1028 = vsub.f32 %v900, %v996
          %v1029 = vsub.f32 %v901, %v997
          %v1030 = vsub.f32 %v902, %v998
          %v1031 = vsub.f32 %v903, %v999
          %v1032 = vsub.f32 %v904, %v1000
          %v1033 = vsub.f32 %v905, %v1001
          %v1034 = vsub.f32 %v906, %v1002
          %v1035 = vsub.f32 %v907, %v1003
          %v1036 = vsub.f32 %v908, %v1004
          %v1037 = vsub.f32 %v909, %v1005
          %v1038 = vsub.f32 %v910, %v1006
          %v1039 = vsub.f32 %v911, %v1007
          %v1040 = vsub.f32 %v912, %v1008
          %v1041 = vsub.f32 %v913, %v1009
          %v1042 = vsub.f32 %v914, %v1010
          %v1043 = vsub.f32 %v915, %v1011
          %v1044 = vsub.f32 %v916, %v1012
          %v1045 = vsub.f32 %v917, %v1013
          %v1046 = vsub.f32 %v918, %v1014
          %v1047 = vpow.pop %v1015
          %v1048 = vpow.pop %v1016
          %v1049 = vpow.pop %v1017
          %v1050 = vpow.pop %v1018
          %v1051 = vpow.pop %v1019
          %v1052 = vpow.pop %v1020
          %v1053 = vpow.pop %v1021
          %v1054 = vpow.pop %v1022
          %v1055 = vpow.pop %v1023
          %v1056 = vpow.pop %v1024
          %v1057 = vpow.pop %v1025
          %v1058 = vpow.pop %v1026
          %v1059 = vpow.pop %v1027
          %v1060 = vpow.pop %v1028
          %v1061 = vpow.pop %v1029
          %v1062 = vpow.pop %v1030
          %v1063 = vpow.pop %v1031
          %v1064 = vpow.pop %v1032
          %v1065 = vpow.pop %v1033
          %v1066 = vpow.pop %v1034
          %v1067 = vpow.pop %v1035
          %v1068 = vpow.pop %v1036
          %v1069 = vpow.pop %v1037
          %v1070 = vpow.pop %v1038
          %v1071 = vpow.pop %v1039
          %v1072 = vpow.pop %v1040
          %v1073 = vpow.pop %v1041
          %v1074 = vpow.pop %v1042
          %v1075 = vpow.pop %v1043
          %v1076 = vpow.pop %v1044
          %v1077 = vpow.pop %v1045
          %v1078 = vpow.pop %v1046
          %1080 = vset.pattern.permute.xlu0 0
          %1081 = vperm.xlu0 %1080, %v983
          %v1082 = vpop.permute.xlu0 %1081
          %1085 = vset.pattern.permute.xlu0 0
          %1086 = vperm.xlu0 %1085, %v984
          %v1087 = vpop.permute.xlu0 %1086
          %1090 = vset.pattern.permute.xlu0 0
          %1091 = vperm.xlu0 %1090, %v985
          %v1092 = vpop.permute.xlu0 %1091
          %1095 = vset.pattern.permute.xlu0 0
          %1096 = vperm.xlu0 %1095, %v986
          %v1097 = vpop.permute.xlu0 %1096
          %1100 = vset.pattern.permute.xlu0 0
          %1101 = vperm.xlu0 %1100, %v987
          %v1102 = vpop.permute.xlu0 %1101
          %1105 = vset.pattern.permute.xlu0 0
          %1106 = vperm.xlu0 %1105, %v988
          %v1107 = vpop.permute.xlu0 %1106
          %1110 = vset.pattern.permute.xlu0 0
          %1111 = vperm.xlu0 %1110, %v989
          %v1112 = vpop.permute.xlu0 %1111
          %1115 = vset.pattern.permute.xlu0 0
          %1116 = vperm.xlu0 %1115, %v990
          %v1117 = vpop.permute.xlu0 %1116
          %1120 = vset.pattern.permute.xlu0 0
          %1121 = vperm.xlu0 %1120, %v991
          %v1122 = vpop.permute.xlu0 %1121
          %1125 = vset.pattern.permute.xlu0 0
          %1126 = vperm.xlu0 %1125, %v992
          %v1127 = vpop.permute.xlu0 %1126
          %1130 = vset.pattern.permute.xlu0 0
          %1131 = vperm.xlu0 %1130, %v993
          %v1132 = vpop.permute.xlu0 %1131
          %1135 = vset.pattern.permute.xlu0 0
          %1136 = vperm.xlu0 %1135, %v994
          %v1137 = vpop.permute.xlu0 %1136
          %1140 = vset.pattern.permute.xlu0 0
          %1141 = vperm.xlu0 %1140, %v995
          %v1142 = vpop.permute.xlu0 %1141
          %1145 = vset.pattern.permute.xlu0 0
          %1146 = vperm.xlu0 %1145, %v996
          %v1147 = vpop.permute.xlu0 %1146
          %1150 = vset.pattern.permute.xlu0 0
          %1151 = vperm.xlu0 %1150, %v997
          %v1152 = vpop.permute.xlu0 %1151
          %1155 = vset.pattern.permute.xlu0 0
          %1156 = vperm.xlu0 %1155, %v998
          %v1157 = vpop.permute.xlu0 %1156
          %1160 = vset.pattern.permute.xlu0 0
          %1161 = vperm.xlu0 %1160, %v999
          %v1162 = vpop.permute.xlu0 %1161
          %1165 = vset.pattern.permute.xlu0 0
          %1166 = vperm.xlu0 %1165, %v1000
          %v1167 = vpop.permute.xlu0 %1166
          %1170 = vset.pattern.permute.xlu0 0
          %1171 = vperm.xlu0 %1170, %v1001
          %v1172 = vpop.permute.xlu0 %1171
          %1175 = vset.pattern.permute.xlu0 0
          %1176 = vperm.xlu0 %1175, %v1002
          %v1177 = vpop.permute.xlu0 %1176
          %1180 = vset.pattern.permute.xlu0 0
          %1181 = vperm.xlu0 %1180, %v1003
          %v1182 = vpop.permute.xlu0 %1181
          %1185 = vset.pattern.permute.xlu0 0
          %1186 = vperm.xlu0 %1185, %v1004
          %v1187 = vpop.permute.xlu0 %1186
          %1190 = vset.pattern.permute.xlu0 0
          %1191 = vperm.xlu0 %1190, %v1005
          %v1192 = vpop.permute.xlu0 %1191
          %1195 = vset.pattern.permute.xlu0 0
          %1196 = vperm.xlu0 %1195, %v1006
          %v1197 = vpop.permute.xlu0 %1196
          %1200 = vset.pattern.permute.xlu0 0
          %1201 = vperm.xlu0 %1200, %v1007
          %v1202 = vpop.permute.xlu0 %1201
          %1205 = vset.pattern.permute.xlu0 0
          %1206 = vperm.xlu0 %1205, %v1008
          %v1207 = vpop.permute.xlu0 %1206
          %1210 = vset.pattern.permute.xlu0 0
          %1211 = vperm.xlu0 %1210, %v1009
          %v1212 = vpop.permute.xlu0 %1211
          %1215 = vset.pattern.permute.xlu0 0
          %1216 = vperm.xlu0 %1215, %v1010
          %v1217 = vpop.permute.xlu0 %1216
          %1220 = vset.pattern.permute.xlu0 0
          %1221 = vperm.xlu0 %1220, %v1011
          %v1222 = vpop.permute.xlu0 %1221
          %1225 = vset.pattern.permute.xlu0 0
          %1226 = vperm.xlu0 %1225, %v1012
          %v1227 = vpop.permute.xlu0 %1226
          %1230 = vset.pattern.permute.xlu0 0
          %1231 = vperm.xlu0 %1230, %v1013
          %v1232 = vpop.permute.xlu0 %1231
          %1235 = vset.pattern.permute.xlu0 0
          %1236 = vperm.xlu0 %1235, %v1014
          %v1237 = vpop.permute.xlu0 %1236
          %v1239 = vsub.f32 %v671, %v1082
          %v1240 = vsub.f32 %v673, %v1087
          %v1241 = vsub.f32 %v676, %v1092
          %v1242 = vsub.f32 %v678, %v1097
          %v1243 = vsub.f32 %v681, %v1102
          %v1244 = vsub.f32 %v683, %v1107
          %v1245 = vsub.f32 %v686, %v1112
          %v1246 = vsub.f32 %v688, %v1117
          %v1247 = vsub.f32 %v691, %v1122
          %v1248 = vsub.f32 %v693, %v1127
          %v1249 = vsub.f32 %v696, %v1132
          %v1250 = vsub.f32 %v698, %v1137
          %v1251 = vsub.f32 %v701, %v1142
          %v1252 = vsub.f32 %v703, %v1147
          %v1253 = vsub.f32 %v706, %v1152
          %v1254 = vsub.f32 %v708, %v1157
          %v1255 = vsub.f32 %v848, %v1162
          %v1256 = vsub.f32 %v850, %v1167
          %v1257 = vsub.f32 %v853, %v1172
          %v1258 = vsub.f32 %v855, %v1177
          %v1259 = vsub.f32 %v858, %v1182
          %v1260 = vsub.f32 %v860, %v1187
          %v1261 = vsub.f32 %v863, %v1192
          %v1262 = vsub.f32 %v865, %v1197
          %v1263 = vsub.f32 %v868, %v1202
          %v1264 = vsub.f32 %v870, %v1207
          %v1265 = vsub.f32 %v873, %v1212
          %v1266 = vsub.f32 %v875, %v1217
          %v1267 = vsub.f32 %v878, %v1222
          %v1268 = vsub.f32 %v880, %v1227
          %v1269 = vsub.f32 %v883, %v1232
          %v1270 = vsub.f32 %v885, %v1237
          %v1271 = vpack.c.bf16 %v1239, %v1239
          %v1272 = vpack.c.bf16 %v1240, %v1240
          %v1273 = vpack.c.bf16 %v1241, %v1241
          %v1274 = vpack.c.bf16 %v1242, %v1242
          %v1275 = vpack.c.bf16 %v1243, %v1243
          %v1276 = vpack.c.bf16 %v1244, %v1244
          %v1277 = vpack.c.bf16 %v1245, %v1245
          %v1278 = vpack.c.bf16 %v1246, %v1246
          %v1279 = vpack.c.bf16 %v1247, %v1247
          %v1280 = vpack.c.bf16 %v1248, %v1248
          %v1281 = vpack.c.bf16 %v1249, %v1249
          %v1282 = vpack.c.bf16 %v1250, %v1250
          %v1283 = vpack.c.bf16 %v1251, %v1251
          %v1284 = vpack.c.bf16 %v1252, %v1252
          %v1285 = vpack.c.bf16 %v1253, %v1253
          %v1286 = vpack.c.bf16 %v1254, %v1254
          %v1287 = vpack.c.bf16 %v1255, %v1255
          %v1288 = vpack.c.bf16 %v1256, %v1256
          %v1289 = vpack.c.bf16 %v1257, %v1257
          %v1290 = vpack.c.bf16 %v1258, %v1258
          %v1291 = vpack.c.bf16 %v1259, %v1259
          %v1292 = vpack.c.bf16 %v1260, %v1260
          %v1293 = vpack.c.bf16 %v1261, %v1261
          %v1294 = vpack.c.bf16 %v1262, %v1262
          %v1295 = vpack.c.bf16 %v1263, %v1263
          %v1296 = vpack.c.bf16 %v1264, %v1264
          %v1297 = vpack.c.bf16 %v1265, %v1265
          %v1298 = vpack.c.bf16 %v1266, %v1266
          %v1299 = vpack.c.bf16 %v1267, %v1267
          %v1300 = vpack.c.bf16 %v1268, %v1268
          %v1301 = vpack.c.bf16 %v1269, %v1269
          %v1302 = vpack.c.bf16 %v1270, %v1270
          %v1303 = vunpack.c.l.bf16 %v1271
          %v1304 = vunpack.c.l.bf16 %v1272
          %v1305 = vunpack.c.l.bf16 %v1273
          %v1306 = vunpack.c.l.bf16 %v1274
          %v1307 = vunpack.c.l.bf16 %v1275
          %v1308 = vunpack.c.l.bf16 %v1276
          %v1309 = vunpack.c.l.bf16 %v1277
          %v1310 = vunpack.c.l.bf16 %v1278
          %v1311 = vunpack.c.l.bf16 %v1279
          %v1312 = vunpack.c.l.bf16 %v1280
          %v1313 = vunpack.c.l.bf16 %v1281
          %v1314 = vunpack.c.l.bf16 %v1282
          %v1315 = vunpack.c.l.bf16 %v1283
          %v1316 = vunpack.c.l.bf16 %v1284
          %v1317 = vunpack.c.l.bf16 %v1285
          %v1318 = vunpack.c.l.bf16 %v1286
          %v1319 = vunpack.c.l.bf16 %v1287
          %v1320 = vunpack.c.l.bf16 %v1288
          %v1321 = vunpack.c.l.bf16 %v1289
          %v1322 = vunpack.c.l.bf16 %v1290
          %v1323 = vunpack.c.l.bf16 %v1291
          %v1324 = vunpack.c.l.bf16 %v1292
          %v1325 = vunpack.c.l.bf16 %v1293
          %v1326 = vunpack.c.l.bf16 %v1294
          %v1327 = vunpack.c.l.bf16 %v1295
          %v1328 = vunpack.c.l.bf16 %v1296
          %v1329 = vunpack.c.l.bf16 %v1297
          %v1330 = vunpack.c.l.bf16 %v1298
          %v1331 = vunpack.c.l.bf16 %v1299
          %v1332 = vunpack.c.l.bf16 %v1300
          %v1333 = vunpack.c.l.bf16 %v1301
          %v1334 = vunpack.c.l.bf16 %v1302
          %v1335 = vpow.pop %v1303
          %v1336 = vpow.pop %v1304
          %v1337 = vpow.pop %v1305
          %v1338 = vpow.pop %v1306
          %v1339 = vpow.pop %v1307
          %v1340 = vpow.pop %v1308
          %v1341 = vpow.pop %v1309
          %v1342 = vpow.pop %v1310
          %v1343 = vpow.pop %v1311
          %v1344 = vpow.pop %v1312
          %v1345 = vpow.pop %v1313
          %v1346 = vpow.pop %v1314
          %v1347 = vpow.pop %v1315
          %v1348 = vpow.pop %v1316
          %v1349 = vpow.pop %v1317
          %v1350 = vpow.pop %v1318
          %v1351 = vpow.pop %v1319
          %v1352 = vpow.pop %v1320
          %v1353 = vpow.pop %v1321
          %v1354 = vpow.pop %v1322
          %v1355 = vpow.pop %v1323
          %v1356 = vpow.pop %v1324
          %v1357 = vpow.pop %v1325
          %v1358 = vpow.pop %v1326
          %v1359 = vpow.pop %v1327
          %v1360 = vpow.pop %v1328
          %v1361 = vpow.pop %v1329
          %v1362 = vpow.pop %v1330
          %v1363 = vpow.pop %v1331
          %v1364 = vpow.pop %v1332
          %v1365 = vpow.pop %v1333
          %v1366 = vpow.pop %v1334
          %v1367 = vpack.c.bf16 %v1335, %v1335
          %v1368 = vpack.c.bf16 %v1336, %v1336
          %v1369 = vpack.c.bf16 %v1337, %v1337
          %v1370 = vpack.c.bf16 %v1338, %v1338
          %v1371 = vpack.c.bf16 %v1339, %v1339
          %v1372 = vpack.c.bf16 %v1340, %v1340
          %v1373 = vpack.c.bf16 %v1341, %v1341
          %v1374 = vpack.c.bf16 %v1342, %v1342
          %v1375 = vpack.c.bf16 %v1343, %v1343
          %v1376 = vpack.c.bf16 %v1344, %v1344
          %v1377 = vpack.c.bf16 %v1345, %v1345
          %v1378 = vpack.c.bf16 %v1346, %v1346
          %v1379 = vpack.c.bf16 %v1347, %v1347
          %v1380 = vpack.c.bf16 %v1348, %v1348
          %v1381 = vpack.c.bf16 %v1349, %v1349
          %v1382 = vpack.c.bf16 %v1350, %v1350
          %v1383 = vpack.c.bf16 %v1351, %v1351
          %v1384 = vpack.c.bf16 %v1352, %v1352
          %v1385 = vpack.c.bf16 %v1353, %v1353
          %v1386 = vpack.c.bf16 %v1354, %v1354
          %v1387 = vpack.c.bf16 %v1355, %v1355
          %v1388 = vpack.c.bf16 %v1356, %v1356
          %v1389 = vpack.c.bf16 %v1357, %v1357
          %v1390 = vpack.c.bf16 %v1358, %v1358
          %v1391 = vpack.c.bf16 %v1359, %v1359
          %v1392 = vpack.c.bf16 %v1360, %v1360
          %v1393 = vpack.c.bf16 %v1361, %v1361
          %v1394 = vpack.c.bf16 %v1362, %v1362
          %v1395 = vpack.c.bf16 %v1363, %v1363
          %v1396 = vpack.c.bf16 %v1364, %v1364
          %v1397 = vpack.c.bf16 %v1365, %v1365
          %v1398 = vpack.c.bf16 %v1366, %v1366
          %v1399 = vld [vmem:[#allocation3] sm:$0xff]
          %v1400 = vld [vmem:[#allocation3 + $0x8] sm:$0xff]
          %v1401 = vld [vmem:[#allocation3 + $0x10] sm:$0xff]
          %v1402 = vld [vmem:[#allocation3 + $0x18] sm:$0xff]
          %v1403 = vld [vmem:[#allocation3 + $0x20] sm:$0xff]
          %v1404 = vld [vmem:[#allocation3 + $0x28] sm:$0xff]
          %v1405 = vld [vmem:[#allocation3 + $0x30] sm:$0xff]
          %v1406 = vld [vmem:[#allocation3 + $0x38] sm:$0xff]
          %v1407 = vld [vmem:[#allocation3 + $0x40] sm:$0xff]
          %v1408 = vld [vmem:[#allocation3 + $0x48] sm:$0xff]
          %v1409 = vld [vmem:[#allocation3 + $0x50] sm:$0xff]
          %v1410 = vld [vmem:[#allocation3 + $0x58] sm:$0xff]
          %v1411 = vld [vmem:[#allocation3 + $0x60] sm:$0xff]
          %v1412 = vld [vmem:[#allocation3 + $0x68] sm:$0xff]
          %v1413 = vld [vmem:[#allocation3 + $0x70] sm:$0xff]
          %v1414 = vld [vmem:[#allocation3 + $0x78] sm:$0xff]
          %v1415 = vld [vmem:[#allocation3 + $0x80] sm:$0xff]
          %v1416 = vld [vmem:[#allocation3 + $0x88] sm:$0xff]
          %v1417 = vld [vmem:[#allocation3 + $0x90] sm:$0xff]
          %v1418 = vld [vmem:[#allocation3 + $0x98] sm:$0xff]
          %v1419 = vld [vmem:[#allocation3 + $0xa0] sm:$0xff]
          %v1420 = vld [vmem:[#allocation3 + $0xa8] sm:$0xff]
          %v1421 = vld [vmem:[#allocation3 + $0xb0] sm:$0xff]
          %v1422 = vld [vmem:[#allocation3 + $0xb8] sm:$0xff]
          %v1423 = vld [vmem:[#allocation3 + $0xc0] sm:$0xff]
          %v1424 = vld [vmem:[#allocation3 + $0xc8] sm:$0xff]
          %v1425 = vld [vmem:[#allocation3 + $0xd0] sm:$0xff]
          %v1426 = vld [vmem:[#allocation3 + $0xd8] sm:$0xff]
          %v1427 = vld [vmem:[#allocation3 + $0xe0] sm:$0xff]
          %v1428 = vld [vmem:[#allocation3 + $0xe8] sm:$0xff]
          %v1429 = vld [vmem:[#allocation3 + $0xf0] sm:$0xff]
          %v1430 = vld [vmem:[#allocation3 + $0xf8] sm:$0xff]
          %v1431 = vmul.f32 %v1047, %v1399
          %v1432 = vmul.f32 %v1048, %v1400
          %v1433 = vmul.f32 %v1049, %v1401
          %v1434 = vmul.f32 %v1050, %v1402
          %v1435 = vmul.f32 %v1051, %v1403
          %v1436 = vmul.f32 %v1052, %v1404
          %v1437 = vmul.f32 %v1053, %v1405
          %v1438 = vmul.f32 %v1054, %v1406
          %v1439 = vmul.f32 %v1055, %v1407
          %v1440 = vmul.f32 %v1056, %v1408
          %v1441 = vmul.f32 %v1057, %v1409
          %v1442 = vmul.f32 %v1058, %v1410
          %v1443 = vmul.f32 %v1059, %v1411
          %v1444 = vmul.f32 %v1060, %v1412
          %v1445 = vmul.f32 %v1061, %v1413
          %v1446 = vmul.f32 %v1062, %v1414
          %v1447 = vmul.f32 %v1063, %v1415
          %v1448 = vmul.f32 %v1064, %v1416
          %v1449 = vmul.f32 %v1065, %v1417
          %v1450 = vmul.f32 %v1066, %v1418
          %v1451 = vmul.f32 %v1067, %v1419
          %v1452 = vmul.f32 %v1068, %v1420
          %v1453 = vmul.f32 %v1069, %v1421
          %v1454 = vmul.f32 %v1070, %v1422
          %v1455 = vmul.f32 %v1071, %v1423
          %v1456 = vmul.f32 %v1072, %v1424
          %v1457 = vmul.f32 %v1073, %v1425
          %v1458 = vmul.f32 %v1074, %v1426
          %v1459 = vmul.f32 %v1075, %v1427
          %v1460 = vmul.f32 %v1076, %v1428
          %v1461 = vmul.f32 %v1077, %v1429
          %v1462 = vmul.f32 %v1078, %v1430
          %v1463 = vunpack.c.l.bf16 %v1367
          %v1464 = vunpack.c.l.bf16 %v1368
          %v1465 = vunpack.c.l.bf16 %v1369
          %v1466 = vunpack.c.l.bf16 %v1370
          %v1467 = vunpack.c.l.bf16 %v1371
          %v1468 = vunpack.c.l.bf16 %v1372
          %v1469 = vunpack.c.l.bf16 %v1373
          %v1470 = vunpack.c.l.bf16 %v1374
          %v1471 = vunpack.c.l.bf16 %v1375
          %v1472 = vunpack.c.l.bf16 %v1376
          %v1473 = vunpack.c.l.bf16 %v1377
          %v1474 = vunpack.c.l.bf16 %v1378
          %v1475 = vunpack.c.l.bf16 %v1379
          %v1476 = vunpack.c.l.bf16 %v1380
          %v1477 = vunpack.c.l.bf16 %v1381
          %v1478 = vunpack.c.l.bf16 %v1382
          %v1479 = vunpack.c.l.bf16 %v1383
          %v1480 = vunpack.c.l.bf16 %v1384
          %v1481 = vunpack.c.l.bf16 %v1385
          %v1482 = vunpack.c.l.bf16 %v1386
          %v1483 = vunpack.c.l.bf16 %v1387
          %v1484 = vunpack.c.l.bf16 %v1388
          %v1485 = vunpack.c.l.bf16 %v1389
          %v1486 = vunpack.c.l.bf16 %v1390
          %v1487 = vunpack.c.l.bf16 %v1391
          %v1488 = vunpack.c.l.bf16 %v1392
          %v1489 = vunpack.c.l.bf16 %v1393
          %v1490 = vunpack.c.l.bf16 %v1394
          %v1491 = vunpack.c.l.bf16 %v1395
          %v1492 = vunpack.c.l.bf16 %v1396
          %v1493 = vunpack.c.l.bf16 %v1397
          %v1494 = vunpack.c.l.bf16 %v1398
          %1495 = vadd.xlane.f32.xlu0 %v1463
          %v1496 = vpop.xlane.xlu0 %1495
          %1497 = vadd.xlane.f32.xlu0 %v1464
          %v1498 = vpop.xlane.xlu0 %1497
          %1499 = vadd.xlane.f32.xlu0 %v1465
          %v1500 = vpop.xlane.xlu0 %1499
          %1501 = vadd.xlane.f32.xlu0 %v1466
          %v1502 = vpop.xlane.xlu0 %1501
          %1503 = vadd.xlane.f32.xlu0 %v1467
          %v1504 = vpop.xlane.xlu0 %1503
          %1505 = vadd.xlane.f32.xlu0 %v1468
          %v1506 = vpop.xlane.xlu0 %1505
          %1507 = vadd.xlane.f32.xlu0 %v1469
          %v1508 = vpop.xlane.xlu0 %1507
          %1509 = vadd.xlane.f32.xlu0 %v1470
          %v1510 = vpop.xlane.xlu0 %1509
          %1511 = vadd.xlane.f32.xlu0 %v1471
          %v1512 = vpop.xlane.xlu0 %1511
          %1513 = vadd.xlane.f32.xlu0 %v1472
          %v1514 = vpop.xlane.xlu0 %1513
          %1515 = vadd.xlane.f32.xlu0 %v1473
          %v1516 = vpop.xlane.xlu0 %1515
          %1517 = vadd.xlane.f32.xlu0 %v1474
          %v1518 = vpop.xlane.xlu0 %1517
          %1519 = vadd.xlane.f32.xlu0 %v1475
          %v1520 = vpop.xlane.xlu0 %1519
          %1521 = vadd.xlane.f32.xlu0 %v1476
          %v1522 = vpop.xlane.xlu0 %1521
          %1523 = vadd.xlane.f32.xlu0 %v1477
          %v1524 = vpop.xlane.xlu0 %1523
          %1525 = vadd.xlane.f32.xlu0 %v1478
          %v1526 = vpop.xlane.xlu0 %1525
          %1527 = vadd.xlane.f32.xlu0 %v1479
          %v1528 = vpop.xlane.xlu0 %1527
          %1529 = vadd.xlane.f32.xlu0 %v1480
          %v1530 = vpop.xlane.xlu0 %1529
          %1531 = vadd.xlane.f32.xlu0 %v1481
          %v1532 = vpop.xlane.xlu0 %1531
          %1533 = vadd.xlane.f32.xlu0 %v1482
          %v1534 = vpop.xlane.xlu0 %1533
          %1535 = vadd.xlane.f32.xlu0 %v1483
          %v1536 = vpop.xlane.xlu0 %1535
          %1537 = vadd.xlane.f32.xlu0 %v1484
          %v1538 = vpop.xlane.xlu0 %1537
          %1539 = vadd.xlane.f32.xlu0 %v1485
          %v1540 = vpop.xlane.xlu0 %1539
          %1541 = vadd.xlane.f32.xlu0 %v1486
          %v1542 = vpop.xlane.xlu0 %1541
          %1543 = vadd.xlane.f32.xlu0 %v1487
          %v1544 = vpop.xlane.xlu0 %1543
          %1545 = vadd.xlane.f32.xlu0 %v1488
          %v1546 = vpop.xlane.xlu0 %1545
          %1547 = vadd.xlane.f32.xlu0 %v1489
          %v1548 = vpop.xlane.xlu0 %1547
          %1549 = vadd.xlane.f32.xlu0 %v1490
          %v1550 = vpop.xlane.xlu0 %1549
          %1551 = vadd.xlane.f32.xlu0 %v1491
          %v1552 = vpop.xlane.xlu0 %1551
          %1553 = vadd.xlane.f32.xlu0 %v1492
          %v1554 = vpop.xlane.xlu0 %1553
          %1555 = vadd.xlane.f32.xlu0 %v1493
          %v1556 = vpop.xlane.xlu0 %1555
          %1557 = vadd.xlane.f32.xlu0 %v1494
          %v1558 = vpop.xlane.xlu0 %1557
          %v1559 = vadd.f32 %v1431, %v1496
          %v1560 = vadd.f32 %v1432, %v1498
          %v1561 = vadd.f32 %v1433, %v1500
          %v1562 = vadd.f32 %v1434, %v1502
          %v1563 = vadd.f32 %v1435, %v1504
          %v1564 = vadd.f32 %v1436, %v1506
          %v1565 = vadd.f32 %v1437, %v1508
          %v1566 = vadd.f32 %v1438, %v1510
          %v1567 = vadd.f32 %v1439, %v1512
          %v1568 = vadd.f32 %v1440, %v1514
          %v1569 = vadd.f32 %v1441, %v1516
          %v1570 = vadd.f32 %v1442, %v1518
          %v1571 = vadd.f32 %v1443, %v1520
          %v1572 = vadd.f32 %v1444, %v1522
          %v1573 = vadd.f32 %v1445, %v1524
          %v1574 = vadd.f32 %v1446, %v1526
          %v1575 = vadd.f32 %v1447, %v1528
          %v1576 = vadd.f32 %v1448, %v1530
          %v1577 = vadd.f32 %v1449, %v1532
          %v1578 = vadd.f32 %v1450, %v1534
          %v1579 = vadd.f32 %v1451, %v1536
          %v1580 = vadd.f32 %v1452, %v1538
          %v1581 = vadd.f32 %v1453, %v1540
          %v1582 = vadd.f32 %v1454, %v1542
          %v1583 = vadd.f32 %v1455, %v1544
          %v1584 = vadd.f32 %v1456, %v1546
          %v1585 = vadd.f32 %v1457, %v1548
          %v1586 = vadd.f32 %v1458, %v1550
          %v1587 = vadd.f32 %v1459, %v1552
          %v1588 = vadd.f32 %v1460, %v1554
          %v1589 = vadd.f32 %v1461, %v1556
          %v1590 = vadd.f32 %v1462, %v1558
          %1591 = vst.msk [vmem:[#allocation3] sm:$0xff] %vm367, %v1559
          %1592 = vst.msk [vmem:[#allocation3 + $0x8] sm:$0xff] %vm367, %v1560
          %1593 = vst.msk [vmem:[#allocation3 + $0x10] sm:$0xff] %vm367, %v1561
          %1594 = vst.msk [vmem:[#allocation3 + $0x18] sm:$0xff] %vm367, %v1562
          %1595 = vst.msk [vmem:[#allocation3 + $0x20] sm:$0xff] %vm367, %v1563
          %1596 = vst.msk [vmem:[#allocation3 + $0x28] sm:$0xff] %vm367, %v1564
          %1597 = vst.msk [vmem:[#allocation3 + $0x30] sm:$0xff] %vm367, %v1565
          %1598 = vst.msk [vmem:[#allocation3 + $0x38] sm:$0xff] %vm367, %v1566
          %1599 = vst.msk [vmem:[#allocation3 + $0x40] sm:$0xff] %vm367, %v1567
          %1600 = vst.msk [vmem:[#allocation3 + $0x48] sm:$0xff] %vm367, %v1568
          %1601 = vst.msk [vmem:[#allocation3 + $0x50] sm:$0xff] %vm367, %v1569
          %1602 = vst.msk [vmem:[#allocation3 + $0x58] sm:$0xff] %vm367, %v1570
          %1603 = vst.msk [vmem:[#allocation3 + $0x60] sm:$0xff] %vm367, %v1571
          %1604 = vst.msk [vmem:[#allocation3 + $0x68] sm:$0xff] %vm367, %v1572
          %1605 = vst.msk [vmem:[#allocation3 + $0x70] sm:$0xff] %vm367, %v1573
          %1606 = vst.msk [vmem:[#allocation3 + $0x78] sm:$0xff] %vm367, %v1574
          %1607 = vst.msk [vmem:[#allocation3 + $0x80] sm:$0xff] %vm367, %v1575
          %1608 = vst.msk [vmem:[#allocation3 + $0x88] sm:$0xff] %vm367, %v1576
          %1609 = vst.msk [vmem:[#allocation3 + $0x90] sm:$0xff] %vm367, %v1577
          %1610 = vst.msk [vmem:[#allocation3 + $0x98] sm:$0xff] %vm367, %v1578
          %1611 = vst.msk [vmem:[#allocation3 + $0xa0] sm:$0xff] %vm367, %v1579
          %1612 = vst.msk [vmem:[#allocation3 + $0xa8] sm:$0xff] %vm367, %v1580
          %1613 = vst.msk [vmem:[#allocation3 + $0xb0] sm:$0xff] %vm367, %v1581
          %1614 = vst.msk [vmem:[#allocation3 + $0xb8] sm:$0xff] %vm367, %v1582
          %1615 = vst.msk [vmem:[#allocation3 + $0xc0] sm:$0xff] %vm367, %v1583
          %1616 = vst.msk [vmem:[#allocation3 + $0xc8] sm:$0xff] %vm367, %v1584
          %1617 = vst.msk [vmem:[#allocation3 + $0xd0] sm:$0xff] %vm367, %v1585
          %1618 = vst.msk [vmem:[#allocation3 + $0xd8] sm:$0xff] %vm367, %v1586
          %1619 = vst.msk [vmem:[#allocation3 + $0xe0] sm:$0xff] %vm367, %v1587
          %1620 = vst.msk [vmem:[#allocation3 + $0xe8] sm:$0xff] %vm367, %v1588
          %1621 = vst.msk [vmem:[#allocation3 + $0xf0] sm:$0xff] %vm367, %v1589
          %1622 = vst.msk [vmem:[#allocation3 + $0xf8] sm:$0xff] %vm367, %v1590
          %v1623 = vld [vmem:[#allocation4] sm:$0xff]
          %v1624 = vld [vmem:[#allocation4 + $0x8] sm:$0xff]
          %v1625 = vld [vmem:[#allocation4 + $0x10] sm:$0xff]
          %v1626 = vld [vmem:[#allocation4 + $0x18] sm:$0xff]
          %v1627 = vld [vmem:[#allocation4 + $0x20] sm:$0xff]
          %v1628 = vld [vmem:[#allocation4 + $0x28] sm:$0xff]
          %v1629 = vld [vmem:[#allocation4 + $0x30] sm:$0xff]
          %v1630 = vld [vmem:[#allocation4 + $0x38] sm:$0xff]
          %v1631 = vld [vmem:[#allocation4 + $0x40] sm:$0xff]
          %v1632 = vld [vmem:[#allocation4 + $0x48] sm:$0xff]
          %v1633 = vld [vmem:[#allocation4 + $0x50] sm:$0xff]
          %v1634 = vld [vmem:[#allocation4 + $0x58] sm:$0xff]
          %v1635 = vld [vmem:[#allocation4 + $0x60] sm:$0xff]
          %v1636 = vld [vmem:[#allocation4 + $0x68] sm:$0xff]
          %v1637 = vld [vmem:[#allocation4 + $0x70] sm:$0xff]
          %v1638 = vld [vmem:[#allocation4 + $0x78] sm:$0xff]
          %v1639 = vld [vmem:[#allocation4 + $0x80] sm:$0xff]
          %v1640 = vld [vmem:[#allocation4 + $0x88] sm:$0xff]
          %v1641 = vld [vmem:[#allocation4 + $0x90] sm:$0xff]
          %v1642 = vld [vmem:[#allocation4 + $0x98] sm:$0xff]
          %v1643 = vld [vmem:[#allocation4 + $0xa0] sm:$0xff]
          %v1644 = vld [vmem:[#allocation4 + $0xa8] sm:$0xff]
          %v1645 = vld [vmem:[#allocation4 + $0xb0] sm:$0xff]
          %v1646 = vld [vmem:[#allocation4 + $0xb8] sm:$0xff]
          %v1647 = vld [vmem:[#allocation4 + $0xc0] sm:$0xff]
          %v1648 = vld [vmem:[#allocation4 + $0xc8] sm:$0xff]
          %v1649 = vld [vmem:[#allocation4 + $0xd0] sm:$0xff]
          %v1650 = vld [vmem:[#allocation4 + $0xd8] sm:$0xff]
          %v1651 = vld [vmem:[#allocation4 + $0xe0] sm:$0xff]
          %v1652 = vld [vmem:[#allocation4 + $0xe8] sm:$0xff]
          %v1653 = vld [vmem:[#allocation4 + $0xf0] sm:$0xff]
          %v1654 = vld [vmem:[#allocation4 + $0xf8] sm:$0xff]
          %1656 = vset.pattern.permute.xlu0 0
          %1657 = vperm.xlu0 %1656, %v1047
          %v1658 = vpop.permute.xlu0 %1657
          %1661 = vset.pattern.permute.xlu0 0
          %1662 = vperm.xlu0 %1661, %v1048
          %v1663 = vpop.permute.xlu0 %1662
          %1666 = vset.pattern.permute.xlu0 0
          %1667 = vperm.xlu0 %1666, %v1049
          %v1668 = vpop.permute.xlu0 %1667
          %1671 = vset.pattern.permute.xlu0 0
          %1672 = vperm.xlu0 %1671, %v1050
          %v1673 = vpop.permute.xlu0 %1672
          %1676 = vset.pattern.permute.xlu0 0
          %1677 = vperm.xlu0 %1676, %v1051
          %v1678 = vpop.permute.xlu0 %1677
          %1681 = vset.pattern.permute.xlu0 0
          %1682 = vperm.xlu0 %1681, %v1052
          %v1683 = vpop.permute.xlu0 %1682
          %1686 = vset.pattern.permute.xlu0 0
          %1687 = vperm.xlu0 %1686, %v1053
          %v1688 = vpop.permute.xlu0 %1687
          %1691 = vset.pattern.permute.xlu0 0
          %1692 = vperm.xlu0 %1691, %v1054
          %v1693 = vpop.permute.xlu0 %1692
          %1696 = vset.pattern.permute.xlu0 0
          %1697 = vperm.xlu0 %1696, %v1055
          %v1698 = vpop.permute.xlu0 %1697
          %1701 = vset.pattern.permute.xlu0 0
          %1702 = vperm.xlu0 %1701, %v1056
          %v1703 = vpop.permute.xlu0 %1702
          %1706 = vset.pattern.permute.xlu0 0
          %1707 = vperm.xlu0 %1706, %v1057
          %v1708 = vpop.permute.xlu0 %1707
          %1711 = vset.pattern.permute.xlu0 0
          %1712 = vperm.xlu0 %1711, %v1058
          %v1713 = vpop.permute.xlu0 %1712
          %1716 = vset.pattern.permute.xlu0 0
          %1717 = vperm.xlu0 %1716, %v1059
          %v1718 = vpop.permute.xlu0 %1717
          %1721 = vset.pattern.permute.xlu0 0
          %1722 = vperm.xlu0 %1721, %v1060
          %v1723 = vpop.permute.xlu0 %1722
          %1726 = vset.pattern.permute.xlu0 0
          %1727 = vperm.xlu0 %1726, %v1061
          %v1728 = vpop.permute.xlu0 %1727
          %1731 = vset.pattern.permute.xlu0 0
          %1732 = vperm.xlu0 %1731, %v1062
          %v1733 = vpop.permute.xlu0 %1732
          %1736 = vset.pattern.permute.xlu0 0
          %1737 = vperm.xlu0 %1736, %v1063
          %v1738 = vpop.permute.xlu0 %1737
          %1741 = vset.pattern.permute.xlu0 0
          %1742 = vperm.xlu0 %1741, %v1064
          %v1743 = vpop.permute.xlu0 %1742
          %1746 = vset.pattern.permute.xlu0 0
          %1747 = vperm.xlu0 %1746, %v1065
          %v1748 = vpop.permute.xlu0 %1747
          %1751 = vset.pattern.permute.xlu0 0
          %1752 = vperm.xlu0 %1751, %v1066
          %v1753 = vpop.permute.xlu0 %1752
          %1756 = vset.pattern.permute.xlu0 0
          %1757 = vperm.xlu0 %1756, %v1067
          %v1758 = vpop.permute.xlu0 %1757
          %1761 = vset.pattern.permute.xlu0 0
          %1762 = vperm.xlu0 %1761, %v1068
          %v1763 = vpop.permute.xlu0 %1762
          %1766 = vset.pattern.permute.xlu0 0
          %1767 = vperm.xlu0 %1766, %v1069
          %v1768 = vpop.permute.xlu0 %1767
          %1771 = vset.pattern.permute.xlu0 0
          %1772 = vperm.xlu0 %1771, %v1070
          %v1773 = vpop.permute.xlu0 %1772
          %1776 = vset.pattern.permute.xlu0 0
          %1777 = vperm.xlu0 %1776, %v1071
          %v1778 = vpop.permute.xlu0 %1777
          %1781 = vset.pattern.permute.xlu0 0
          %1782 = vperm.xlu0 %1781, %v1072
          %v1783 = vpop.permute.xlu0 %1782
          %1786 = vset.pattern.permute.xlu0 0
          %1787 = vperm.xlu0 %1786, %v1073
          %v1788 = vpop.permute.xlu0 %1787
          %1791 = vset.pattern.permute.xlu0 0
          %1792 = vperm.xlu0 %1791, %v1074
          %v1793 = vpop.permute.xlu0 %1792
          %1796 = vset.pattern.permute.xlu0 0
          %1797 = vperm.xlu0 %1796, %v1075
          %v1798 = vpop.permute.xlu0 %1797
          %1801 = vset.pattern.permute.xlu0 0
          %1802 = vperm.xlu0 %1801, %v1076
          %v1803 = vpop.permute.xlu0 %1802
          %1806 = vset.pattern.permute.xlu0 0
          %1807 = vperm.xlu0 %1806, %v1077
          %v1808 = vpop.permute.xlu0 %1807
          %1811 = vset.pattern.permute.xlu0 0
          %1812 = vperm.xlu0 %1811, %v1078
          %v1813 = vpop.permute.xlu0 %1812
          %v1815 = vmul.f32 %v1658, %v1623
          %v1816 = vmul.f32 %v1663, %v1624
          %v1817 = vmul.f32 %v1668, %v1625
          %v1818 = vmul.f32 %v1673, %v1626
          %v1819 = vmul.f32 %v1678, %v1627
          %v1820 = vmul.f32 %v1683, %v1628
          %v1821 = vmul.f32 %v1688, %v1629
          %v1822 = vmul.f32 %v1693, %v1630
          %v1823 = vmul.f32 %v1698, %v1631
          %v1824 = vmul.f32 %v1703, %v1632
          %v1825 = vmul.f32 %v1708, %v1633
          %v1826 = vmul.f32 %v1713, %v1634
          %v1827 = vmul.f32 %v1718, %v1635
          %v1828 = vmul.f32 %v1723, %v1636
          %v1829 = vmul.f32 %v1728, %v1637
          %v1830 = vmul.f32 %v1733, %v1638
          %v1831 = vmul.f32 %v1738, %v1639
          %v1832 = vmul.f32 %v1743, %v1640
          %v1833 = vmul.f32 %v1748, %v1641
          %v1834 = vmul.f32 %v1753, %v1642
          %v1835 = vmul.f32 %v1758, %v1643
          %v1836 = vmul.f32 %v1763, %v1644
          %v1837 = vmul.f32 %v1768, %v1645
          %v1838 = vmul.f32 %v1773, %v1646
          %v1839 = vmul.f32 %v1778, %v1647
          %v1840 = vmul.f32 %v1783, %v1648
          %v1841 = vmul.f32 %v1788, %v1649
          %v1842 = vmul.f32 %v1793, %v1650
          %v1843 = vmul.f32 %v1798, %v1651
          %v1844 = vmul.f32 %v1803, %v1652
          %v1845 = vmul.f32 %v1808, %v1653
          %v1846 = vmul.f32 %v1813, %v1654
          %v1863 = vunpack.c.l.b16 %v1367
          %v1864 = vunpack.c.l.b16 %v1368
          %v1865 = vunpack.c.l.b16 %v1369
          %v1866 = vunpack.c.l.b16 %v1370
          %v1867 = vunpack.c.l.b16 %v1371
          %v1868 = vunpack.c.l.b16 %v1372
          %v1869 = vunpack.c.l.b16 %v1373
          %v1870 = vunpack.c.l.b16 %v1374
          %v1871 = vunpack.c.l.b16 %v1375
          %v1872 = vunpack.c.l.b16 %v1376
          %v1873 = vunpack.c.l.b16 %v1377
          %v1874 = vunpack.c.l.b16 %v1378
          %v1875 = vunpack.c.l.b16 %v1379
          %v1876 = vunpack.c.l.b16 %v1380
          %v1877 = vunpack.c.l.b16 %v1381
          %v1878 = vunpack.c.l.b16 %v1382
          %v1879 = vpack.c.b16 %v1864, %v1863
          %v1880 = vpack.c.b16 %v1866, %v1865
          %v1881 = vpack.c.b16 %v1868, %v1867
          %v1882 = vpack.c.b16 %v1870, %v1869
          %v1883 = vpack.c.b16 %v1872, %v1871
          %v1884 = vpack.c.b16 %v1874, %v1873
          %v1885 = vpack.c.b16 %v1876, %v1875
          %v1886 = vpack.c.b16 %v1878, %v1877
          %v1911 = vunpack.c.l.b16 %v501
          %v1912 = vunpack.c.l.b16 %v502
          %v1913 = vunpack.c.l.b16 %v503
          %v1914 = vunpack.c.l.b16 %v504
          %v1915 = vunpack.c.l.b16 %v505
          %v1916 = vunpack.c.l.b16 %v506
          %v1917 = vunpack.c.l.b16 %v507
          %v1918 = vunpack.c.l.b16 %v508
          %v1919 = vunpack.c.l.b16 %v509
          %v1920 = vunpack.c.l.b16 %v510
          %v1921 = vunpack.c.l.b16 %v511
          %v1922 = vunpack.c.l.b16 %v512
          %v1923 = vunpack.c.l.b16 %v513
          %v1924 = vunpack.c.l.b16 %v514
          %v1925 = vunpack.c.l.b16 %v515
          %v1926 = vunpack.c.l.b16 %v516
          %v1927 = vpack.c.b16 %v1912, %v1911
          %v1928 = vpack.c.b16 %v1914, %v1913
          %v1929 = vpack.c.b16 %v1916, %v1915
          %v1930 = vpack.c.b16 %v1918, %v1917
          %v1931 = vpack.c.b16 %v1920, %v1919
          %v1932 = vpack.c.b16 %v1922, %v1921
          %v1933 = vpack.c.b16 %v1924, %v1923
          %v1934 = vpack.c.b16 %v1926, %v1925
          %1943 = vmatpush.bf16.msra.mxu0 %v1934
          %1944 = vmatpush.bf16.msra.mxu0 %v1933
          %1945 = vmatpush.bf16.msra.mxu0 %v1932
          %1946 = vmatpush.bf16.msra.mxu0 %v1931
          %1947 = vmatpush.bf16.msra.mxu0 %v1930
          %1948 = vmatpush.bf16.msra.mxu0 %v1929
          %1949 = vmatpush.bf16.msra.mxu0 %v1928
          %1950 = vmatpush.bf16.msra.mxu0 %v1927
          %1951 = vmatmul.bf16.gmra.mxu0 %v1879
          %v1952 = vpop.f32.mrf.mxu0
          %v1953 = vadd.f32 0.0, %v1952
          %v1954 = vpop.f32.mrf.mxu0
          %v1955 = vadd.f32 0.0, %v1954
          %1956 = vmatmul.bf16.gmra.mxu0 %v1880
          %v1957 = vpop.f32.mrf.mxu0
          %v1958 = vadd.f32 0.0, %v1957
          %v1959 = vpop.f32.mrf.mxu0
          %v1960 = vadd.f32 0.0, %v1959
          %1961 = vmatmul.bf16.gmra.mxu0 %v1881
          %v1962 = vpop.f32.mrf.mxu0
          %v1963 = vadd.f32 0.0, %v1962
          %v1964 = vpop.f32.mrf.mxu0
          %v1965 = vadd.f32 0.0, %v1964
          %1966 = vmatmul.bf16.gmra.mxu0 %v1882
          %v1967 = vpop.f32.mrf.mxu0
          %v1968 = vadd.f32 0.0, %v1967
          %v1969 = vpop.f32.mrf.mxu0
          %v1970 = vadd.f32 0.0, %v1969
          %1971 = vmatmul.bf16.gmra.mxu0 %v1883
          %v1972 = vpop.f32.mrf.mxu0
          %v1973 = vadd.f32 0.0, %v1972
          %v1974 = vpop.f32.mrf.mxu0
          %v1975 = vadd.f32 0.0, %v1974
          %1976 = vmatmul.bf16.gmra.mxu0 %v1884
          %v1977 = vpop.f32.mrf.mxu0
          %v1978 = vadd.f32 0.0, %v1977
          %v1979 = vpop.f32.mrf.mxu0
          %v1980 = vadd.f32 0.0, %v1979
          %1981 = vmatmul.bf16.gmra.mxu0 %v1885
          %v1982 = vpop.f32.mrf.mxu0
          %v1983 = vadd.f32 0.0, %v1982
          %v1984 = vpop.f32.mrf.mxu0
          %v1985 = vadd.f32 0.0, %v1984
          %1986 = vmatmul.bf16.gmra.mxu0 %v1886
          %v1987 = vpop.f32.mrf.mxu0
          %v1988 = vadd.f32 0.0, %v1987
          %v1989 = vpop.f32.mrf.mxu0
          %v1990 = vadd.f32 0.0, %v1989
          %1991 = vdwg.mxu0
          %v2008 = vunpack.c.l.b16 %v1383
          %v2009 = vunpack.c.l.b16 %v1384
          %v2010 = vunpack.c.l.b16 %v1385
          %v2011 = vunpack.c.l.b16 %v1386
          %v2012 = vunpack.c.l.b16 %v1387
          %v2013 = vunpack.c.l.b16 %v1388
          %v2014 = vunpack.c.l.b16 %v1389
          %v2015 = vunpack.c.l.b16 %v1390
          %v2016 = vunpack.c.l.b16 %v1391
          %v2017 = vunpack.c.l.b16 %v1392
          %v2018 = vunpack.c.l.b16 %v1393
          %v2019 = vunpack.c.l.b16 %v1394
          %v2020 = vunpack.c.l.b16 %v1395
          %v2021 = vunpack.c.l.b16 %v1396
          %v2022 = vunpack.c.l.b16 %v1397
          %v2023 = vunpack.c.l.b16 %v1398
          %v2024 = vpack.c.b16 %v2009, %v2008
          %v2025 = vpack.c.b16 %v2011, %v2010
          %v2026 = vpack.c.b16 %v2013, %v2012
          %v2027 = vpack.c.b16 %v2015, %v2014
          %v2028 = vpack.c.b16 %v2017, %v2016
          %v2029 = vpack.c.b16 %v2019, %v2018
          %v2030 = vpack.c.b16 %v2021, %v2020
          %v2031 = vpack.c.b16 %v2023, %v2022
          %v2056 = vunpack.c.l.b16 %v517
          %v2057 = vunpack.c.l.b16 %v518
          %v2058 = vunpack.c.l.b16 %v519
          %v2059 = vunpack.c.l.b16 %v520
          %v2060 = vunpack.c.l.b16 %v521
          %v2061 = vunpack.c.l.b16 %v522
          %v2062 = vunpack.c.l.b16 %v523
          %v2063 = vunpack.c.l.b16 %v524
          %v2064 = vunpack.c.l.b16 %v525
          %v2065 = vunpack.c.l.b16 %v526
          %v2066 = vunpack.c.l.b16 %v527
          %v2067 = vunpack.c.l.b16 %v528
          %v2068 = vunpack.c.l.b16 %v529
          %v2069 = vunpack.c.l.b16 %v530
          %v2070 = vunpack.c.l.b16 %v531
          %v2071 = vunpack.c.l.b16 %v532
          %v2072 = vpack.c.b16 %v2057, %v2056
          %v2073 = vpack.c.b16 %v2059, %v2058
          %v2074 = vpack.c.b16 %v2061, %v2060
          %v2075 = vpack.c.b16 %v2063, %v2062
          %v2076 = vpack.c.b16 %v2065, %v2064
          %v2077 = vpack.c.b16 %v2067, %v2066
          %v2078 = vpack.c.b16 %v2069, %v2068
          %v2079 = vpack.c.b16 %v2071, %v2070
          %2088 = vmatpush.bf16.msra.mxu0 %v2079
          %2089 = vmatpush.bf16.msra.mxu0 %v2078
          %2090 = vmatpush.bf16.msra.mxu0 %v2077
          %2091 = vmatpush.bf16.msra.mxu0 %v2076
          %2092 = vmatpush.bf16.msra.mxu0 %v2075
          %2093 = vmatpush.bf16.msra.mxu0 %v2074
          %2094 = vmatpush.bf16.msra.mxu0 %v2073
          %2095 = vmatpush.bf16.msra.mxu0 %v2072
          %2096 = vmatmul.bf16.gmra.mxu0 %v2024
          %v2097 = vpop.f32.mrf.mxu0
          %v2098 = vadd.f32 0.0, %v2097
          %v2099 = vpop.f32.mrf.mxu0
          %v2100 = vadd.f32 0.0, %v2099
          %2101 = vmatmul.bf16.gmra.mxu0 %v2025
          %v2102 = vpop.f32.mrf.mxu0
          %v2103 = vadd.f32 0.0, %v2102
          %v2104 = vpop.f32.mrf.mxu0
          %v2105 = vadd.f32 0.0, %v2104
          %2106 = vmatmul.bf16.gmra.mxu0 %v2026
          %v2107 = vpop.f32.mrf.mxu0
          %v2108 = vadd.f32 0.0, %v2107
          %v2109 = vpop.f32.mrf.mxu0
          %v2110 = vadd.f32 0.0, %v2109
          %2111 = vmatmul.bf16.gmra.mxu0 %v2027
          %v2112 = vpop.f32.mrf.mxu0
          %v2113 = vadd.f32 0.0, %v2112
          %v2114 = vpop.f32.mrf.mxu0
          %v2115 = vadd.f32 0.0, %v2114
          %2116 = vmatmul.bf16.gmra.mxu0 %v2028
          %v2117 = vpop.f32.mrf.mxu0
          %v2118 = vadd.f32 0.0, %v2117
          %v2119 = vpop.f32.mrf.mxu0
          %v2120 = vadd.f32 0.0, %v2119
          %2121 = vmatmul.bf16.gmra.mxu0 %v2029
          %v2122 = vpop.f32.mrf.mxu0
          %v2123 = vadd.f32 0.0, %v2122
          %v2124 = vpop.f32.mrf.mxu0
          %v2125 = vadd.f32 0.0, %v2124
          %2126 = vmatmul.bf16.gmra.mxu0 %v2030
          %v2127 = vpop.f32.mrf.mxu0
          %v2128 = vadd.f32 0.0, %v2127
          %v2129 = vpop.f32.mrf.mxu0
          %v2130 = vadd.f32 0.0, %v2129
          %2131 = vmatmul.bf16.gmra.mxu0 %v2031
          %v2132 = vpop.f32.mrf.mxu0
          %v2133 = vadd.f32 0.0, %v2132
          %v2134 = vpop.f32.mrf.mxu0
          %v2135 = vadd.f32 0.0, %v2134
          %2136 = vdwg.mxu0
          %v2137 = vadd.f32 %v1815, %v1953
          %v2138 = vadd.f32 %v1816, %v1955
          %v2139 = vadd.f32 %v1817, %v1958
          %v2140 = vadd.f32 %v1818, %v1960
          %v2141 = vadd.f32 %v1819, %v1963
          %v2142 = vadd.f32 %v1820, %v1965
          %v2143 = vadd.f32 %v1821, %v1968
          %v2144 = vadd.f32 %v1822, %v1970
          %v2145 = vadd.f32 %v1823, %v1973
          %v2146 = vadd.f32 %v1824, %v1975
          %v2147 = vadd.f32 %v1825, %v1978
          %v2148 = vadd.f32 %v1826, %v1980
          %v2149 = vadd.f32 %v1827, %v1983
          %v2150 = vadd.f32 %v1828, %v1985
          %v2151 = vadd.f32 %v1829, %v1988
          %v2152 = vadd.f32 %v1830, %v1990
          %v2153 = vadd.f32 %v1831, %v2098
          %v2154 = vadd.f32 %v1832, %v2100
          %v2155 = vadd.f32 %v1833, %v2103
          %v2156 = vadd.f32 %v1834, %v2105
          %v2157 = vadd.f32 %v1835, %v2108
          %v2158 = vadd.f32 %v1836, %v2110
          %v2159 = vadd.f32 %v1837, %v2113
          %v2160 = vadd.f32 %v1838, %v2115
          %v2161 = vadd.f32 %v1839, %v2118
          %v2162 = vadd.f32 %v1840, %v2120
          %v2163 = vadd.f32 %v1841, %v2123
          %v2164 = vadd.f32 %v1842, %v2125
          %v2165 = vadd.f32 %v1843, %v2128
          %v2166 = vadd.f32 %v1844, %v2130
          %v2167 = vadd.f32 %v1845, %v2133
          %v2168 = vadd.f32 %v1846, %v2135
          %2169 = vst.msk [vmem:[#allocation4] sm:$0xff] %vm432, %v2137
          %2170 = vst.msk [vmem:[#allocation4 + $0x8] sm:$0xff] %vm432, %v2138
          %2171 = vst.msk [vmem:[#allocation4 + $0x10] sm:$0xff] %vm432, %v2139
          %2172 = vst.msk [vmem:[#allocation4 + $0x18] sm:$0xff] %vm432, %v2140
          %2173 = vst.msk [vmem:[#allocation4 + $0x20] sm:$0xff] %vm432, %v2141
          %2174 = vst.msk [vmem:[#allocation4 + $0x28] sm:$0xff] %vm432, %v2142
          %2175 = vst.msk [vmem:[#allocation4 + $0x30] sm:$0xff] %vm432, %v2143
          %2176 = vst.msk [vmem:[#allocation4 + $0x38] sm:$0xff] %vm432, %v2144
          %2177 = vst.msk [vmem:[#allocation4 + $0x40] sm:$0xff] %vm432, %v2145
          %2178 = vst.msk [vmem:[#allocation4 + $0x48] sm:$0xff] %vm432, %v2146
          %2179 = vst.msk [vmem:[#allocation4 + $0x50] sm:$0xff] %vm432, %v2147
          %2180 = vst.msk [vmem:[#allocation4 + $0x58] sm:$0xff] %vm432, %v2148
          %2181 = vst.msk [vmem:[#allocation4 + $0x60] sm:$0xff] %vm432, %v2149
          %2182 = vst.msk [vmem:[#allocation4 + $0x68] sm:$0xff] %vm432, %v2150
          %2183 = vst.msk [vmem:[#allocation4 + $0x70] sm:$0xff] %vm432, %v2151
          %2184 = vst.msk [vmem:[#allocation4 + $0x78] sm:$0xff] %vm432, %v2152
          %2185 = vst.msk [vmem:[#allocation4 + $0x80] sm:$0xff] %vm432, %v2153
          %2186 = vst.msk [vmem:[#allocation4 + $0x88] sm:$0xff] %vm432, %v2154
          %2187 = vst.msk [vmem:[#allocation4 + $0x90] sm:$0xff] %vm432, %v2155
          %2188 = vst.msk [vmem:[#allocation4 + $0x98] sm:$0xff] %vm432, %v2156
          %2189 = vst.msk [vmem:[#allocation4 + $0xa0] sm:$0xff] %vm432, %v2157
          %2190 = vst.msk [vmem:[#allocation4 + $0xa8] sm:$0xff] %vm432, %v2158
          %2191 = vst.msk [vmem:[#allocation4 + $0xb0] sm:$0xff] %vm432, %v2159
          %2192 = vst.msk [vmem:[#allocation4 + $0xb8] sm:$0xff] %vm432, %v2160
          %2193 = vst.msk [vmem:[#allocation4 + $0xc0] sm:$0xff] %vm432, %v2161
          %2194 = vst.msk [vmem:[#allocation4 + $0xc8] sm:$0xff] %vm432, %v2162
          %2195 = vst.msk [vmem:[#allocation4 + $0xd0] sm:$0xff] %vm432, %v2163
          %2196 = vst.msk [vmem:[#allocation4 + $0xd8] sm:$0xff] %vm432, %v2164
          %2197 = vst.msk [vmem:[#allocation4 + $0xe0] sm:$0xff] %vm432, %v2165
          %2198 = vst.msk [vmem:[#allocation4 + $0xe8] sm:$0xff] %vm432, %v2166
          %2199 = vst.msk [vmem:[#allocation4 + $0xf0] sm:$0xff] %vm432, %v2167
          %2200 = vst.msk [vmem:[#allocation4 + $0xf8] sm:$0xff] %vm432, %v2168
          %2201 = vst.msk [vmem:[#allocation2] sm:$0xff] %vm367, %v983
          %2202 = vst.msk [vmem:[#allocation2 + $0x8] sm:$0xff] %vm367, %v984
          %2203 = vst.msk [vmem:[#allocation2 + $0x10] sm:$0xff] %vm367, %v985
          %2204 = vst.msk [vmem:[#allocation2 + $0x18] sm:$0xff] %vm367, %v986
          %2205 = vst.msk [vmem:[#allocation2 + $0x20] sm:$0xff] %vm367, %v987
          %2206 = vst.msk [vmem:[#allocation2 + $0x28] sm:$0xff] %vm367, %v988
          %2207 = vst.msk [vmem:[#allocation2 + $0x30] sm:$0xff] %vm367, %v989
          %2208 = vst.msk [vmem:[#allocation2 + $0x38] sm:$0xff] %vm367, %v990
          %2209 = vst.msk [vmem:[#allocation2 + $0x40] sm:$0xff] %vm367, %v991
          %2210 = vst.msk [vmem:[#allocation2 + $0x48] sm:$0xff] %vm367, %v992
          %2211 = vst.msk [vmem:[#allocation2 + $0x50] sm:$0xff] %vm367, %v993
          %2212 = vst.msk [vmem:[#allocation2 + $0x58] sm:$0xff] %vm367, %v994
          %2213 = vst.msk [vmem:[#allocation2 + $0x60] sm:$0xff] %vm367, %v995
          %2214 = vst.msk [vmem:[#allocation2 + $0x68] sm:$0xff] %vm367, %v996
          %2215 = vst.msk [vmem:[#allocation2 + $0x70] sm:$0xff] %vm367, %v997
          %2216 = vst.msk [vmem:[#allocation2 + $0x78] sm:$0xff] %vm367, %v998
          %2217 = vst.msk [vmem:[#allocation2 + $0x80] sm:$0xff] %vm367, %v999
          %2218 = vst.msk [vmem:[#allocation2 + $0x88] sm:$0xff] %vm367, %v1000
          %2219 = vst.msk [vmem:[#allocation2 + $0x90] sm:$0xff] %vm367, %v1001
          %2220 = vst.msk [vmem:[#allocation2 + $0x98] sm:$0xff] %vm367, %v1002
          %2221 = vst.msk [vmem:[#allocation2 + $0xa0] sm:$0xff] %vm367, %v1003
          %2222 = vst.msk [vmem:[#allocation2 + $0xa8] sm:$0xff] %vm367, %v1004
          %2223 = vst.msk [vmem:[#allocation2 + $0xb0] sm:$0xff] %vm367, %v1005
          %2224 = vst.msk [vmem:[#allocation2 + $0xb8] sm:$0xff] %vm367, %v1006
          %2225 = vst.msk [vmem:[#allocation2 + $0xc0] sm:$0xff] %vm367, %v1007
          %2226 = vst.msk [vmem:[#allocation2 + $0xc8] sm:$0xff] %vm367, %v1008
          %2227 = vst.msk [vmem:[#allocation2 + $0xd0] sm:$0xff] %vm367, %v1009
          %2228 = vst.msk [vmem:[#allocation2 + $0xd8] sm:$0xff] %vm367, %v1010
          %2229 = vst.msk [vmem:[#allocation2 + $0xe0] sm:$0xff] %vm367, %v1011
          %2230 = vst.msk [vmem:[#allocation2 + $0xe8] sm:$0xff] %vm367, %v1012
          %2231 = vst.msk [vmem:[#allocation2 + $0xf0] sm:$0xff] %vm367, %v1013
          %2232 = vst.msk [vmem:[#allocation2 + $0xf8] sm:$0xff] %vm367, %v1014
        $region77: #{tpu_custom_call.1} parent=68 // pred_fallthru
          _
        %v2233 = vlaneseq
        %v2234 = vshrl.u32 %v2233, 7
        %v2235 = vadd.s32 %v2234, 8
        %v2236 = vadd.s32 %v2234, 16
        %v2237 = vadd.s32 %v2234, 24
        %v2238 = vadd.s32 %v2234, 32
        %v2239 = vadd.s32 %v2234, 40
        %v2240 = vadd.s32 %v2234, 48
        %v2241 = vadd.s32 %v2234, 56
        %v2242 = vadd.s32 %v2234, 64
        %v2243 = vadd.s32 %v2234, 72
        %v2244 = vadd.s32 %v2234, 80
        %v2245 = vadd.s32 %v2234, 88
        %v2246 = vadd.s32 %v2234, 96
        %v2247 = vadd.s32 %v2234, 104
        %v2248 = vadd.s32 %v2234, 112
        %v2249 = vadd.s32 %v2234, 120
        %v2250 = vlaneseq
        %v2251 = vand.u32 %v2250, 127
        %s2252 = smul.u32 %s14, 128
        %s2253 = sshra.s32 %s2252, 3
        %s2254 = sand.u32 %s2252, 7
        %s2255 = smul.addr %s2253, 4
        %s2256 = scalar_lea.vmem %s1, %s2255
        %v2257 = vld [vmem:[%s2256] sm:$0xf]
        %v2258 = vld [vmem:[%s2256 + $0x4] sm:$0xf]
        %v2259 = vld [vmem:[%s2256 + $0x8] sm:$0xf]
        %v2260 = vld [vmem:[%s2256 + $0xc] sm:$0xf]
        %v2261 = vld [vmem:[%s2256 + $0x10] sm:$0xf]
        %v2262 = vld [vmem:[%s2256 + $0x14] sm:$0xf]
        %v2263 = vld [vmem:[%s2256 + $0x18] sm:$0xf]
        %v2264 = vld [vmem:[%s2256 + $0x1c] sm:$0xf]
        %v2265 = vld [vmem:[%s2256 + $0x20] sm:$0xf]
        %v2266 = vld [vmem:[%s2256 + $0x24] sm:$0xf]
        %v2267 = vld [vmem:[%s2256 + $0x28] sm:$0xf]
        %v2268 = vld [vmem:[%s2256 + $0x2c] sm:$0xf]
        %v2269 = vld [vmem:[%s2256 + $0x30] sm:$0xf]
        %v2270 = vld [vmem:[%s2256 + $0x34] sm:$0xf]
        %v2271 = vld [vmem:[%s2256 + $0x38] sm:$0xf]
        %v2272 = vld [vmem:[%s2256 + $0x3c] sm:$0xf]
        %v2273 = vld [vmem:[%s2256 + $0x80] sm:$0xf]
        %v2274 = vld [vmem:[%s2256 + $0x84] sm:$0xf]
        %v2275 = vld [vmem:[%s2256 + $0x88] sm:$0xf]
        %v2276 = vld [vmem:[%s2256 + $0x8c] sm:$0xf]
        %v2277 = vld [vmem:[%s2256 + $0x90] sm:$0xf]
        %v2278 = vld [vmem:[%s2256 + $0x94] sm:$0xf]
        %v2279 = vld [vmem:[%s2256 + $0x98] sm:$0xf]
        %v2280 = vld [vmem:[%s2256 + $0x9c] sm:$0xf]
        %v2281 = vld [vmem:[%s2256 + $0xa0] sm:$0xf]
        %v2282 = vld [vmem:[%s2256 + $0xa4] sm:$0xf]
        %v2283 = vld [vmem:[%s2256 + $0xa8] sm:$0xf]
        %v2284 = vld [vmem:[%s2256 + $0xac] sm:$0xf]
        %v2285 = vld [vmem:[%s2256 + $0xb0] sm:$0xf]
        %v2286 = vld [vmem:[%s2256 + $0xb4] sm:$0xf]
        %v2287 = vld [vmem:[%s2256 + $0xb8] sm:$0xf]
        %v2288 = vld [vmem:[%s2256 + $0xbc] sm:$0xf]
        %s2289 = smul.addr %s2253, 4
        %s2290 = scalar_lea.vmem %s2, %s2289
        %v2291 = vld [vmem:[%s2290] sm:$0xf]
        %v2292 = vld [vmem:[%s2290 + $0x4] sm:$0xf]
        %v2293 = vld [vmem:[%s2290 + $0x8] sm:$0xf]
        %v2294 = vld [vmem:[%s2290 + $0xc] sm:$0xf]
        %v2295 = vld [vmem:[%s2290 + $0x10] sm:$0xf]
        %v2296 = vld [vmem:[%s2290 + $0x14] sm:$0xf]
        %v2297 = vld [vmem:[%s2290 + $0x18] sm:$0xf]
        %v2298 = vld [vmem:[%s2290 + $0x1c] sm:$0xf]
        %v2299 = vld [vmem:[%s2290 + $0x20] sm:$0xf]
        %v2300 = vld [vmem:[%s2290 + $0x24] sm:$0xf]
        %v2301 = vld [vmem:[%s2290 + $0x28] sm:$0xf]
        %v2302 = vld [vmem:[%s2290 + $0x2c] sm:$0xf]
        %v2303 = vld [vmem:[%s2290 + $0x30] sm:$0xf]
        %v2304 = vld [vmem:[%s2290 + $0x34] sm:$0xf]
        %v2305 = vld [vmem:[%s2290 + $0x38] sm:$0xf]
        %v2306 = vld [vmem:[%s2290 + $0x3c] sm:$0xf]
        %v2307 = vld [vmem:[%s2290 + $0x80] sm:$0xf]
        %v2308 = vld [vmem:[%s2290 + $0x84] sm:$0xf]
        %v2309 = vld [vmem:[%s2290 + $0x88] sm:$0xf]
        %v2310 = vld [vmem:[%s2290 + $0x8c] sm:$0xf]
        %v2311 = vld [vmem:[%s2290 + $0x90] sm:$0xf]
        %v2312 = vld [vmem:[%s2290 + $0x94] sm:$0xf]
        %v2313 = vld [vmem:[%s2290 + $0x98] sm:$0xf]
        %v2314 = vld [vmem:[%s2290 + $0x9c] sm:$0xf]
        %v2315 = vld [vmem:[%s2290 + $0xa0] sm:$0xf]
        %v2316 = vld [vmem:[%s2290 + $0xa4] sm:$0xf]
        %v2317 = vld [vmem:[%s2290 + $0xa8] sm:$0xf]
        %v2318 = vld [vmem:[%s2290 + $0xac] sm:$0xf]
        %v2319 = vld [vmem:[%s2290 + $0xb0] sm:$0xf]
        %v2320 = vld [vmem:[%s2290 + $0xb4] sm:$0xf]
        %v2321 = vld [vmem:[%s2290 + $0xb8] sm:$0xf]
        %v2322 = vld [vmem:[%s2290 + $0xbc] sm:$0xf]
        %vm2323 = vcmp.le.s32.totalorder %v2251, %v2234
        %vm2324 = vcmp.le.s32.totalorder %v2251, %v2235
        %vm2325 = vcmp.le.s32.totalorder %v2251, %v2236
        %vm2326 = vcmp.le.s32.totalorder %v2251, %v2237
        %vm2327 = vcmp.le.s32.totalorder %v2251, %v2238
        %vm2328 = vcmp.le.s32.totalorder %v2251, %v2239
        %vm2329 = vcmp.le.s32.totalorder %v2251, %v2240
        %vm2330 = vcmp.le.s32.totalorder %v2251, %v2241
        %vm2331 = vcmp.le.s32.totalorder %v2251, %v2242
        %vm2332 = vcmp.le.s32.totalorder %v2251, %v2243
        %vm2333 = vcmp.le.s32.totalorder %v2251, %v2244
        %vm2334 = vcmp.le.s32.totalorder %v2251, %v2245
        %vm2335 = vcmp.le.s32.totalorder %v2251, %v2246
        %vm2336 = vcmp.le.s32.totalorder %v2251, %v2247
        %vm2337 = vcmp.le.s32.totalorder %v2251, %v2248
        %vm2338 = vcmp.le.s32.totalorder %v2251, %v2249
        %v2355 = vunpack.c.l.b16 %v335
        %v2356 = vunpack.c.l.b16 %v336
        %v2357 = vunpack.c.l.b16 %v337
        %v2358 = vunpack.c.l.b16 %v338
        %v2359 = vunpack.c.l.b16 %v339
        %v2360 = vunpack.c.l.b16 %v340
        %v2361 = vunpack.c.l.b16 %v341
        %v2362 = vunpack.c.l.b16 %v342
        %v2363 = vunpack.c.l.b16 %v343
        %v2364 = vunpack.c.l.b16 %v344
        %v2365 = vunpack.c.l.b16 %v345
        %v2366 = vunpack.c.l.b16 %v346
        %v2367 = vunpack.c.l.b16 %v347
        %v2368 = vunpack.c.l.b16 %v348
        %v2369 = vunpack.c.l.b16 %v349
        %v2370 = vunpack.c.l.b16 %v350
        %v2371 = vpack.c.b16 %v2356, %v2355
        %v2372 = vpack.c.b16 %v2358, %v2357
        %v2373 = vpack.c.b16 %v2360, %v2359
        %v2374 = vpack.c.b16 %v2362, %v2361
        %v2375 = vpack.c.b16 %v2364, %v2363
        %v2376 = vpack.c.b16 %v2366, %v2365
        %v2377 = vpack.c.b16 %v2368, %v2367
        %v2378 = vpack.c.b16 %v2370, %v2369
        %v2395 = vunpack.c.l.b16 %v2257
        %v2396 = vunpack.c.l.b16 %v2258
        %v2397 = vunpack.c.l.b16 %v2259
        %v2398 = vunpack.c.l.b16 %v2260
        %v2399 = vunpack.c.l.b16 %v2261
        %v2400 = vunpack.c.l.b16 %v2262
        %v2401 = vunpack.c.l.b16 %v2263
        %v2402 = vunpack.c.l.b16 %v2264
        %v2403 = vunpack.c.l.b16 %v2265
        %v2404 = vunpack.c.l.b16 %v2266
        %v2405 = vunpack.c.l.b16 %v2267
        %v2406 = vunpack.c.l.b16 %v2268
        %v2407 = vunpack.c.l.b16 %v2269
        %v2408 = vunpack.c.l.b16 %v2270
        %v2409 = vunpack.c.l.b16 %v2271
        %v2410 = vunpack.c.l.b16 %v2272
        %v2411 = vpack.c.b16 %v2396, %v2395
        %v2412 = vpack.c.b16 %v2398, %v2397
        %v2413 = vpack.c.b16 %v2400, %v2399
        %v2414 = vpack.c.b16 %v2402, %v2401
        %v2415 = vpack.c.b16 %v2404, %v2403
        %v2416 = vpack.c.b16 %v2406, %v2405
        %v2417 = vpack.c.b16 %v2408, %v2407
        %v2418 = vpack.c.b16 %v2410, %v2409
        %v2420 = vsel %vm432, %v2371, 0
        %v2423 = vsel %vm432, %v2372, 0
        %v2426 = vsel %vm432, %v2373, 0
        %v2429 = vsel %vm432, %v2374, 0
        %v2432 = vsel %vm432, %v2375, 0
        %v2435 = vsel %vm432, %v2376, 0
        %v2438 = vsel %vm432, %v2377, 0
        %v2441 = vsel %vm432, %v2378, 0
        %v2444 = vsel %vm432, %v2411, 0
        %v2447 = vsel %vm432, %v2412, 0
        %v2450 = vsel %vm432, %v2413, 0
        %v2453 = vsel %vm432, %v2414, 0
        %v2456 = vsel %vm432, %v2415, 0
        %v2459 = vsel %vm432, %v2416, 0
        %v2462 = vsel %vm432, %v2417, 0
        %v2465 = vsel %vm432, %v2418, 0
        %2467 = vmatpush.bf16.xpose.msra.mxu0 %v2465
        %2468 = vmatpush.bf16.xpose.msra.mxu0 %v2462
        %2469 = vmatpush.bf16.xpose.msra.mxu0 %v2459
        %2470 = vmatpush.bf16.xpose.msra.mxu0 %v2456
        %2471 = vmatpush.bf16.xpose.msra.mxu0 %v2453
        %2472 = vmatpush.bf16.xpose.msra.mxu0 %v2450
        %2473 = vmatpush.bf16.xpose.msra.mxu0 %v2447
        %2474 = vmatpush.bf16.xpose.msra.mxu0 %v2444
        %2475 = vmatmul.bf16.gmra.mxu0 %v2420
        %v2476 = vpop.f32.mrf.mxu0
        %v2477 = vadd.f32 0.0, %v2476
        %v2478 = vpop.f32.mrf.mxu0
        %v2479 = vadd.f32 0.0, %v2478
        %2480 = vmatmul.bf16.gmra.mxu0 %v2423
        %v2481 = vpop.f32.mrf.mxu0
        %v2482 = vadd.f32 0.0, %v2481
        %v2483 = vpop.f32.mrf.mxu0
        %v2484 = vadd.f32 0.0, %v2483
        %2485 = vmatmul.bf16.gmra.mxu0 %v2426
        %v2486 = vpop.f32.mrf.mxu0
        %v2487 = vadd.f32 0.0, %v2486
        %v2488 = vpop.f32.mrf.mxu0
        %v2489 = vadd.f32 0.0, %v2488
        %2490 = vmatmul.bf16.gmra.mxu0 %v2429
        %v2491 = vpop.f32.mrf.mxu0
        %v2492 = vadd.f32 0.0, %v2491
        %v2493 = vpop.f32.mrf.mxu0
        %v2494 = vadd.f32 0.0, %v2493
        %2495 = vmatmul.bf16.gmra.mxu0 %v2432
        %v2496 = vpop.f32.mrf.mxu0
        %v2497 = vadd.f32 0.0, %v2496
        %v2498 = vpop.f32.mrf.mxu0
        %v2499 = vadd.f32 0.0, %v2498
        %2500 = vmatmul.bf16.gmra.mxu0 %v2435
        %v2501 = vpop.f32.mrf.mxu0
        %v2502 = vadd.f32 0.0, %v2501
        %v2503 = vpop.f32.mrf.mxu0
        %v2504 = vadd.f32 0.0, %v2503
        %2505 = vmatmul.bf16.gmra.mxu0 %v2438
        %v2506 = vpop.f32.mrf.mxu0
        %v2507 = vadd.f32 0.0, %v2506
        %v2508 = vpop.f32.mrf.mxu0
        %v2509 = vadd.f32 0.0, %v2508
        %2510 = vmatmul.bf16.gmra.mxu0 %v2441
        %v2511 = vpop.f32.mrf.mxu0
        %v2512 = vadd.f32 0.0, %v2511
        %v2513 = vpop.f32.mrf.mxu0
        %v2514 = vadd.f32 0.0, %v2513
        %2515 = vdwg.mxu0
        %v2532 = vunpack.c.l.b16 %v351
        %v2533 = vunpack.c.l.b16 %v352
        %v2534 = vunpack.c.l.b16 %v353
        %v2535 = vunpack.c.l.b16 %v354
        %v2536 = vunpack.c.l.b16 %v355
        %v2537 = vunpack.c.l.b16 %v356
        %v2538 = vunpack.c.l.b16 %v357
        %v2539 = vunpack.c.l.b16 %v358
        %v2540 = vunpack.c.l.b16 %v359
        %v2541 = vunpack.c.l.b16 %v360
        %v2542 = vunpack.c.l.b16 %v361
        %v2543 = vunpack.c.l.b16 %v362
        %v2544 = vunpack.c.l.b16 %v363
        %v2545 = vunpack.c.l.b16 %v364
        %v2546 = vunpack.c.l.b16 %v365
        %v2547 = vunpack.c.l.b16 %v366
        %v2548 = vpack.c.b16 %v2533, %v2532
        %v2549 = vpack.c.b16 %v2535, %v2534
        %v2550 = vpack.c.b16 %v2537, %v2536
        %v2551 = vpack.c.b16 %v2539, %v2538
        %v2552 = vpack.c.b16 %v2541, %v2540
        %v2553 = vpack.c.b16 %v2543, %v2542
        %v2554 = vpack.c.b16 %v2545, %v2544
        %v2555 = vpack.c.b16 %v2547, %v2546
        %v2572 = vunpack.c.l.b16 %v2273
        %v2573 = vunpack.c.l.b16 %v2274
        %v2574 = vunpack.c.l.b16 %v2275
        %v2575 = vunpack.c.l.b16 %v2276
        %v2576 = vunpack.c.l.b16 %v2277
        %v2577 = vunpack.c.l.b16 %v2278
        %v2578 = vunpack.c.l.b16 %v2279
        %v2579 = vunpack.c.l.b16 %v2280
        %v2580 = vunpack.c.l.b16 %v2281
        %v2581 = vunpack.c.l.b16 %v2282
        %v2582 = vunpack.c.l.b16 %v2283
        %v2583 = vunpack.c.l.b16 %v2284
        %v2584 = vunpack.c.l.b16 %v2285
        %v2585 = vunpack.c.l.b16 %v2286
        %v2586 = vunpack.c.l.b16 %v2287
        %v2587 = vunpack.c.l.b16 %v2288
        %v2588 = vpack.c.b16 %v2573, %v2572
        %v2589 = vpack.c.b16 %v2575, %v2574
        %v2590 = vpack.c.b16 %v2577, %v2576
        %v2591 = vpack.c.b16 %v2579, %v2578
        %v2592 = vpack.c.b16 %v2581, %v2580
        %v2593 = vpack.c.b16 %v2583, %v2582
        %v2594 = vpack.c.b16 %v2585, %v2584
        %v2595 = vpack.c.b16 %v2587, %v2586
        %v2597 = vsel %vm432, %v2548, 0
        %v2600 = vsel %vm432, %v2549, 0
        %v2603 = vsel %vm432, %v2550, 0
        %v2606 = vsel %vm432, %v2551, 0
        %v2609 = vsel %vm432, %v2552, 0
        %v2612 = vsel %vm432, %v2553, 0
        %v2615 = vsel %vm432, %v2554, 0
        %v2618 = vsel %vm432, %v2555, 0
        %v2621 = vsel %vm432, %v2588, 0
        %v2624 = vsel %vm432, %v2589, 0
        %v2627 = vsel %vm432, %v2590, 0
        %v2630 = vsel %vm432, %v2591, 0
        %v2633 = vsel %vm432, %v2592, 0
        %v2636 = vsel %vm432, %v2593, 0
        %v2639 = vsel %vm432, %v2594, 0
        %v2642 = vsel %vm432, %v2595, 0
        %2644 = vmatpush.bf16.xpose.msra.mxu0 %v2642
        %2645 = vmatpush.bf16.xpose.msra.mxu0 %v2639
        %2646 = vmatpush.bf16.xpose.msra.mxu0 %v2636
        %2647 = vmatpush.bf16.xpose.msra.mxu0 %v2633
        %2648 = vmatpush.bf16.xpose.msra.mxu0 %v2630
        %2649 = vmatpush.bf16.xpose.msra.mxu0 %v2627
        %2650 = vmatpush.bf16.xpose.msra.mxu0 %v2624
        %2651 = vmatpush.bf16.xpose.msra.mxu0 %v2621
        %2652 = vmatmul.bf16.gmra.mxu0 %v2597
        %v2653 = vpop.f32.mrf.mxu0
        %v2654 = vadd.f32 0.0, %v2653
        %v2655 = vpop.f32.mrf.mxu0
        %v2656 = vadd.f32 0.0, %v2655
        %2657 = vmatmul.bf16.gmra.mxu0 %v2600
        %v2658 = vpop.f32.mrf.mxu0
        %v2659 = vadd.f32 0.0, %v2658
        %v2660 = vpop.f32.mrf.mxu0
        %v2661 = vadd.f32 0.0, %v2660
        %2662 = vmatmul.bf16.gmra.mxu0 %v2603
        %v2663 = vpop.f32.mrf.mxu0
        %v2664 = vadd.f32 0.0, %v2663
        %v2665 = vpop.f32.mrf.mxu0
        %v2666 = vadd.f32 0.0, %v2665
        %2667 = vmatmul.bf16.gmra.mxu0 %v2606
        %v2668 = vpop.f32.mrf.mxu0
        %v2669 = vadd.f32 0.0, %v2668
        %v2670 = vpop.f32.mrf.mxu0
        %v2671 = vadd.f32 0.0, %v2670
        %2672 = vmatmul.bf16.gmra.mxu0 %v2609
        %v2673 = vpop.f32.mrf.mxu0
        %v2674 = vadd.f32 0.0, %v2673
        %v2675 = vpop.f32.mrf.mxu0
        %v2676 = vadd.f32 0.0, %v2675
        %2677 = vmatmul.bf16.gmra.mxu0 %v2612
        %v2678 = vpop.f32.mrf.mxu0
        %v2679 = vadd.f32 0.0, %v2678
        %v2680 = vpop.f32.mrf.mxu0
        %v2681 = vadd.f32 0.0, %v2680
        %2682 = vmatmul.bf16.gmra.mxu0 %v2615
        %v2683 = vpop.f32.mrf.mxu0
        %v2684 = vadd.f32 0.0, %v2683
        %v2685 = vpop.f32.mrf.mxu0
        %v2686 = vadd.f32 0.0, %v2685
        %2687 = vmatmul.bf16.gmra.mxu0 %v2618
        %v2688 = vpop.f32.mrf.mxu0
        %v2689 = vadd.f32 0.0, %v2688
        %v2690 = vpop.f32.mrf.mxu0
        %v2691 = vadd.f32 0.0, %v2690
        %2692 = vdwg.mxu0
        %v2693 = vsel %vm2323, 1, 0
        %v2694 = vsel %vm2324, 1, 0
        %v2695 = vsel %vm2325, 1, 0
        %v2696 = vsel %vm2326, 1, 0
        %v2697 = vsel %vm2327, 1, 0
        %v2698 = vsel %vm2328, 1, 0
        %v2699 = vsel %vm2329, 1, 0
        %v2700 = vsel %vm2330, 1, 0
        %v2701 = vsel %vm2331, 1, 0
        %v2702 = vsel %vm2332, 1, 0
        %v2703 = vsel %vm2333, 1, 0
        %v2704 = vsel %vm2334, 1, 0
        %v2705 = vsel %vm2335, 1, 0
        %v2706 = vsel %vm2336, 1, 0
        %v2707 = vsel %vm2337, 1, 0
        %v2708 = vsel %vm2338, 1, 0
        %vm2709 = vcmp.eq.s32.totalorder %v2693, 1
        %vm2710 = vcmp.eq.s32.totalorder %v2694, 1
        %vm2711 = vcmp.eq.s32.totalorder %v2695, 1
        %vm2712 = vcmp.eq.s32.totalorder %v2696, 1
        %vm2713 = vcmp.eq.s32.totalorder %v2697, 1
        %vm2714 = vcmp.eq.s32.totalorder %v2698, 1
        %vm2715 = vcmp.eq.s32.totalorder %v2699, 1
        %vm2716 = vcmp.eq.s32.totalorder %v2700, 1
        %vm2717 = vcmp.eq.s32.totalorder %v2701, 1
        %vm2718 = vcmp.eq.s32.totalorder %v2702, 1
        %vm2719 = vcmp.eq.s32.totalorder %v2703, 1
        %vm2720 = vcmp.eq.s32.totalorder %v2704, 1
        %vm2721 = vcmp.eq.s32.totalorder %v2705, 1
        %vm2722 = vcmp.eq.s32.totalorder %v2706, 1
        %vm2723 = vcmp.eq.s32.totalorder %v2707, 1
        %vm2724 = vcmp.eq.s32.totalorder %v2708, 1
        %v2725 = vsel %vm2709, %v2477, -inf
        %v2726 = vsel %vm2710, %v2479, -inf
        %v2727 = vsel %vm2711, %v2482, -inf
        %v2728 = vsel %vm2712, %v2484, -inf
        %v2729 = vsel %vm2713, %v2487, -inf
        %v2730 = vsel %vm2714, %v2489, -inf
        %v2731 = vsel %vm2715, %v2492, -inf
        %v2732 = vsel %vm2716, %v2494, -inf
        %v2733 = vsel %vm2717, %v2497, -inf
        %v2734 = vsel %vm2718, %v2499, -inf
        %v2735 = vsel %vm2719, %v2502, -inf
        %v2736 = vsel %vm2720, %v2504, -inf
        %v2737 = vsel %vm2721, %v2507, -inf
        %v2738 = vsel %vm2722, %v2509, -inf
        %v2739 = vsel %vm2723, %v2512, -inf
        %v2740 = vsel %vm2724, %v2514, -inf
        %v2741 = vsel %vm2709, %v2654, -inf
        %v2742 = vsel %vm2710, %v2656, -inf
        %v2743 = vsel %vm2711, %v2659, -inf
        %v2744 = vsel %vm2712, %v2661, -inf
        %v2745 = vsel %vm2713, %v2664, -inf
        %v2746 = vsel %vm2714, %v2666, -inf
        %v2747 = vsel %vm2715, %v2669, -inf
        %v2748 = vsel %vm2716, %v2671, -inf
        %v2749 = vsel %vm2717, %v2674, -inf
        %v2750 = vsel %vm2718, %v2676, -inf
        %v2751 = vsel %vm2719, %v2679, -inf
        %v2752 = vsel %vm2720, %v2681, -inf
        %v2753 = vsel %vm2721, %v2684, -inf
        %v2754 = vsel %vm2722, %v2686, -inf
        %v2755 = vsel %vm2723, %v2689, -inf
        %v2756 = vsel %vm2724, %v2691, -inf
        %v2757 = vld [vmem:[#allocation2] sm:$0xff]
        %v2758 = vld [vmem:[#allocation2 + $0x8] sm:$0xff]
        %v2759 = vld [vmem:[#allocation2 + $0x10] sm:$0xff]
        %v2760 = vld [vmem:[#allocation2 + $0x18] sm:$0xff]
        %v2761 = vld [vmem:[#allocation2 + $0x20] sm:$0xff]
        %v2762 = vld [vmem:[#allocation2 + $0x28] sm:$0xff]
        %v2763 = vld [vmem:[#allocation2 + $0x30] sm:$0xff]
        %v2764 = vld [vmem:[#allocation2 + $0x38] sm:$0xff]
        %v2765 = vld [vmem:[#allocation2 + $0x40] sm:$0xff]
        %v2766 = vld [vmem:[#allocation2 + $0x48] sm:$0xff]
        %v2767 = vld [vmem:[#allocation2 + $0x50] sm:$0xff]
        %v2768 = vld [vmem:[#allocation2 + $0x58] sm:$0xff]
        %v2769 = vld [vmem:[#allocation2 + $0x60] sm:$0xff]
        %v2770 = vld [vmem:[#allocation2 + $0x68] sm:$0xff]
        %v2771 = vld [vmem:[#allocation2 + $0x70] sm:$0xff]
        %v2772 = vld [vmem:[#allocation2 + $0x78] sm:$0xff]
        %v2773 = vld [vmem:[#allocation2 + $0x80] sm:$0xff]
        %v2774 = vld [vmem:[#allocation2 + $0x88] sm:$0xff]
        %v2775 = vld [vmem:[#allocation2 + $0x90] sm:$0xff]
        %v2776 = vld [vmem:[#allocation2 + $0x98] sm:$0xff]
        %v2777 = vld [vmem:[#allocation2 + $0xa0] sm:$0xff]
        %v2778 = vld [vmem:[#allocation2 + $0xa8] sm:$0xff]
        %v2779 = vld [vmem:[#allocation2 + $0xb0] sm:$0xff]
        %v2780 = vld [vmem:[#allocation2 + $0xb8] sm:$0xff]
        %v2781 = vld [vmem:[#allocation2 + $0xc0] sm:$0xff]
        %v2782 = vld [vmem:[#allocation2 + $0xc8] sm:$0xff]
        %v2783 = vld [vmem:[#allocation2 + $0xd0] sm:$0xff]
        %v2784 = vld [vmem:[#allocation2 + $0xd8] sm:$0xff]
        %v2785 = vld [vmem:[#allocation2 + $0xe0] sm:$0xff]
        %v2786 = vld [vmem:[#allocation2 + $0xe8] sm:$0xff]
        %v2787 = vld [vmem:[#allocation2 + $0xf0] sm:$0xff]
        %v2788 = vld [vmem:[#allocation2 + $0xf8] sm:$0xff]
        %2789 = vmax.xlane.f32.xlu0 %v2725
        %v2790 = vpop.xlane.xlu0 %2789
        %2791 = vmax.xlane.f32.xlu0 %v2726
        %v2792 = vpop.xlane.xlu0 %2791
        %2793 = vmax.xlane.f32.xlu0 %v2727
        %v2794 = vpop.xlane.xlu0 %2793
        %2795 = vmax.xlane.f32.xlu0 %v2728
        %v2796 = vpop.xlane.xlu0 %2795
        %2797 = vmax.xlane.f32.xlu0 %v2729
        %v2798 = vpop.xlane.xlu0 %2797
        %2799 = vmax.xlane.f32.xlu0 %v2730
        %v2800 = vpop.xlane.xlu0 %2799
        %2801 = vmax.xlane.f32.xlu0 %v2731
        %v2802 = vpop.xlane.xlu0 %2801
        %2803 = vmax.xlane.f32.xlu0 %v2732
        %v2804 = vpop.xlane.xlu0 %2803
        %2805 = vmax.xlane.f32.xlu0 %v2733
        %v2806 = vpop.xlane.xlu0 %2805
        %2807 = vmax.xlane.f32.xlu0 %v2734
        %v2808 = vpop.xlane.xlu0 %2807
        %2809 = vmax.xlane.f32.xlu0 %v2735
        %v2810 = vpop.xlane.xlu0 %2809
        %2811 = vmax.xlane.f32.xlu0 %v2736
        %v2812 = vpop.xlane.xlu0 %2811
        %2813 = vmax.xlane.f32.xlu0 %v2737
        %v2814 = vpop.xlane.xlu0 %2813
        %2815 = vmax.xlane.f32.xlu0 %v2738
        %v2816 = vpop.xlane.xlu0 %2815
        %2817 = vmax.xlane.f32.xlu0 %v2739
        %v2818 = vpop.xlane.xlu0 %2817
        %2819 = vmax.xlane.f32.xlu0 %v2740
        %v2820 = vpop.xlane.xlu0 %2819
        %2821 = vmax.xlane.f32.xlu0 %v2741
        %v2822 = vpop.xlane.xlu0 %2821
        %2823 = vmax.xlane.f32.xlu0 %v2742
        %v2824 = vpop.xlane.xlu0 %2823
        %2825 = vmax.xlane.f32.xlu0 %v2743
        %v2826 = vpop.xlane.xlu0 %2825
        %2827 = vmax.xlane.f32.xlu0 %v2744
        %v2828 = vpop.xlane.xlu0 %2827
        %2829 = vmax.xlane.f32.xlu0 %v2745
        %v2830 = vpop.xlane.xlu0 %2829
        %2831 = vmax.xlane.f32.xlu0 %v2746
        %v2832 = vpop.xlane.xlu0 %2831
        %2833 = vmax.xlane.f32.xlu0 %v2747
        %v2834 = vpop.xlane.xlu0 %2833
        %2835 = vmax.xlane.f32.xlu0 %v2748
        %v2836 = vpop.xlane.xlu0 %2835
        %2837 = vmax.xlane.f32.xlu0 %v2749
        %v2838 = vpop.xlane.xlu0 %2837
        %2839 = vmax.xlane.f32.xlu0 %v2750
        %v2840 = vpop.xlane.xlu0 %2839
        %2841 = vmax.xlane.f32.xlu0 %v2751
        %v2842 = vpop.xlane.xlu0 %2841
        %2843 = vmax.xlane.f32.xlu0 %v2752
        %v2844 = vpop.xlane.xlu0 %2843
        %2845 = vmax.xlane.f32.xlu0 %v2753
        %v2846 = vpop.xlane.xlu0 %2845
        %2847 = vmax.xlane.f32.xlu0 %v2754
        %v2848 = vpop.xlane.xlu0 %2847
        %2849 = vmax.xlane.f32.xlu0 %v2755
        %v2850 = vpop.xlane.xlu0 %2849
        %2851 = vmax.xlane.f32.xlu0 %v2756
        %v2852 = vpop.xlane.xlu0 %2851
        %v2853 = vmax.f32 %v2757, %v2790
        %v2854 = vmax.f32 %v2758, %v2792
        %v2855 = vmax.f32 %v2759, %v2794
        %v2856 = vmax.f32 %v2760, %v2796
        %v2857 = vmax.f32 %v2761, %v2798
        %v2858 = vmax.f32 %v2762, %v2800
        %v2859 = vmax.f32 %v2763, %v2802
        %v2860 = vmax.f32 %v2764, %v2804
        %v2861 = vmax.f32 %v2765, %v2806
        %v2862 = vmax.f32 %v2766, %v2808
        %v2863 = vmax.f32 %v2767, %v2810
        %v2864 = vmax.f32 %v2768, %v2812
        %v2865 = vmax.f32 %v2769, %v2814
        %v2866 = vmax.f32 %v2770, %v2816
        %v2867 = vmax.f32 %v2771, %v2818
        %v2868 = vmax.f32 %v2772, %v2820
        %v2869 = vmax.f32 %v2773, %v2822
        %v2870 = vmax.f32 %v2774, %v2824
        %v2871 = vmax.f32 %v2775, %v2826
        %v2872 = vmax.f32 %v2776, %v2828
        %v2873 = vmax.f32 %v2777, %v2830
        %v2874 = vmax.f32 %v2778, %v2832
        %v2875 = vmax.f32 %v2779, %v2834
        %v2876 = vmax.f32 %v2780, %v2836
        %v2877 = vmax.f32 %v2781, %v2838
        %v2878 = vmax.f32 %v2782, %v2840
        %v2879 = vmax.f32 %v2783, %v2842
        %v2880 = vmax.f32 %v2784, %v2844
        %v2881 = vmax.f32 %v2785, %v2846
        %v2882 = vmax.f32 %v2786, %v2848
        %v2883 = vmax.f32 %v2787, %v2850
        %v2884 = vmax.f32 %v2788, %v2852
        %v2885 = vsub.f32 %v2757, %v2853
        %v2886 = vsub.f32 %v2758, %v2854
        %v2887 = vsub.f32 %v2759, %v2855
        %v2888 = vsub.f32 %v2760, %v2856
        %v2889 = vsub.f32 %v2761, %v2857
        %v2890 = vsub.f32 %v2762, %v2858
        %v2891 = vsub.f32 %v2763, %v2859
        %v2892 = vsub.f32 %v2764, %v2860
        %v2893 = vsub.f32 %v2765, %v2861
        %v2894 = vsub.f32 %v2766, %v2862
        %v2895 = vsub.f32 %v2767, %v2863
        %v2896 = vsub.f32 %v2768, %v2864
        %v2897 = vsub.f32 %v2769, %v2865
        %v2898 = vsub.f32 %v2770, %v2866
        %v2899 = vsub.f32 %v2771, %v2867
        %v2900 = vsub.f32 %v2772, %v2868
        %v2901 = vsub.f32 %v2773, %v2869
        %v2902 = vsub.f32 %v2774, %v2870
        %v2903 = vsub.f32 %v2775, %v2871
        %v2904 = vsub.f32 %v2776, %v2872
        %v2905 = vsub.f32 %v2777, %v2873
        %v2906 = vsub.f32 %v2778, %v2874
        %v2907 = vsub.f32 %v2779, %v2875
        %v2908 = vsub.f32 %v2780, %v2876
        %v2909 = vsub.f32 %v2781, %v2877
        %v2910 = vsub.f32 %v2782, %v2878
        %v2911 = vsub.f32 %v2783, %v2879
        %v2912 = vsub.f32 %v2784, %v2880
        %v2913 = vsub.f32 %v2785, %v2881
        %v2914 = vsub.f32 %v2786, %v2882
        %v2915 = vsub.f32 %v2787, %v2883
        %v2916 = vsub.f32 %v2788, %v2884
        %v2917 = vpow.pop %v2885
        %v2918 = vpow.pop %v2886
        %v2919 = vpow.pop %v2887
        %v2920 = vpow.pop %v2888
        %v2921 = vpow.pop %v2889
        %v2922 = vpow.pop %v2890
        %v2923 = vpow.pop %v2891
        %v2924 = vpow.pop %v2892
        %v2925 = vpow.pop %v2893
        %v2926 = vpow.pop %v2894
        %v2927 = vpow.pop %v2895
        %v2928 = vpow.pop %v2896
        %v2929 = vpow.pop %v2897
        %v2930 = vpow.pop %v2898
        %v2931 = vpow.pop %v2899
        %v2932 = vpow.pop %v2900
        %v2933 = vpow.pop %v2901
        %v2934 = vpow.pop %v2902
        %v2935 = vpow.pop %v2903
        %v2936 = vpow.pop %v2904
        %v2937 = vpow.pop %v2905
        %v2938 = vpow.pop %v2906
        %v2939 = vpow.pop %v2907
        %v2940 = vpow.pop %v2908
        %v2941 = vpow.pop %v2909
        %v2942 = vpow.pop %v2910
        %v2943 = vpow.pop %v2911
        %v2944 = vpow.pop %v2912
        %v2945 = vpow.pop %v2913
        %v2946 = vpow.pop %v2914
        %v2947 = vpow.pop %v2915
        %v2948 = vpow.pop %v2916
        %2950 = vset.pattern.permute.xlu0 0
        %2951 = vperm.xlu0 %2950, %v2853
        %v2952 = vpop.permute.xlu0 %2951
        %2955 = vset.pattern.permute.xlu0 0
        %2956 = vperm.xlu0 %2955, %v2854
        %v2957 = vpop.permute.xlu0 %2956
        %2960 = vset.pattern.permute.xlu0 0
        %2961 = vperm.xlu0 %2960, %v2855
        %v2962 = vpop.permute.xlu0 %2961
        %2965 = vset.pattern.permute.xlu0 0
        %2966 = vperm.xlu0 %2965, %v2856
        %v2967 = vpop.permute.xlu0 %2966
        %2970 = vset.pattern.permute.xlu0 0
        %2971 = vperm.xlu0 %2970, %v2857
        %v2972 = vpop.permute.xlu0 %2971
        %2975 = vset.pattern.permute.xlu0 0
        %2976 = vperm.xlu0 %2975, %v2858
        %v2977 = vpop.permute.xlu0 %2976
        %2980 = vset.pattern.permute.xlu0 0
        %2981 = vperm.xlu0 %2980, %v2859
        %v2982 = vpop.permute.xlu0 %2981
        %2985 = vset.pattern.permute.xlu0 0
        %2986 = vperm.xlu0 %2985, %v2860
        %v2987 = vpop.permute.xlu0 %2986
        %2990 = vset.pattern.permute.xlu0 0
        %2991 = vperm.xlu0 %2990, %v2861
        %v2992 = vpop.permute.xlu0 %2991
        %2995 = vset.pattern.permute.xlu0 0
        %2996 = vperm.xlu0 %2995, %v2862
        %v2997 = vpop.permute.xlu0 %2996
        %3000 = vset.pattern.permute.xlu0 0
        %3001 = vperm.xlu0 %3000, %v2863
        %v3002 = vpop.permute.xlu0 %3001
        %3005 = vset.pattern.permute.xlu0 0
        %3006 = vperm.xlu0 %3005, %v2864
        %v3007 = vpop.permute.xlu0 %3006
        %3010 = vset.pattern.permute.xlu0 0
        %3011 = vperm.xlu0 %3010, %v2865
        %v3012 = vpop.permute.xlu0 %3011
        %3015 = vset.pattern.permute.xlu0 0
        %3016 = vperm.xlu0 %3015, %v2866
        %v3017 = vpop.permute.xlu0 %3016
        %3020 = vset.pattern.permute.xlu0 0
        %3021 = vperm.xlu0 %3020, %v2867
        %v3022 = vpop.permute.xlu0 %3021
        %3025 = vset.pattern.permute.xlu0 0
        %3026 = vperm.xlu0 %3025, %v2868
        %v3027 = vpop.permute.xlu0 %3026
        %3030 = vset.pattern.permute.xlu0 0
        %3031 = vperm.xlu0 %3030, %v2869
        %v3032 = vpop.permute.xlu0 %3031
        %3035 = vset.pattern.permute.xlu0 0
        %3036 = vperm.xlu0 %3035, %v2870
        %v3037 = vpop.permute.xlu0 %3036
        %3040 = vset.pattern.permute.xlu0 0
        %3041 = vperm.xlu0 %3040, %v2871
        %v3042 = vpop.permute.xlu0 %3041
        %3045 = vset.pattern.permute.xlu0 0
        %3046 = vperm.xlu0 %3045, %v2872
        %v3047 = vpop.permute.xlu0 %3046
        %3050 = vset.pattern.permute.xlu0 0
        %3051 = vperm.xlu0 %3050, %v2873
        %v3052 = vpop.permute.xlu0 %3051
        %3055 = vset.pattern.permute.xlu0 0
        %3056 = vperm.xlu0 %3055, %v2874
        %v3057 = vpop.permute.xlu0 %3056
        %3060 = vset.pattern.permute.xlu0 0
        %3061 = vperm.xlu0 %3060, %v2875
        %v3062 = vpop.permute.xlu0 %3061
        %3065 = vset.pattern.permute.xlu0 0
        %3066 = vperm.xlu0 %3065, %v2876
        %v3067 = vpop.permute.xlu0 %3066
        %3070 = vset.pattern.permute.xlu0 0
        %3071 = vperm.xlu0 %3070, %v2877
        %v3072 = vpop.permute.xlu0 %3071
        %3075 = vset.pattern.permute.xlu0 0
        %3076 = vperm.xlu0 %3075, %v2878
        %v3077 = vpop.permute.xlu0 %3076
        %3080 = vset.pattern.permute.xlu0 0
        %3081 = vperm.xlu0 %3080, %v2879
        %v3082 = vpop.permute.xlu0 %3081
        %3085 = vset.pattern.permute.xlu0 0
        %3086 = vperm.xlu0 %3085, %v2880
        %v3087 = vpop.permute.xlu0 %3086
        %3090 = vset.pattern.permute.xlu0 0
        %3091 = vperm.xlu0 %3090, %v2881
        %v3092 = vpop.permute.xlu0 %3091
        %3095 = vset.pattern.permute.xlu0 0
        %3096 = vperm.xlu0 %3095, %v2882
        %v3097 = vpop.permute.xlu0 %3096
        %3100 = vset.pattern.permute.xlu0 0
        %3101 = vperm.xlu0 %3100, %v2883
        %v3102 = vpop.permute.xlu0 %3101
        %3105 = vset.pattern.permute.xlu0 0
        %3106 = vperm.xlu0 %3105, %v2884
        %v3107 = vpop.permute.xlu0 %3106
        %v3109 = vsub.f32 %v2725, %v2952
        %v3110 = vsub.f32 %v2726, %v2957
        %v3111 = vsub.f32 %v2727, %v2962
        %v3112 = vsub.f32 %v2728, %v2967
        %v3113 = vsub.f32 %v2729, %v2972
        %v3114 = vsub.f32 %v2730, %v2977
        %v3115 = vsub.f32 %v2731, %v2982
        %v3116 = vsub.f32 %v2732, %v2987
        %v3117 = vsub.f32 %v2733, %v2992
        %v3118 = vsub.f32 %v2734, %v2997
        %v3119 = vsub.f32 %v2735, %v3002
        %v3120 = vsub.f32 %v2736, %v3007
        %v3121 = vsub.f32 %v2737, %v3012
        %v3122 = vsub.f32 %v2738, %v3017
        %v3123 = vsub.f32 %v2739, %v3022
        %v3124 = vsub.f32 %v2740, %v3027
        %v3125 = vsub.f32 %v2741, %v3032
        %v3126 = vsub.f32 %v2742, %v3037
        %v3127 = vsub.f32 %v2743, %v3042
        %v3128 = vsub.f32 %v2744, %v3047
        %v3129 = vsub.f32 %v2745, %v3052
        %v3130 = vsub.f32 %v2746, %v3057
        %v3131 = vsub.f32 %v2747, %v3062
        %v3132 = vsub.f32 %v2748, %v3067
        %v3133 = vsub.f32 %v2749, %v3072
        %v3134 = vsub.f32 %v2750, %v3077
        %v3135 = vsub.f32 %v2751, %v3082
        %v3136 = vsub.f32 %v2752, %v3087
        %v3137 = vsub.f32 %v2753, %v3092
        %v3138 = vsub.f32 %v2754, %v3097
        %v3139 = vsub.f32 %v2755, %v3102
        %v3140 = vsub.f32 %v2756, %v3107
        %v3141 = vpack.c.bf16 %v3109, %v3109
        %v3142 = vpack.c.bf16 %v3110, %v3110
        %v3143 = vpack.c.bf16 %v3111, %v3111
        %v3144 = vpack.c.bf16 %v3112, %v3112
        %v3145 = vpack.c.bf16 %v3113, %v3113
        %v3146 = vpack.c.bf16 %v3114, %v3114
        %v3147 = vpack.c.bf16 %v3115, %v3115
        %v3148 = vpack.c.bf16 %v3116, %v3116
        %v3149 = vpack.c.bf16 %v3117, %v3117
        %v3150 = vpack.c.bf16 %v3118, %v3118
        %v3151 = vpack.c.bf16 %v3119, %v3119
        %v3152 = vpack.c.bf16 %v3120, %v3120
        %v3153 = vpack.c.bf16 %v3121, %v3121
        %v3154 = vpack.c.bf16 %v3122, %v3122
        %v3155 = vpack.c.bf16 %v3123, %v3123
        %v3156 = vpack.c.bf16 %v3124, %v3124
        %v3157 = vpack.c.bf16 %v3125, %v3125
        %v3158 = vpack.c.bf16 %v3126, %v3126
        %v3159 = vpack.c.bf16 %v3127, %v3127
        %v3160 = vpack.c.bf16 %v3128, %v3128
        %v3161 = vpack.c.bf16 %v3129, %v3129
        %v3162 = vpack.c.bf16 %v3130, %v3130
        %v3163 = vpack.c.bf16 %v3131, %v3131
        %v3164 = vpack.c.bf16 %v3132, %v3132
        %v3165 = vpack.c.bf16 %v3133, %v3133
        %v3166 = vpack.c.bf16 %v3134, %v3134
        %v3167 = vpack.c.bf16 %v3135, %v3135
        %v3168 = vpack.c.bf16 %v3136, %v3136
        %v3169 = vpack.c.bf16 %v3137, %v3137
        %v3170 = vpack.c.bf16 %v3138, %v3138
        %v3171 = vpack.c.bf16 %v3139, %v3139
        %v3172 = vpack.c.bf16 %v3140, %v3140
        %v3173 = vunpack.c.l.bf16 %v3141
        %v3174 = vunpack.c.l.bf16 %v3142
        %v3175 = vunpack.c.l.bf16 %v3143
        %v3176 = vunpack.c.l.bf16 %v3144
        %v3177 = vunpack.c.l.bf16 %v3145
        %v3178 = vunpack.c.l.bf16 %v3146
        %v3179 = vunpack.c.l.bf16 %v3147
        %v3180 = vunpack.c.l.bf16 %v3148
        %v3181 = vunpack.c.l.bf16 %v3149
        %v3182 = vunpack.c.l.bf16 %v3150
        %v3183 = vunpack.c.l.bf16 %v3151
        %v3184 = vunpack.c.l.bf16 %v3152
        %v3185 = vunpack.c.l.bf16 %v3153
        %v3186 = vunpack.c.l.bf16 %v3154
        %v3187 = vunpack.c.l.bf16 %v3155
        %v3188 = vunpack.c.l.bf16 %v3156
        %v3189 = vunpack.c.l.bf16 %v3157
        %v3190 = vunpack.c.l.bf16 %v3158
        %v3191 = vunpack.c.l.bf16 %v3159
        %v3192 = vunpack.c.l.bf16 %v3160
        %v3193 = vunpack.c.l.bf16 %v3161
        %v3194 = vunpack.c.l.bf16 %v3162
        %v3195 = vunpack.c.l.bf16 %v3163
        %v3196 = vunpack.c.l.bf16 %v3164
        %v3197 = vunpack.c.l.bf16 %v3165
        %v3198 = vunpack.c.l.bf16 %v3166
        %v3199 = vunpack.c.l.bf16 %v3167
        %v3200 = vunpack.c.l.bf16 %v3168
        %v3201 = vunpack.c.l.bf16 %v3169
        %v3202 = vunpack.c.l.bf16 %v3170
        %v3203 = vunpack.c.l.bf16 %v3171
        %v3204 = vunpack.c.l.bf16 %v3172
        %v3205 = vpow.pop %v3173
        %v3206 = vpow.pop %v3174
        %v3207 = vpow.pop %v3175
        %v3208 = vpow.pop %v3176
        %v3209 = vpow.pop %v3177
        %v3210 = vpow.pop %v3178
        %v3211 = vpow.pop %v3179
        %v3212 = vpow.pop %v3180
        %v3213 = vpow.pop %v3181
        %v3214 = vpow.pop %v3182
        %v3215 = vpow.pop %v3183
        %v3216 = vpow.pop %v3184
        %v3217 = vpow.pop %v3185
        %v3218 = vpow.pop %v3186
        %v3219 = vpow.pop %v3187
        %v3220 = vpow.pop %v3188
        %v3221 = vpow.pop %v3189
        %v3222 = vpow.pop %v3190
        %v3223 = vpow.pop %v3191
        %v3224 = vpow.pop %v3192
        %v3225 = vpow.pop %v3193
        %v3226 = vpow.pop %v3194
        %v3227 = vpow.pop %v3195
        %v3228 = vpow.pop %v3196
        %v3229 = vpow.pop %v3197
        %v3230 = vpow.pop %v3198
        %v3231 = vpow.pop %v3199
        %v3232 = vpow.pop %v3200
        %v3233 = vpow.pop %v3201
        %v3234 = vpow.pop %v3202
        %v3235 = vpow.pop %v3203
        %v3236 = vpow.pop %v3204
        %v3237 = vpack.c.bf16 %v3205, %v3205
        %v3238 = vpack.c.bf16 %v3206, %v3206
        %v3239 = vpack.c.bf16 %v3207, %v3207
        %v3240 = vpack.c.bf16 %v3208, %v3208
        %v3241 = vpack.c.bf16 %v3209, %v3209
        %v3242 = vpack.c.bf16 %v3210, %v3210
        %v3243 = vpack.c.bf16 %v3211, %v3211
        %v3244 = vpack.c.bf16 %v3212, %v3212
        %v3245 = vpack.c.bf16 %v3213, %v3213
        %v3246 = vpack.c.bf16 %v3214, %v3214
        %v3247 = vpack.c.bf16 %v3215, %v3215
        %v3248 = vpack.c.bf16 %v3216, %v3216
        %v3249 = vpack.c.bf16 %v3217, %v3217
        %v3250 = vpack.c.bf16 %v3218, %v3218
        %v3251 = vpack.c.bf16 %v3219, %v3219
        %v3252 = vpack.c.bf16 %v3220, %v3220
        %v3253 = vpack.c.bf16 %v3221, %v3221
        %v3254 = vpack.c.bf16 %v3222, %v3222
        %v3255 = vpack.c.bf16 %v3223, %v3223
        %v3256 = vpack.c.bf16 %v3224, %v3224
        %v3257 = vpack.c.bf16 %v3225, %v3225
        %v3258 = vpack.c.bf16 %v3226, %v3226
        %v3259 = vpack.c.bf16 %v3227, %v3227
        %v3260 = vpack.c.bf16 %v3228, %v3228
        %v3261 = vpack.c.bf16 %v3229, %v3229
        %v3262 = vpack.c.bf16 %v3230, %v3230
        %v3263 = vpack.c.bf16 %v3231, %v3231
        %v3264 = vpack.c.bf16 %v3232, %v3232
        %v3265 = vpack.c.bf16 %v3233, %v3233
        %v3266 = vpack.c.bf16 %v3234, %v3234
        %v3267 = vpack.c.bf16 %v3235, %v3235
        %v3268 = vpack.c.bf16 %v3236, %v3236
        %v3269 = vld [vmem:[#allocation3] sm:$0xff]
        %v3270 = vld [vmem:[#allocation3 + $0x8] sm:$0xff]
        %v3271 = vld [vmem:[#allocation3 + $0x10] sm:$0xff]
        %v3272 = vld [vmem:[#allocation3 + $0x18] sm:$0xff]
        %v3273 = vld [vmem:[#allocation3 + $0x20] sm:$0xff]
        %v3274 = vld [vmem:[#allocation3 + $0x28] sm:$0xff]
        %v3275 = vld [vmem:[#allocation3 + $0x30] sm:$0xff]
        %v3276 = vld [vmem:[#allocation3 + $0x38] sm:$0xff]
        %v3277 = vld [vmem:[#allocation3 + $0x40] sm:$0xff]
        %v3278 = vld [vmem:[#allocation3 + $0x48] sm:$0xff]
        %v3279 = vld [vmem:[#allocation3 + $0x50] sm:$0xff]
        %v3280 = vld [vmem:[#allocation3 + $0x58] sm:$0xff]
        %v3281 = vld [vmem:[#allocation3 + $0x60] sm:$0xff]
        %v3282 = vld [vmem:[#allocation3 + $0x68] sm:$0xff]
        %v3283 = vld [vmem:[#allocation3 + $0x70] sm:$0xff]
        %v3284 = vld [vmem:[#allocation3 + $0x78] sm:$0xff]
        %v3285 = vld [vmem:[#allocation3 + $0x80] sm:$0xff]
        %v3286 = vld [vmem:[#allocation3 + $0x88] sm:$0xff]
        %v3287 = vld [vmem:[#allocation3 + $0x90] sm:$0xff]
        %v3288 = vld [vmem:[#allocation3 + $0x98] sm:$0xff]
        %v3289 = vld [vmem:[#allocation3 + $0xa0] sm:$0xff]
        %v3290 = vld [vmem:[#allocation3 + $0xa8] sm:$0xff]
        %v3291 = vld [vmem:[#allocation3 + $0xb0] sm:$0xff]
        %v3292 = vld [vmem:[#allocation3 + $0xb8] sm:$0xff]
        %v3293 = vld [vmem:[#allocation3 + $0xc0] sm:$0xff]
        %v3294 = vld [vmem:[#allocation3 + $0xc8] sm:$0xff]
        %v3295 = vld [vmem:[#allocation3 + $0xd0] sm:$0xff]
        %v3296 = vld [vmem:[#allocation3 + $0xd8] sm:$0xff]
        %v3297 = vld [vmem:[#allocation3 + $0xe0] sm:$0xff]
        %v3298 = vld [vmem:[#allocation3 + $0xe8] sm:$0xff]
        %v3299 = vld [vmem:[#allocation3 + $0xf0] sm:$0xff]
        %v3300 = vld [vmem:[#allocation3 + $0xf8] sm:$0xff]
        %v3301 = vmul.f32 %v2917, %v3269
        %v3302 = vmul.f32 %v2918, %v3270
        %v3303 = vmul.f32 %v2919, %v3271
        %v3304 = vmul.f32 %v2920, %v3272
        %v3305 = vmul.f32 %v2921, %v3273
        %v3306 = vmul.f32 %v2922, %v3274
        %v3307 = vmul.f32 %v2923, %v3275
        %v3308 = vmul.f32 %v2924, %v3276
        %v3309 = vmul.f32 %v2925, %v3277
        %v3310 = vmul.f32 %v2926, %v3278
        %v3311 = vmul.f32 %v2927, %v3279
        %v3312 = vmul.f32 %v2928, %v3280
        %v3313 = vmul.f32 %v2929, %v3281
        %v3314 = vmul.f32 %v2930, %v3282
        %v3315 = vmul.f32 %v2931, %v3283
        %v3316 = vmul.f32 %v2932, %v3284
        %v3317 = vmul.f32 %v2933, %v3285
        %v3318 = vmul.f32 %v2934, %v3286
        %v3319 = vmul.f32 %v2935, %v3287
        %v3320 = vmul.f32 %v2936, %v3288
        %v3321 = vmul.f32 %v2937, %v3289
        %v3322 = vmul.f32 %v2938, %v3290
        %v3323 = vmul.f32 %v2939, %v3291
        %v3324 = vmul.f32 %v2940, %v3292
        %v3325 = vmul.f32 %v2941, %v3293
        %v3326 = vmul.f32 %v2942, %v3294
        %v3327 = vmul.f32 %v2943, %v3295
        %v3328 = vmul.f32 %v2944, %v3296
        %v3329 = vmul.f32 %v2945, %v3297
        %v3330 = vmul.f32 %v2946, %v3298
        %v3331 = vmul.f32 %v2947, %v3299
        %v3332 = vmul.f32 %v2948, %v3300
        %v3333 = vunpack.c.l.bf16 %v3237
        %v3334 = vunpack.c.l.bf16 %v3238
        %v3335 = vunpack.c.l.bf16 %v3239
        %v3336 = vunpack.c.l.bf16 %v3240
        %v3337 = vunpack.c.l.bf16 %v3241
        %v3338 = vunpack.c.l.bf16 %v3242
        %v3339 = vunpack.c.l.bf16 %v3243
        %v3340 = vunpack.c.l.bf16 %v3244
        %v3341 = vunpack.c.l.bf16 %v3245
        %v3342 = vunpack.c.l.bf16 %v3246
        %v3343 = vunpack.c.l.bf16 %v3247
        %v3344 = vunpack.c.l.bf16 %v3248
        %v3345 = vunpack.c.l.bf16 %v3249
        %v3346 = vunpack.c.l.bf16 %v3250
        %v3347 = vunpack.c.l.bf16 %v3251
        %v3348 = vunpack.c.l.bf16 %v3252
        %v3349 = vunpack.c.l.bf16 %v3253
        %v3350 = vunpack.c.l.bf16 %v3254
        %v3351 = vunpack.c.l.bf16 %v3255
        %v3352 = vunpack.c.l.bf16 %v3256
        %v3353 = vunpack.c.l.bf16 %v3257
        %v3354 = vunpack.c.l.bf16 %v3258
        %v3355 = vunpack.c.l.bf16 %v3259
        %v3356 = vunpack.c.l.bf16 %v3260
        %v3357 = vunpack.c.l.bf16 %v3261
        %v3358 = vunpack.c.l.bf16 %v3262
        %v3359 = vunpack.c.l.bf16 %v3263
        %v3360 = vunpack.c.l.bf16 %v3264
        %v3361 = vunpack.c.l.bf16 %v3265
        %v3362 = vunpack.c.l.bf16 %v3266
        %v3363 = vunpack.c.l.bf16 %v3267
        %v3364 = vunpack.c.l.bf16 %v3268
        %3365 = vadd.xlane.f32.xlu0 %v3333
        %v3366 = vpop.xlane.xlu0 %3365
        %3367 = vadd.xlane.f32.xlu0 %v3334
        %v3368 = vpop.xlane.xlu0 %3367
        %3369 = vadd.xlane.f32.xlu0 %v3335
        %v3370 = vpop.xlane.xlu0 %3369
        %3371 = vadd.xlane.f32.xlu0 %v3336
        %v3372 = vpop.xlane.xlu0 %3371
        %3373 = vadd.xlane.f32.xlu0 %v3337
        %v3374 = vpop.xlane.xlu0 %3373
        %3375 = vadd.xlane.f32.xlu0 %v3338
        %v3376 = vpop.xlane.xlu0 %3375
        %3377 = vadd.xlane.f32.xlu0 %v3339
        %v3378 = vpop.xlane.xlu0 %3377
        %3379 = vadd.xlane.f32.xlu0 %v3340
        %v3380 = vpop.xlane.xlu0 %3379
        %3381 = vadd.xlane.f32.xlu0 %v3341
        %v3382 = vpop.xlane.xlu0 %3381
        %3383 = vadd.xlane.f32.xlu0 %v3342
        %v3384 = vpop.xlane.xlu0 %3383
        %3385 = vadd.xlane.f32.xlu0 %v3343
        %v3386 = vpop.xlane.xlu0 %3385
        %3387 = vadd.xlane.f32.xlu0 %v3344
        %v3388 = vpop.xlane.xlu0 %3387
        %3389 = vadd.xlane.f32.xlu0 %v3345
        %v3390 = vpop.xlane.xlu0 %3389
        %3391 = vadd.xlane.f32.xlu0 %v3346
        %v3392 = vpop.xlane.xlu0 %3391
        %3393 = vadd.xlane.f32.xlu0 %v3347
        %v3394 = vpop.xlane.xlu0 %3393
        %3395 = vadd.xlane.f32.xlu0 %v3348
        %v3396 = vpop.xlane.xlu0 %3395
        %3397 = vadd.xlane.f32.xlu0 %v3349
        %v3398 = vpop.xlane.xlu0 %3397
        %3399 = vadd.xlane.f32.xlu0 %v3350
        %v3400 = vpop.xlane.xlu0 %3399
        %3401 = vadd.xlane.f32.xlu0 %v3351
        %v3402 = vpop.xlane.xlu0 %3401
        %3403 = vadd.xlane.f32.xlu0 %v3352
        %v3404 = vpop.xlane.xlu0 %3403
        %3405 = vadd.xlane.f32.xlu0 %v3353
        %v3406 = vpop.xlane.xlu0 %3405
        %3407 = vadd.xlane.f32.xlu0 %v3354
        %v3408 = vpop.xlane.xlu0 %3407
        %3409 = vadd.xlane.f32.xlu0 %v3355
        %v3410 = vpop.xlane.xlu0 %3409
        %3411 = vadd.xlane.f32.xlu0 %v3356
        %v3412 = vpop.xlane.xlu0 %3411
        %3413 = vadd.xlane.f32.xlu0 %v3357
        %v3414 = vpop.xlane.xlu0 %3413
        %3415 = vadd.xlane.f32.xlu0 %v3358
        %v3416 = vpop.xlane.xlu0 %3415
        %3417 = vadd.xlane.f32.xlu0 %v3359
        %v3418 = vpop.xlane.xlu0 %3417
        %3419 = vadd.xlane.f32.xlu0 %v3360
        %v3420 = vpop.xlane.xlu0 %3419
        %3421 = vadd.xlane.f32.xlu0 %v3361
        %v3422 = vpop.xlane.xlu0 %3421
        %3423 = vadd.xlane.f32.xlu0 %v3362
        %v3424 = vpop.xlane.xlu0 %3423
        %3425 = vadd.xlane.f32.xlu0 %v3363
        %v3426 = vpop.xlane.xlu0 %3425
        %3427 = vadd.xlane.f32.xlu0 %v3364
        %v3428 = vpop.xlane.xlu0 %3427
        %v3429 = vadd.f32 %v3301, %v3366
        %v3430 = vadd.f32 %v3302, %v3368
        %v3431 = vadd.f32 %v3303, %v3370
        %v3432 = vadd.f32 %v3304, %v3372
        %v3433 = vadd.f32 %v3305, %v3374
        %v3434 = vadd.f32 %v3306, %v3376
        %v3435 = vadd.f32 %v3307, %v3378
        %v3436 = vadd.f32 %v3308, %v3380
        %v3437 = vadd.f32 %v3309, %v3382
        %v3438 = vadd.f32 %v3310, %v3384
        %v3439 = vadd.f32 %v3311, %v3386
        %v3440 = vadd.f32 %v3312, %v3388
        %v3441 = vadd.f32 %v3313, %v3390
        %v3442 = vadd.f32 %v3314, %v3392
        %v3443 = vadd.f32 %v3315, %v3394
        %v3444 = vadd.f32 %v3316, %v3396
        %v3445 = vadd.f32 %v3317, %v3398
        %v3446 = vadd.f32 %v3318, %v3400
        %v3447 = vadd.f32 %v3319, %v3402
        %v3448 = vadd.f32 %v3320, %v3404
        %v3449 = vadd.f32 %v3321, %v3406
        %v3450 = vadd.f32 %v3322, %v3408
        %v3451 = vadd.f32 %v3323, %v3410
        %v3452 = vadd.f32 %v3324, %v3412
        %v3453 = vadd.f32 %v3325, %v3414
        %v3454 = vadd.f32 %v3326, %v3416
        %v3455 = vadd.f32 %v3327, %v3418
        %v3456 = vadd.f32 %v3328, %v3420
        %v3457 = vadd.f32 %v3329, %v3422
        %v3458 = vadd.f32 %v3330, %v3424
        %v3459 = vadd.f32 %v3331, %v3426
        %v3460 = vadd.f32 %v3332, %v3428
        %3461 = vst.msk [vmem:[#allocation3] sm:$0xff] %vm367, %v3429
        %3462 = vst.msk [vmem:[#allocation3 + $0x8] sm:$0xff] %vm367, %v3430
        %3463 = vst.msk [vmem:[#allocation3 + $0x10] sm:$0xff] %vm367, %v3431
        %3464 = vst.msk [vmem:[#allocation3 + $0x18] sm:$0xff] %vm367, %v3432
        %3465 = vst.msk [vmem:[#allocation3 + $0x20] sm:$0xff] %vm367, %v3433
        %3466 = vst.msk [vmem:[#allocation3 + $0x28] sm:$0xff] %vm367, %v3434
        %3467 = vst.msk [vmem:[#allocation3 + $0x30] sm:$0xff] %vm367, %v3435
        %3468 = vst.msk [vmem:[#allocation3 + $0x38] sm:$0xff] %vm367, %v3436
        %3469 = vst.msk [vmem:[#allocation3 + $0x40] sm:$0xff] %vm367, %v3437
        %3470 = vst.msk [vmem:[#allocation3 + $0x48] sm:$0xff] %vm367, %v3438
        %3471 = vst.msk [vmem:[#allocation3 + $0x50] sm:$0xff] %vm367, %v3439
        %3472 = vst.msk [vmem:[#allocation3 + $0x58] sm:$0xff] %vm367, %v3440
        %3473 = vst.msk [vmem:[#allocation3 + $0x60] sm:$0xff] %vm367, %v3441
        %3474 = vst.msk [vmem:[#allocation3 + $0x68] sm:$0xff] %vm367, %v3442
        %3475 = vst.msk [vmem:[#allocation3 + $0x70] sm:$0xff] %vm367, %v3443
        %3476 = vst.msk [vmem:[#allocation3 + $0x78] sm:$0xff] %vm367, %v3444
        %3477 = vst.msk [vmem:[#allocation3 + $0x80] sm:$0xff] %vm367, %v3445
        %3478 = vst.msk [vmem:[#allocation3 + $0x88] sm:$0xff] %vm367, %v3446
        %3479 = vst.msk [vmem:[#allocation3 + $0x90] sm:$0xff] %vm367, %v3447
        %3480 = vst.msk [vmem:[#allocation3 + $0x98] sm:$0xff] %vm367, %v3448
        %3481 = vst.msk [vmem:[#allocation3 + $0xa0] sm:$0xff] %vm367, %v3449
        %3482 = vst.msk [vmem:[#allocation3 + $0xa8] sm:$0xff] %vm367, %v3450
        %3483 = vst.msk [vmem:[#allocation3 + $0xb0] sm:$0xff] %vm367, %v3451
        %3484 = vst.msk [vmem:[#allocation3 + $0xb8] sm:$0xff] %vm367, %v3452
        %3485 = vst.msk [vmem:[#allocation3 + $0xc0] sm:$0xff] %vm367, %v3453
        %3486 = vst.msk [vmem:[#allocation3 + $0xc8] sm:$0xff] %vm367, %v3454
        %3487 = vst.msk [vmem:[#allocation3 + $0xd0] sm:$0xff] %vm367, %v3455
        %3488 = vst.msk [vmem:[#allocation3 + $0xd8] sm:$0xff] %vm367, %v3456
        %3489 = vst.msk [vmem:[#allocation3 + $0xe0] sm:$0xff] %vm367, %v3457
        %3490 = vst.msk [vmem:[#allocation3 + $0xe8] sm:$0xff] %vm367, %v3458
        %3491 = vst.msk [vmem:[#allocation3 + $0xf0] sm:$0xff] %vm367, %v3459
        %3492 = vst.msk [vmem:[#allocation3 + $0xf8] sm:$0xff] %vm367, %v3460
        %v3493 = vld [vmem:[#allocation4] sm:$0xff]
        %v3494 = vld [vmem:[#allocation4 + $0x8] sm:$0xff]
        %v3495 = vld [vmem:[#allocation4 + $0x10] sm:$0xff]
        %v3496 = vld [vmem:[#allocation4 + $0x18] sm:$0xff]
        %v3497 = vld [vmem:[#allocation4 + $0x20] sm:$0xff]
        %v3498 = vld [vmem:[#allocation4 + $0x28] sm:$0xff]
        %v3499 = vld [vmem:[#allocation4 + $0x30] sm:$0xff]
        %v3500 = vld [vmem:[#allocation4 + $0x38] sm:$0xff]
        %v3501 = vld [vmem:[#allocation4 + $0x40] sm:$0xff]
        %v3502 = vld [vmem:[#allocation4 + $0x48] sm:$0xff]
        %v3503 = vld [vmem:[#allocation4 + $0x50] sm:$0xff]
        %v3504 = vld [vmem:[#allocation4 + $0x58] sm:$0xff]
        %v3505 = vld [vmem:[#allocation4 + $0x60] sm:$0xff]
        %v3506 = vld [vmem:[#allocation4 + $0x68] sm:$0xff]
        %v3507 = vld [vmem:[#allocation4 + $0x70] sm:$0xff]
        %v3508 = vld [vmem:[#allocation4 + $0x78] sm:$0xff]
        %v3509 = vld [vmem:[#allocation4 + $0x80] sm:$0xff]
        %v3510 = vld [vmem:[#allocation4 + $0x88] sm:$0xff]
        %v3511 = vld [vmem:[#allocation4 + $0x90] sm:$0xff]
        %v3512 = vld [vmem:[#allocation4 + $0x98] sm:$0xff]
        %v3513 = vld [vmem:[#allocation4 + $0xa0] sm:$0xff]
        %v3514 = vld [vmem:[#allocation4 + $0xa8] sm:$0xff]
        %v3515 = vld [vmem:[#allocation4 + $0xb0] sm:$0xff]
        %v3516 = vld [vmem:[#allocation4 + $0xb8] sm:$0xff]
        %v3517 = vld [vmem:[#allocation4 + $0xc0] sm:$0xff]
        %v3518 = vld [vmem:[#allocation4 + $0xc8] sm:$0xff]
        %v3519 = vld [vmem:[#allocation4 + $0xd0] sm:$0xff]
        %v3520 = vld [vmem:[#allocation4 + $0xd8] sm:$0xff]
        %v3521 = vld [vmem:[#allocation4 + $0xe0] sm:$0xff]
        %v3522 = vld [vmem:[#allocation4 + $0xe8] sm:$0xff]
        %v3523 = vld [vmem:[#allocation4 + $0xf0] sm:$0xff]
        %v3524 = vld [vmem:[#allocation4 + $0xf8] sm:$0xff]
        %3526 = vset.pattern.permute.xlu0 0
        %3527 = vperm.xlu0 %3526, %v2917
        %v3528 = vpop.permute.xlu0 %3527
        %3531 = vset.pattern.permute.xlu0 0
        %3532 = vperm.xlu0 %3531, %v2918
        %v3533 = vpop.permute.xlu0 %3532
        %3536 = vset.pattern.permute.xlu0 0
        %3537 = vperm.xlu0 %3536, %v2919
        %v3538 = vpop.permute.xlu0 %3537
        %3541 = vset.pattern.permute.xlu0 0
        %3542 = vperm.xlu0 %3541, %v2920
        %v3543 = vpop.permute.xlu0 %3542
        %3546 = vset.pattern.permute.xlu0 0
        %3547 = vperm.xlu0 %3546, %v2921
        %v3548 = vpop.permute.xlu0 %3547
        %3551 = vset.pattern.permute.xlu0 0
        %3552 = vperm.xlu0 %3551, %v2922
        %v3553 = vpop.permute.xlu0 %3552
        %3556 = vset.pattern.permute.xlu0 0
        %3557 = vperm.xlu0 %3556, %v2923
        %v3558 = vpop.permute.xlu0 %3557
        %3561 = vset.pattern.permute.xlu0 0
        %3562 = vperm.xlu0 %3561, %v2924
        %v3563 = vpop.permute.xlu0 %3562
        %3566 = vset.pattern.permute.xlu0 0
        %3567 = vperm.xlu0 %3566, %v2925
        %v3568 = vpop.permute.xlu0 %3567
        %3571 = vset.pattern.permute.xlu0 0
        %3572 = vperm.xlu0 %3571, %v2926
        %v3573 = vpop.permute.xlu0 %3572
        %3576 = vset.pattern.permute.xlu0 0
        %3577 = vperm.xlu0 %3576, %v2927
        %v3578 = vpop.permute.xlu0 %3577
        %3581 = vset.pattern.permute.xlu0 0
        %3582 = vperm.xlu0 %3581, %v2928
        %v3583 = vpop.permute.xlu0 %3582
        %3586 = vset.pattern.permute.xlu0 0
        %3587 = vperm.xlu0 %3586, %v2929
        %v3588 = vpop.permute.xlu0 %3587
        %3591 = vset.pattern.permute.xlu0 0
        %3592 = vperm.xlu0 %3591, %v2930
        %v3593 = vpop.permute.xlu0 %3592
        %3596 = vset.pattern.permute.xlu0 0
        %3597 = vperm.xlu0 %3596, %v2931
        %v3598 = vpop.permute.xlu0 %3597
        %3601 = vset.pattern.permute.xlu0 0
        %3602 = vperm.xlu0 %3601, %v2932
        %v3603 = vpop.permute.xlu0 %3602
        %3606 = vset.pattern.permute.xlu0 0
        %3607 = vperm.xlu0 %3606, %v2933
        %v3608 = vpop.permute.xlu0 %3607
        %3611 = vset.pattern.permute.xlu0 0
        %3612 = vperm.xlu0 %3611, %v2934
        %v3613 = vpop.permute.xlu0 %3612
        %3616 = vset.pattern.permute.xlu0 0
        %3617 = vperm.xlu0 %3616, %v2935
        %v3618 = vpop.permute.xlu0 %3617
        %3621 = vset.pattern.permute.xlu0 0
        %3622 = vperm.xlu0 %3621, %v2936
        %v3623 = vpop.permute.xlu0 %3622
        %3626 = vset.pattern.permute.xlu0 0
        %3627 = vperm.xlu0 %3626, %v2937
        %v3628 = vpop.permute.xlu0 %3627
        %3631 = vset.pattern.permute.xlu0 0
        %3632 = vperm.xlu0 %3631, %v2938
        %v3633 = vpop.permute.xlu0 %3632
        %3636 = vset.pattern.permute.xlu0 0
        %3637 = vperm.xlu0 %3636, %v2939
        %v3638 = vpop.permute.xlu0 %3637
        %3641 = vset.pattern.permute.xlu0 0
        %3642 = vperm.xlu0 %3641, %v2940
        %v3643 = vpop.permute.xlu0 %3642
        %3646 = vset.pattern.permute.xlu0 0
        %3647 = vperm.xlu0 %3646, %v2941
        %v3648 = vpop.permute.xlu0 %3647
        %3651 = vset.pattern.permute.xlu0 0
        %3652 = vperm.xlu0 %3651, %v2942
        %v3653 = vpop.permute.xlu0 %3652
        %3656 = vset.pattern.permute.xlu0 0
        %3657 = vperm.xlu0 %3656, %v2943
        %v3658 = vpop.permute.xlu0 %3657
        %3661 = vset.pattern.permute.xlu0 0
        %3662 = vperm.xlu0 %3661, %v2944
        %v3663 = vpop.permute.xlu0 %3662
        %3666 = vset.pattern.permute.xlu0 0
        %3667 = vperm.xlu0 %3666, %v2945
        %v3668 = vpop.permute.xlu0 %3667
        %3671 = vset.pattern.permute.xlu0 0
        %3672 = vperm.xlu0 %3671, %v2946
        %v3673 = vpop.permute.xlu0 %3672
        %3676 = vset.pattern.permute.xlu0 0
        %3677 = vperm.xlu0 %3676, %v2947
        %v3678 = vpop.permute.xlu0 %3677
        %3681 = vset.pattern.permute.xlu0 0
        %3682 = vperm.xlu0 %3681, %v2948
        %v3683 = vpop.permute.xlu0 %3682
        %v3685 = vmul.f32 %v3528, %v3493
        %v3686 = vmul.f32 %v3533, %v3494
        %v3687 = vmul.f32 %v3538, %v3495
        %v3688 = vmul.f32 %v3543, %v3496
        %v3689 = vmul.f32 %v3548, %v3497
        %v3690 = vmul.f32 %v3553, %v3498
        %v3691 = vmul.f32 %v3558, %v3499
        %v3692 = vmul.f32 %v3563, %v3500
        %v3693 = vmul.f32 %v3568, %v3501
        %v3694 = vmul.f32 %v3573, %v3502
        %v3695 = vmul.f32 %v3578, %v3503
        %v3696 = vmul.f32 %v3583, %v3504
        %v3697 = vmul.f32 %v3588, %v3505
        %v3698 = vmul.f32 %v3593, %v3506
        %v3699 = vmul.f32 %v3598, %v3507
        %v3700 = vmul.f32 %v3603, %v3508
        %v3701 = vmul.f32 %v3608, %v3509
        %v3702 = vmul.f32 %v3613, %v3510
        %v3703 = vmul.f32 %v3618, %v3511
        %v3704 = vmul.f32 %v3623, %v3512
        %v3705 = vmul.f32 %v3628, %v3513
        %v3706 = vmul.f32 %v3633, %v3514
        %v3707 = vmul.f32 %v3638, %v3515
        %v3708 = vmul.f32 %v3643, %v3516
        %v3709 = vmul.f32 %v3648, %v3517
        %v3710 = vmul.f32 %v3653, %v3518
        %v3711 = vmul.f32 %v3658, %v3519
        %v3712 = vmul.f32 %v3663, %v3520
        %v3713 = vmul.f32 %v3668, %v3521
        %v3714 = vmul.f32 %v3673, %v3522
        %v3715 = vmul.f32 %v3678, %v3523
        %v3716 = vmul.f32 %v3683, %v3524
        %v3733 = vunpack.c.l.b16 %v3237
        %v3734 = vunpack.c.l.b16 %v3238
        %v3735 = vunpack.c.l.b16 %v3239
        %v3736 = vunpack.c.l.b16 %v3240
        %v3737 = vunpack.c.l.b16 %v3241
        %v3738 = vunpack.c.l.b16 %v3242
        %v3739 = vunpack.c.l.b16 %v3243
        %v3740 = vunpack.c.l.b16 %v3244
        %v3741 = vunpack.c.l.b16 %v3245
        %v3742 = vunpack.c.l.b16 %v3246
        %v3743 = vunpack.c.l.b16 %v3247
        %v3744 = vunpack.c.l.b16 %v3248
        %v3745 = vunpack.c.l.b16 %v3249
        %v3746 = vunpack.c.l.b16 %v3250
        %v3747 = vunpack.c.l.b16 %v3251
        %v3748 = vunpack.c.l.b16 %v3252
        %v3749 = vpack.c.b16 %v3734, %v3733
        %v3750 = vpack.c.b16 %v3736, %v3735
        %v3751 = vpack.c.b16 %v3738, %v3737
        %v3752 = vpack.c.b16 %v3740, %v3739
        %v3753 = vpack.c.b16 %v3742, %v3741
        %v3754 = vpack.c.b16 %v3744, %v3743
        %v3755 = vpack.c.b16 %v3746, %v3745
        %v3756 = vpack.c.b16 %v3748, %v3747
        %v3781 = vunpack.c.l.b16 %v2291
        %v3782 = vunpack.c.l.b16 %v2292
        %v3783 = vunpack.c.l.b16 %v2293
        %v3784 = vunpack.c.l.b16 %v2294
        %v3785 = vunpack.c.l.b16 %v2295
        %v3786 = vunpack.c.l.b16 %v2296
        %v3787 = vunpack.c.l.b16 %v2297
        %v3788 = vunpack.c.l.b16 %v2298
        %v3789 = vunpack.c.l.b16 %v2299
        %v3790 = vunpack.c.l.b16 %v2300
        %v3791 = vunpack.c.l.b16 %v2301
        %v3792 = vunpack.c.l.b16 %v2302
        %v3793 = vunpack.c.l.b16 %v2303
        %v3794 = vunpack.c.l.b16 %v2304
        %v3795 = vunpack.c.l.b16 %v2305
        %v3796 = vunpack.c.l.b16 %v2306
        %v3797 = vpack.c.b16 %v3782, %v3781
        %v3798 = vpack.c.b16 %v3784, %v3783
        %v3799 = vpack.c.b16 %v3786, %v3785
        %v3800 = vpack.c.b16 %v3788, %v3787
        %v3801 = vpack.c.b16 %v3790, %v3789
        %v3802 = vpack.c.b16 %v3792, %v3791
        %v3803 = vpack.c.b16 %v3794, %v3793
        %v3804 = vpack.c.b16 %v3796, %v3795
        %3813 = vmatpush.bf16.msra.mxu0 %v3804
        %3814 = vmatpush.bf16.msra.mxu0 %v3803
        %3815 = vmatpush.bf16.msra.mxu0 %v3802
        %3816 = vmatpush.bf16.msra.mxu0 %v3801
        %3817 = vmatpush.bf16.msra.mxu0 %v3800
        %3818 = vmatpush.bf16.msra.mxu0 %v3799
        %3819 = vmatpush.bf16.msra.mxu0 %v3798
        %3820 = vmatpush.bf16.msra.mxu0 %v3797
        %3821 = vmatmul.bf16.gmra.mxu0 %v3749
        %v3822 = vpop.f32.mrf.mxu0
        %v3823 = vadd.f32 0.0, %v3822
        %v3824 = vpop.f32.mrf.mxu0
        %v3825 = vadd.f32 0.0, %v3824
        %3826 = vmatmul.bf16.gmra.mxu0 %v3750
        %v3827 = vpop.f32.mrf.mxu0
        %v3828 = vadd.f32 0.0, %v3827
        %v3829 = vpop.f32.mrf.mxu0
        %v3830 = vadd.f32 0.0, %v3829
        %3831 = vmatmul.bf16.gmra.mxu0 %v3751
        %v3832 = vpop.f32.mrf.mxu0
        %v3833 = vadd.f32 0.0, %v3832
        %v3834 = vpop.f32.mrf.mxu0
        %v3835 = vadd.f32 0.0, %v3834
        %3836 = vmatmul.bf16.gmra.mxu0 %v3752
        %v3837 = vpop.f32.mrf.mxu0
        %v3838 = vadd.f32 0.0, %v3837
        %v3839 = vpop.f32.mrf.mxu0
        %v3840 = vadd.f32 0.0, %v3839
        %3841 = vmatmul.bf16.gmra.mxu0 %v3753
        %v3842 = vpop.f32.mrf.mxu0
        %v3843 = vadd.f32 0.0, %v3842
        %v3844 = vpop.f32.mrf.mxu0
        %v3845 = vadd.f32 0.0, %v3844
        %3846 = vmatmul.bf16.gmra.mxu0 %v3754
        %v3847 = vpop.f32.mrf.mxu0
        %v3848 = vadd.f32 0.0, %v3847
        %v3849 = vpop.f32.mrf.mxu0
        %v3850 = vadd.f32 0.0, %v3849
        %3851 = vmatmul.bf16.gmra.mxu0 %v3755
        %v3852 = vpop.f32.mrf.mxu0
        %v3853 = vadd.f32 0.0, %v3852
        %v3854 = vpop.f32.mrf.mxu0
        %v3855 = vadd.f32 0.0, %v3854
        %3856 = vmatmul.bf16.gmra.mxu0 %v3756
        %v3857 = vpop.f32.mrf.mxu0
        %v3858 = vadd.f32 0.0, %v3857
        %v3859 = vpop.f32.mrf.mxu0
        %v3860 = vadd.f32 0.0, %v3859
        %3861 = vdwg.mxu0
        %v3878 = vunpack.c.l.b16 %v3253
        %v3879 = vunpack.c.l.b16 %v3254
        %v3880 = vunpack.c.l.b16 %v3255
        %v3881 = vunpack.c.l.b16 %v3256
        %v3882 = vunpack.c.l.b16 %v3257
        %v3883 = vunpack.c.l.b16 %v3258
        %v3884 = vunpack.c.l.b16 %v3259
        %v3885 = vunpack.c.l.b16 %v3260
        %v3886 = vunpack.c.l.b16 %v3261
        %v3887 = vunpack.c.l.b16 %v3262
        %v3888 = vunpack.c.l.b16 %v3263
        %v3889 = vunpack.c.l.b16 %v3264
        %v3890 = vunpack.c.l.b16 %v3265
        %v3891 = vunpack.c.l.b16 %v3266
        %v3892 = vunpack.c.l.b16 %v3267
        %v3893 = vunpack.c.l.b16 %v3268
        %v3894 = vpack.c.b16 %v3879, %v3878
        %v3895 = vpack.c.b16 %v3881, %v3880
        %v3896 = vpack.c.b16 %v3883, %v3882
        %v3897 = vpack.c.b16 %v3885, %v3884
        %v3898 = vpack.c.b16 %v3887, %v3886
        %v3899 = vpack.c.b16 %v3889, %v3888
        %v3900 = vpack.c.b16 %v3891, %v3890
        %v3901 = vpack.c.b16 %v3893, %v3892
        %v3926 = vunpack.c.l.b16 %v2307
        %v3927 = vunpack.c.l.b16 %v2308
        %v3928 = vunpack.c.l.b16 %v2309
        %v3929 = vunpack.c.l.b16 %v2310
        %v3930 = vunpack.c.l.b16 %v2311
        %v3931 = vunpack.c.l.b16 %v2312
        %v3932 = vunpack.c.l.b16 %v2313
        %v3933 = vunpack.c.l.b16 %v2314
        %v3934 = vunpack.c.l.b16 %v2315
        %v3935 = vunpack.c.l.b16 %v2316
        %v3936 = vunpack.c.l.b16 %v2317
        %v3937 = vunpack.c.l.b16 %v2318
        %v3938 = vunpack.c.l.b16 %v2319
        %v3939 = vunpack.c.l.b16 %v2320
        %v3940 = vunpack.c.l.b16 %v2321
        %v3941 = vunpack.c.l.b16 %v2322
        %v3942 = vpack.c.b16 %v3927, %v3926
        %v3943 = vpack.c.b16 %v3929, %v3928
        %v3944 = vpack.c.b16 %v3931, %v3930
        %v3945 = vpack.c.b16 %v3933, %v3932
        %v3946 = vpack.c.b16 %v3935, %v3934
        %v3947 = vpack.c.b16 %v3937, %v3936
        %v3948 = vpack.c.b16 %v3939, %v3938
        %v3949 = vpack.c.b16 %v3941, %v3940
        %3958 = vmatpush.bf16.msra.mxu0 %v3949
        %3959 = vmatpush.bf16.msra.mxu0 %v3948
        %3960 = vmatpush.bf16.msra.mxu0 %v3947
        %3961 = vmatpush.bf16.msra.mxu0 %v3946
        %3962 = vmatpush.bf16.msra.mxu0 %v3945
        %3963 = vmatpush.bf16.msra.mxu0 %v3944
        %3964 = vmatpush.bf16.msra.mxu0 %v3943
        %3965 = vmatpush.bf16.msra.mxu0 %v3942
        %3966 = vmatmul.bf16.gmra.mxu0 %v3894
        %v3967 = vpop.f32.mrf.mxu0
        %v3968 = vadd.f32 0.0, %v3967
        %v3969 = vpop.f32.mrf.mxu0
        %v3970 = vadd.f32 0.0, %v3969
        %3971 = vmatmul.bf16.gmra.mxu0 %v3895
        %v3972 = vpop.f32.mrf.mxu0
        %v3973 = vadd.f32 0.0, %v3972
        %v3974 = vpop.f32.mrf.mxu0
        %v3975 = vadd.f32 0.0, %v3974
        %3976 = vmatmul.bf16.gmra.mxu0 %v3896
        %v3977 = vpop.f32.mrf.mxu0
        %v3978 = vadd.f32 0.0, %v3977
        %v3979 = vpop.f32.mrf.mxu0
        %v3980 = vadd.f32 0.0, %v3979
        %3981 = vmatmul.bf16.gmra.mxu0 %v3897
        %v3982 = vpop.f32.mrf.mxu0
        %v3983 = vadd.f32 0.0, %v3982
        %v3984 = vpop.f32.mrf.mxu0
        %v3985 = vadd.f32 0.0, %v3984
        %3986 = vmatmul.bf16.gmra.mxu0 %v3898
        %v3987 = vpop.f32.mrf.mxu0
        %v3988 = vadd.f32 0.0, %v3987
        %v3989 = vpop.f32.mrf.mxu0
        %v3990 = vadd.f32 0.0, %v3989
        %3991 = vmatmul.bf16.gmra.mxu0 %v3899
        %v3992 = vpop.f32.mrf.mxu0
        %v3993 = vadd.f32 0.0, %v3992
        %v3994 = vpop.f32.mrf.mxu0
        %v3995 = vadd.f32 0.0, %v3994
        %3996 = vmatmul.bf16.gmra.mxu0 %v3900
        %v3997 = vpop.f32.mrf.mxu0
        %v3998 = vadd.f32 0.0, %v3997
        %v3999 = vpop.f32.mrf.mxu0
        %v4000 = vadd.f32 0.0, %v3999
        %4001 = vmatmul.bf16.gmra.mxu0 %v3901
        %v4002 = vpop.f32.mrf.mxu0
        %v4003 = vadd.f32 0.0, %v4002
        %v4004 = vpop.f32.mrf.mxu0
        %v4005 = vadd.f32 0.0, %v4004
        %4006 = vdwg.mxu0
        %v4007 = vadd.f32 %v3685, %v3823
        %v4008 = vadd.f32 %v3686, %v3825
        %v4009 = vadd.f32 %v3687, %v3828
        %v4010 = vadd.f32 %v3688, %v3830
        %v4011 = vadd.f32 %v3689, %v3833
        %v4012 = vadd.f32 %v3690, %v3835
        %v4013 = vadd.f32 %v3691, %v3838
        %v4014 = vadd.f32 %v3692, %v3840
        %v4015 = vadd.f32 %v3693, %v3843
        %v4016 = vadd.f32 %v3694, %v3845
        %v4017 = vadd.f32 %v3695, %v3848
        %v4018 = vadd.f32 %v3696, %v3850
        %v4019 = vadd.f32 %v3697, %v3853
        %v4020 = vadd.f32 %v3698, %v3855
        %v4021 = vadd.f32 %v3699, %v3858
        %v4022 = vadd.f32 %v3700, %v3860
        %v4023 = vadd.f32 %v3701, %v3968
        %v4024 = vadd.f32 %v3702, %v3970
        %v4025 = vadd.f32 %v3703, %v3973
        %v4026 = vadd.f32 %v3704, %v3975
        %v4027 = vadd.f32 %v3705, %v3978
        %v4028 = vadd.f32 %v3706, %v3980
        %v4029 = vadd.f32 %v3707, %v3983
        %v4030 = vadd.f32 %v3708, %v3985
        %v4031 = vadd.f32 %v3709, %v3988
        %v4032 = vadd.f32 %v3710, %v3990
        %v4033 = vadd.f32 %v3711, %v3993
        %v4034 = vadd.f32 %v3712, %v3995
        %v4035 = vadd.f32 %v3713, %v3998
        %v4036 = vadd.f32 %v3714, %v4000
        %v4037 = vadd.f32 %v3715, %v4003
        %v4038 = vadd.f32 %v3716, %v4005
        %4039 = vst.msk [vmem:[#allocation4] sm:$0xff] %vm432, %v4007
        %4040 = vst.msk [vmem:[#allocation4 + $0x8] sm:$0xff] %vm432, %v4008
        %4041 = vst.msk [vmem:[#allocation4 + $0x10] sm:$0xff] %vm432, %v4009
        %4042 = vst.msk [vmem:[#allocation4 + $0x18] sm:$0xff] %vm432, %v4010
        %4043 = vst.msk [vmem:[#allocation4 + $0x20] sm:$0xff] %vm432, %v4011
        %4044 = vst.msk [vmem:[#allocation4 + $0x28] sm:$0xff] %vm432, %v4012
        %4045 = vst.msk [vmem:[#allocation4 + $0x30] sm:$0xff] %vm432, %v4013
        %4046 = vst.msk [vmem:[#allocation4 + $0x38] sm:$0xff] %vm432, %v4014
        %4047 = vst.msk [vmem:[#allocation4 + $0x40] sm:$0xff] %vm432, %v4015
        %4048 = vst.msk [vmem:[#allocation4 + $0x48] sm:$0xff] %vm432, %v4016
        %4049 = vst.msk [vmem:[#allocation4 + $0x50] sm:$0xff] %vm432, %v4017
        %4050 = vst.msk [vmem:[#allocation4 + $0x58] sm:$0xff] %vm432, %v4018
        %4051 = vst.msk [vmem:[#allocation4 + $0x60] sm:$0xff] %vm432, %v4019
        %4052 = vst.msk [vmem:[#allocation4 + $0x68] sm:$0xff] %vm432, %v4020
        %4053 = vst.msk [vmem:[#allocation4 + $0x70] sm:$0xff] %vm432, %v4021
        %4054 = vst.msk [vmem:[#allocation4 + $0x78] sm:$0xff] %vm432, %v4022
        %4055 = vst.msk [vmem:[#allocation4 + $0x80] sm:$0xff] %vm432, %v4023
        %4056 = vst.msk [vmem:[#allocation4 + $0x88] sm:$0xff] %vm432, %v4024
        %4057 = vst.msk [vmem:[#allocation4 + $0x90] sm:$0xff] %vm432, %v4025
        %4058 = vst.msk [vmem:[#allocation4 + $0x98] sm:$0xff] %vm432, %v4026
        %4059 = vst.msk [vmem:[#allocation4 + $0xa0] sm:$0xff] %vm432, %v4027
        %4060 = vst.msk [vmem:[#allocation4 + $0xa8] sm:$0xff] %vm432, %v4028
        %4061 = vst.msk [vmem:[#allocation4 + $0xb0] sm:$0xff] %vm432, %v4029
        %4062 = vst.msk [vmem:[#allocation4 + $0xb8] sm:$0xff] %vm432, %v4030
        %4063 = vst.msk [vmem:[#allocation4 + $0xc0] sm:$0xff] %vm432, %v4031
        %4064 = vst.msk [vmem:[#allocation4 + $0xc8] sm:$0xff] %vm432, %v4032
        %4065 = vst.msk [vmem:[#allocation4 + $0xd0] sm:$0xff] %vm432, %v4033
        %4066 = vst.msk [vmem:[#allocation4 + $0xd8] sm:$0xff] %vm432, %v4034
        %4067 = vst.msk [vmem:[#allocation4 + $0xe0] sm:$0xff] %vm432, %v4035
        %4068 = vst.msk [vmem:[#allocation4 + $0xe8] sm:$0xff] %vm432, %v4036
        %4069 = vst.msk [vmem:[#allocation4 + $0xf0] sm:$0xff] %vm432, %v4037
        %4070 = vst.msk [vmem:[#allocation4 + $0xf8] sm:$0xff] %vm432, %v4038
        %4071 = vst.msk [vmem:[#allocation2] sm:$0xff] %vm367, %v2853
        %4072 = vst.msk [vmem:[#allocation2 + $0x8] sm:$0xff] %vm367, %v2854
        %4073 = vst.msk [vmem:[#allocation2 + $0x10] sm:$0xff] %vm367, %v2855
        %4074 = vst.msk [vmem:[#allocation2 + $0x18] sm:$0xff] %vm367, %v2856
        %4075 = vst.msk [vmem:[#allocation2 + $0x20] sm:$0xff] %vm367, %v2857
        %4076 = vst.msk [vmem:[#allocation2 + $0x28] sm:$0xff] %vm367, %v2858
        %4077 = vst.msk [vmem:[#allocation2 + $0x30] sm:$0xff] %vm367, %v2859
        %4078 = vst.msk [vmem:[#allocation2 + $0x38] sm:$0xff] %vm367, %v2860
        %4079 = vst.msk [vmem:[#allocation2 + $0x40] sm:$0xff] %vm367, %v2861
        %4080 = vst.msk [vmem:[#allocation2 + $0x48] sm:$0xff] %vm367, %v2862
        %4081 = vst.msk [vmem:[#allocation2 + $0x50] sm:$0xff] %vm367, %v2863
        %4082 = vst.msk [vmem:[#allocation2 + $0x58] sm:$0xff] %vm367, %v2864
        %4083 = vst.msk [vmem:[#allocation2 + $0x60] sm:$0xff] %vm367, %v2865
        %4084 = vst.msk [vmem:[#allocation2 + $0x68] sm:$0xff] %vm367, %v2866
        %4085 = vst.msk [vmem:[#allocation2 + $0x70] sm:$0xff] %vm367, %v2867
        %4086 = vst.msk [vmem:[#allocation2 + $0x78] sm:$0xff] %vm367, %v2868
        %4087 = vst.msk [vmem:[#allocation2 + $0x80] sm:$0xff] %vm367, %v2869
        %4088 = vst.msk [vmem:[#allocation2 + $0x88] sm:$0xff] %vm367, %v2870
        %4089 = vst.msk [vmem:[#allocation2 + $0x90] sm:$0xff] %vm367, %v2871
        %4090 = vst.msk [vmem:[#allocation2 + $0x98] sm:$0xff] %vm367, %v2872
        %4091 = vst.msk [vmem:[#allocation2 + $0xa0] sm:$0xff] %vm367, %v2873
        %4092 = vst.msk [vmem:[#allocation2 + $0xa8] sm:$0xff] %vm367, %v2874
        %4093 = vst.msk [vmem:[#allocation2 + $0xb0] sm:$0xff] %vm367, %v2875
        %4094 = vst.msk [vmem:[#allocation2 + $0xb8] sm:$0xff] %vm367, %v2876
        %4095 = vst.msk [vmem:[#allocation2 + $0xc0] sm:$0xff] %vm367, %v2877
        %4096 = vst.msk [vmem:[#allocation2 + $0xc8] sm:$0xff] %vm367, %v2878
        %4097 = vst.msk [vmem:[#allocation2 + $0xd0] sm:$0xff] %vm367, %v2879
        %4098 = vst.msk [vmem:[#allocation2 + $0xd8] sm:$0xff] %vm367, %v2880
        %4099 = vst.msk [vmem:[#allocation2 + $0xe0] sm:$0xff] %vm367, %v2881
        %4100 = vst.msk [vmem:[#allocation2 + $0xe8] sm:$0xff] %vm367, %v2882
        %4101 = vst.msk [vmem:[#allocation2 + $0xf0] sm:$0xff] %vm367, %v2883
        %4102 = vst.msk [vmem:[#allocation2 + $0xf8] sm:$0xff] %vm367, %v2884
        %v4103 = vld [vmem:[#allocation4] sm:$0xff]
        %v4104 = vld [vmem:[#allocation4 + $0x8] sm:$0xff]
        %v4105 = vld [vmem:[#allocation4 + $0x10] sm:$0xff]
        %v4106 = vld [vmem:[#allocation4 + $0x18] sm:$0xff]
        %v4107 = vld [vmem:[#allocation4 + $0x20] sm:$0xff]
        %v4108 = vld [vmem:[#allocation4 + $0x28] sm:$0xff]
        %v4109 = vld [vmem:[#allocation4 + $0x30] sm:$0xff]
        %v4110 = vld [vmem:[#allocation4 + $0x38] sm:$0xff]
        %v4111 = vld [vmem:[#allocation4 + $0x40] sm:$0xff]
        %v4112 = vld [vmem:[#allocation4 + $0x48] sm:$0xff]
        %v4113 = vld [vmem:[#allocation4 + $0x50] sm:$0xff]
        %v4114 = vld [vmem:[#allocation4 + $0x58] sm:$0xff]
        %v4115 = vld [vmem:[#allocation4 + $0x60] sm:$0xff]
        %v4116 = vld [vmem:[#allocation4 + $0x68] sm:$0xff]
        %v4117 = vld [vmem:[#allocation4 + $0x70] sm:$0xff]
        %v4118 = vld [vmem:[#allocation4 + $0x78] sm:$0xff]
        %v4119 = vld [vmem:[#allocation4 + $0x80] sm:$0xff]
        %v4120 = vld [vmem:[#allocation4 + $0x88] sm:$0xff]
        %v4121 = vld [vmem:[#allocation4 + $0x90] sm:$0xff]
        %v4122 = vld [vmem:[#allocation4 + $0x98] sm:$0xff]
        %v4123 = vld [vmem:[#allocation4 + $0xa0] sm:$0xff]
        %v4124 = vld [vmem:[#allocation4 + $0xa8] sm:$0xff]
        %v4125 = vld [vmem:[#allocation4 + $0xb0] sm:$0xff]
        %v4126 = vld [vmem:[#allocation4 + $0xb8] sm:$0xff]
        %v4127 = vld [vmem:[#allocation4 + $0xc0] sm:$0xff]
        %v4128 = vld [vmem:[#allocation4 + $0xc8] sm:$0xff]
        %v4129 = vld [vmem:[#allocation4 + $0xd0] sm:$0xff]
        %v4130 = vld [vmem:[#allocation4 + $0xd8] sm:$0xff]
        %v4131 = vld [vmem:[#allocation4 + $0xe0] sm:$0xff]
        %v4132 = vld [vmem:[#allocation4 + $0xe8] sm:$0xff]
        %v4133 = vld [vmem:[#allocation4 + $0xf0] sm:$0xff]
        %v4134 = vld [vmem:[#allocation4 + $0xf8] sm:$0xff]
        %v4135 = vld [vmem:[#allocation3] sm:$0xff]
        %v4136 = vld [vmem:[#allocation3 + $0x8] sm:$0xff]
        %v4137 = vld [vmem:[#allocation3 + $0x10] sm:$0xff]
        %v4138 = vld [vmem:[#allocation3 + $0x18] sm:$0xff]
        %v4139 = vld [vmem:[#allocation3 + $0x20] sm:$0xff]
        %v4140 = vld [vmem:[#allocation3 + $0x28] sm:$0xff]
        %v4141 = vld [vmem:[#allocation3 + $0x30] sm:$0xff]
        %v4142 = vld [vmem:[#allocation3 + $0x38] sm:$0xff]
        %v4143 = vld [vmem:[#allocation3 + $0x40] sm:$0xff]
        %v4144 = vld [vmem:[#allocation3 + $0x48] sm:$0xff]
        %v4145 = vld [vmem:[#allocation3 + $0x50] sm:$0xff]
        %v4146 = vld [vmem:[#allocation3 + $0x58] sm:$0xff]
        %v4147 = vld [vmem:[#allocation3 + $0x60] sm:$0xff]
        %v4148 = vld [vmem:[#allocation3 + $0x68] sm:$0xff]
        %v4149 = vld [vmem:[#allocation3 + $0x70] sm:$0xff]
        %v4150 = vld [vmem:[#allocation3 + $0x78] sm:$0xff]
        %v4151 = vld [vmem:[#allocation3 + $0x80] sm:$0xff]
        %v4152 = vld [vmem:[#allocation3 + $0x88] sm:$0xff]
        %v4153 = vld [vmem:[#allocation3 + $0x90] sm:$0xff]
        %v4154 = vld [vmem:[#allocation3 + $0x98] sm:$0xff]
        %v4155 = vld [vmem:[#allocation3 + $0xa0] sm:$0xff]
        %v4156 = vld [vmem:[#allocation3 + $0xa8] sm:$0xff]
        %v4157 = vld [vmem:[#allocation3 + $0xb0] sm:$0xff]
        %v4158 = vld [vmem:[#allocation3 + $0xb8] sm:$0xff]
        %v4159 = vld [vmem:[#allocation3 + $0xc0] sm:$0xff]
        %v4160 = vld [vmem:[#allocation3 + $0xc8] sm:$0xff]
        %v4161 = vld [vmem:[#allocation3 + $0xd0] sm:$0xff]
        %v4162 = vld [vmem:[#allocation3 + $0xd8] sm:$0xff]
        %v4163 = vld [vmem:[#allocation3 + $0xe0] sm:$0xff]
        %v4164 = vld [vmem:[#allocation3 + $0xe8] sm:$0xff]
        %v4165 = vld [vmem:[#allocation3 + $0xf0] sm:$0xff]
        %v4166 = vld [vmem:[#allocation3 + $0xf8] sm:$0xff]
        %v4167 = vrcp.pop %v4135
        %v4168 = vrcp.pop %v4136
        %v4169 = vrcp.pop %v4137
        %v4170 = vrcp.pop %v4138
        %v4171 = vrcp.pop %v4139
        %v4172 = vrcp.pop %v4140
        %v4173 = vrcp.pop %v4141
        %v4174 = vrcp.pop %v4142
        %v4175 = vrcp.pop %v4143
        %v4176 = vrcp.pop %v4144
        %v4177 = vrcp.pop %v4145
        %v4178 = vrcp.pop %v4146
        %v4179 = vrcp.pop %v4147
        %v4180 = vrcp.pop %v4148
        %v4181 = vrcp.pop %v4149
        %v4182 = vrcp.pop %v4150
        %v4183 = vrcp.pop %v4151
        %v4184 = vrcp.pop %v4152
        %v4185 = vrcp.pop %v4153
        %v4186 = vrcp.pop %v4154
        %v4187 = vrcp.pop %v4155
        %v4188 = vrcp.pop %v4156
        %v4189 = vrcp.pop %v4157
        %v4190 = vrcp.pop %v4158
        %v4191 = vrcp.pop %v4159
        %v4192 = vrcp.pop %v4160
        %v4193 = vrcp.pop %v4161
        %v4194 = vrcp.pop %v4162
        %v4195 = vrcp.pop %v4163
        %v4196 = vrcp.pop %v4164
        %v4197 = vrcp.pop %v4165
        %v4198 = vrcp.pop %v4166
        %4200 = vset.pattern.permute.xlu0 0
        %4201 = vperm.xlu0 %4200, %v4167
        %v4202 = vpop.permute.xlu0 %4201
        %4205 = vset.pattern.permute.xlu0 0
        %4206 = vperm.xlu0 %4205, %v4168
        %v4207 = vpop.permute.xlu0 %4206
        %4210 = vset.pattern.permute.xlu0 0
        %4211 = vperm.xlu0 %4210, %v4169
        %v4212 = vpop.permute.xlu0 %4211
        %4215 = vset.pattern.permute.xlu0 0
        %4216 = vperm.xlu0 %4215, %v4170
        %v4217 = vpop.permute.xlu0 %4216
        %4220 = vset.pattern.permute.xlu0 0
        %4221 = vperm.xlu0 %4220, %v4171
        %v4222 = vpop.permute.xlu0 %4221
        %4225 = vset.pattern.permute.xlu0 0
        %4226 = vperm.xlu0 %4225, %v4172
        %v4227 = vpop.permute.xlu0 %4226
        %4230 = vset.pattern.permute.xlu0 0
        %4231 = vperm.xlu0 %4230, %v4173
        %v4232 = vpop.permute.xlu0 %4231
        %4235 = vset.pattern.permute.xlu0 0
        %4236 = vperm.xlu0 %4235, %v4174
        %v4237 = vpop.permute.xlu0 %4236
        %4240 = vset.pattern.permute.xlu0 0
        %4241 = vperm.xlu0 %4240, %v4175
        %v4242 = vpop.permute.xlu0 %4241
        %4245 = vset.pattern.permute.xlu0 0
        %4246 = vperm.xlu0 %4245, %v4176
        %v4247 = vpop.permute.xlu0 %4246
        %4250 = vset.pattern.permute.xlu0 0
        %4251 = vperm.xlu0 %4250, %v4177
        %v4252 = vpop.permute.xlu0 %4251
        %4255 = vset.pattern.permute.xlu0 0
        %4256 = vperm.xlu0 %4255, %v4178
        %v4257 = vpop.permute.xlu0 %4256
        %4260 = vset.pattern.permute.xlu0 0
        %4261 = vperm.xlu0 %4260, %v4179
        %v4262 = vpop.permute.xlu0 %4261
        %4265 = vset.pattern.permute.xlu0 0
        %4266 = vperm.xlu0 %4265, %v4180
        %v4267 = vpop.permute.xlu0 %4266
        %4270 = vset.pattern.permute.xlu0 0
        %4271 = vperm.xlu0 %4270, %v4181
        %v4272 = vpop.permute.xlu0 %4271
        %4275 = vset.pattern.permute.xlu0 0
        %4276 = vperm.xlu0 %4275, %v4182
        %v4277 = vpop.permute.xlu0 %4276
        %4280 = vset.pattern.permute.xlu0 0
        %4281 = vperm.xlu0 %4280, %v4183
        %v4282 = vpop.permute.xlu0 %4281
        %4285 = vset.pattern.permute.xlu0 0
        %4286 = vperm.xlu0 %4285, %v4184
        %v4287 = vpop.permute.xlu0 %4286
        %4290 = vset.pattern.permute.xlu0 0
        %4291 = vperm.xlu0 %4290, %v4185
        %v4292 = vpop.permute.xlu0 %4291
        %4295 = vset.pattern.permute.xlu0 0
        %4296 = vperm.xlu0 %4295, %v4186
        %v4297 = vpop.permute.xlu0 %4296
        %4300 = vset.pattern.permute.xlu0 0
        %4301 = vperm.xlu0 %4300, %v4187
        %v4302 = vpop.permute.xlu0 %4301
        %4305 = vset.pattern.permute.xlu0 0
        %4306 = vperm.xlu0 %4305, %v4188
        %v4307 = vpop.permute.xlu0 %4306
        %4310 = vset.pattern.permute.xlu0 0
        %4311 = vperm.xlu0 %4310, %v4189
        %v4312 = vpop.permute.xlu0 %4311
        %4315 = vset.pattern.permute.xlu0 0
        %4316 = vperm.xlu0 %4315, %v4190
        %v4317 = vpop.permute.xlu0 %4316
        %4320 = vset.pattern.permute.xlu0 0
        %4321 = vperm.xlu0 %4320, %v4191
        %v4322 = vpop.permute.xlu0 %4321
        %4325 = vset.pattern.permute.xlu0 0
        %4326 = vperm.xlu0 %4325, %v4192
        %v4327 = vpop.permute.xlu0 %4326
        %4330 = vset.pattern.permute.xlu0 0
        %4331 = vperm.xlu0 %4330, %v4193
        %v4332 = vpop.permute.xlu0 %4331
        %4335 = vset.pattern.permute.xlu0 0
        %4336 = vperm.xlu0 %4335, %v4194
        %v4337 = vpop.permute.xlu0 %4336
        %4340 = vset.pattern.permute.xlu0 0
        %4341 = vperm.xlu0 %4340, %v4195
        %v4342 = vpop.permute.xlu0 %4341
        %4345 = vset.pattern.permute.xlu0 0
        %4346 = vperm.xlu0 %4345, %v4196
        %v4347 = vpop.permute.xlu0 %4346
        %4350 = vset.pattern.permute.xlu0 0
        %4351 = vperm.xlu0 %4350, %v4197
        %v4352 = vpop.permute.xlu0 %4351
        %4355 = vset.pattern.permute.xlu0 0
        %4356 = vperm.xlu0 %4355, %v4198
        %v4357 = vpop.permute.xlu0 %4356
        %v4359 = vmul.f32 %v4103, %v4202
        %v4360 = vmul.f32 %v4104, %v4207
        %v4361 = vmul.f32 %v4105, %v4212
        %v4362 = vmul.f32 %v4106, %v4217
        %v4363 = vmul.f32 %v4107, %v4222
        %v4364 = vmul.f32 %v4108, %v4227
        %v4365 = vmul.f32 %v4109, %v4232
        %v4366 = vmul.f32 %v4110, %v4237
        %v4367 = vmul.f32 %v4111, %v4242
        %v4368 = vmul.f32 %v4112, %v4247
        %v4369 = vmul.f32 %v4113, %v4252
        %v4370 = vmul.f32 %v4114, %v4257
        %v4371 = vmul.f32 %v4115, %v4262
        %v4372 = vmul.f32 %v4116, %v4267
        %v4373 = vmul.f32 %v4117, %v4272
        %v4374 = vmul.f32 %v4118, %v4277
        %v4375 = vmul.f32 %v4119, %v4282
        %v4376 = vmul.f32 %v4120, %v4287
        %v4377 = vmul.f32 %v4121, %v4292
        %v4378 = vmul.f32 %v4122, %v4297
        %v4379 = vmul.f32 %v4123, %v4302
        %v4380 = vmul.f32 %v4124, %v4307
        %v4381 = vmul.f32 %v4125, %v4312
        %v4382 = vmul.f32 %v4126, %v4317
        %v4383 = vmul.f32 %v4127, %v4322
        %v4384 = vmul.f32 %v4128, %v4327
        %v4385 = vmul.f32 %v4129, %v4332
        %v4386 = vmul.f32 %v4130, %v4337
        %v4387 = vmul.f32 %v4131, %v4342
        %v4388 = vmul.f32 %v4132, %v4347
        %v4389 = vmul.f32 %v4133, %v4352
        %v4390 = vmul.f32 %v4134, %v4357
        %v4391 = vpack.c.bf16 %v4359, %v4359
        %v4392 = vpack.c.bf16 %v4360, %v4360
        %v4393 = vpack.c.bf16 %v4361, %v4361
        %v4394 = vpack.c.bf16 %v4362, %v4362
        %v4395 = vpack.c.bf16 %v4363, %v4363
        %v4396 = vpack.c.bf16 %v4364, %v4364
        %v4397 = vpack.c.bf16 %v4365, %v4365
        %v4398 = vpack.c.bf16 %v4366, %v4366
        %v4399 = vpack.c.bf16 %v4367, %v4367
        %v4400 = vpack.c.bf16 %v4368, %v4368
        %v4401 = vpack.c.bf16 %v4369, %v4369
        %v4402 = vpack.c.bf16 %v4370, %v4370
        %v4403 = vpack.c.bf16 %v4371, %v4371
        %v4404 = vpack.c.bf16 %v4372, %v4372
        %v4405 = vpack.c.bf16 %v4373, %v4373
        %v4406 = vpack.c.bf16 %v4374, %v4374
        %v4407 = vpack.c.bf16 %v4375, %v4375
        %v4408 = vpack.c.bf16 %v4376, %v4376
        %v4409 = vpack.c.bf16 %v4377, %v4377
        %v4410 = vpack.c.bf16 %v4378, %v4378
        %v4411 = vpack.c.bf16 %v4379, %v4379
        %v4412 = vpack.c.bf16 %v4380, %v4380
        %v4413 = vpack.c.bf16 %v4381, %v4381
        %v4414 = vpack.c.bf16 %v4382, %v4382
        %v4415 = vpack.c.bf16 %v4383, %v4383
        %v4416 = vpack.c.bf16 %v4384, %v4384
        %v4417 = vpack.c.bf16 %v4385, %v4385
        %v4418 = vpack.c.bf16 %v4386, %v4386
        %v4419 = vpack.c.bf16 %v4387, %v4387
        %v4420 = vpack.c.bf16 %v4388, %v4388
        %v4421 = vpack.c.bf16 %v4389, %v4389
        %v4422 = vpack.c.bf16 %v4390, %v4390
        %vm4423 = vcmask 519168
        %4424 = vst.msk [vmem:[%s332] sm:$0xf] %vm4423, %v4391
        %4425 = vst.msk [vmem:[%s332 + $0x4] sm:$0xf] %vm4423, %v4392
        %4426 = vst.msk [vmem:[%s332 + $0x8] sm:$0xf] %vm4423, %v4393
        %4427 = vst.msk [vmem:[%s332 + $0xc] sm:$0xf] %vm4423, %v4394
        %4428 = vst.msk [vmem:[%s332 + $0x10] sm:$0xf] %vm4423, %v4395
        %4429 = vst.msk [vmem:[%s332 + $0x14] sm:$0xf] %vm4423, %v4396
        %4430 = vst.msk [vmem:[%s332 + $0x18] sm:$0xf] %vm4423, %v4397
        %4431 = vst.msk [vmem:[%s332 + $0x1c] sm:$0xf] %vm4423, %v4398
        %4432 = vst.msk [vmem:[%s332 + $0x20] sm:$0xf] %vm4423, %v4399
        %4433 = vst.msk [vmem:[%s332 + $0x24] sm:$0xf] %vm4423, %v4400
        %4434 = vst.msk [vmem:[%s332 + $0x28] sm:$0xf] %vm4423, %v4401
        %4435 = vst.msk [vmem:[%s332 + $0x2c] sm:$0xf] %vm4423, %v4402
        %4436 = vst.msk [vmem:[%s332 + $0x30] sm:$0xf] %vm4423, %v4403
        %4437 = vst.msk [vmem:[%s332 + $0x34] sm:$0xf] %vm4423, %v4404
        %4438 = vst.msk [vmem:[%s332 + $0x38] sm:$0xf] %vm4423, %v4405
        %4439 = vst.msk [vmem:[%s332 + $0x3c] sm:$0xf] %vm4423, %v4406
        %4440 = vst.msk [vmem:[%s332 + $0x40] sm:$0xf] %vm4423, %v4407
        %4441 = vst.msk [vmem:[%s332 + $0x44] sm:$0xf] %vm4423, %v4408
        %4442 = vst.msk [vmem:[%s332 + $0x48] sm:$0xf] %vm4423, %v4409
        %4443 = vst.msk [vmem:[%s332 + $0x4c] sm:$0xf] %vm4423, %v4410
        %4444 = vst.msk [vmem:[%s332 + $0x50] sm:$0xf] %vm4423, %v4411
        %4445 = vst.msk [vmem:[%s332 + $0x54] sm:$0xf] %vm4423, %v4412
        %4446 = vst.msk [vmem:[%s332 + $0x58] sm:$0xf] %vm4423, %v4413
        %4447 = vst.msk [vmem:[%s332 + $0x5c] sm:$0xf] %vm4423, %v4414
        %4448 = vst.msk [vmem:[%s332 + $0x60] sm:$0xf] %vm4423, %v4415
        %4449 = vst.msk [vmem:[%s332 + $0x64] sm:$0xf] %vm4423, %v4416
        %4450 = vst.msk [vmem:[%s332 + $0x68] sm:$0xf] %vm4423, %v4417
        %4451 = vst.msk [vmem:[%s332 + $0x6c] sm:$0xf] %vm4423, %v4418
        %4452 = vst.msk [vmem:[%s332 + $0x70] sm:$0xf] %vm4423, %v4419
        %4453 = vst.msk [vmem:[%s332 + $0x74] sm:$0xf] %vm4423, %v4420
        %4454 = vst.msk [vmem:[%s332 + $0x78] sm:$0xf] %vm4423, %v4421
        %4455 = vst.msk [vmem:[%s332 + $0x7c] sm:$0xf] %vm4423, %v4422
        %s4456 = sand.u32 %s90, 1
        %s4457 = sand.u32 %s90, 1
        %s4458 = smul.addr %s4457, 128
        %s4459 = scalar_lea.vmem [#allocation6], %s4458
        // Predicated region
        $region78: #{tpu_custom_call.1} parent=68 // pred_check
          %p4460 = pneg %p100
        $region79: #{tpu_custom_call.1} parent=68 // pred_check_branch
          %4462 = sbr.rel (%p4460) target = $region81
        $region80: #{tpu_custom_call.1} parent=68 // pred_region
          %s4463 = smul.u32 16, %s14
          %s4464 = smul.addr %s4463, 4
          %s4465 = scalar_lea.vmem %s3, %s4464
          // Predicated region
          $region82: #{tpu_custom_call.1} parent=80 // pred_check
            _
          $region83: #{tpu_custom_call.1} parent=80 // pred_check_branch
            %4467 = sbr.rel (0) target = $region85
          $region84: #{tpu_custom_call.1} parent=80 // pred_region
            // Predicated region
            $region86: #{tpu_custom_call.1} parent=84 // pred_check
              _
            $region87: #{tpu_custom_call.1} parent=84 // pred_check_branch
              %4469 = sbr.rel target = $region89
            $region88: #{tpu_custom_call.1} parent=84 // pred_region
              // Predicated region
              $region101: #{tpu_custom_call.1} parent=88 // pred_check
                _
              $region102: #{tpu_custom_call.1} parent=88 // pred_check_branch
                %4547 = sbr.rel (0) target = $region104
              $region103: #{tpu_custom_call.1} parent=88 // pred_region
                loop: start=0, step=1, limit=1
                $region105: #{tpu_custom_call.1} parent=103 // loop_pre_header
                  _
                $region106: #{tpu_custom_call.1} parent=103 // loop_header
                  %s4549 = sphi 0, %s4553
                  %p4550 = scmp.ge.s32.totalorder %s4549, 1
                  %s4554 = sphi %s4459, %s4459
                  %s4555 = sphi %s4465, %s4465
                $region107: #{tpu_custom_call.1} parent=103 // loop_header_branch
                  %4552 = sbr.rel (%p4550) target = $region111
                $region108: #{tpu_custom_call.1} parent=103 // loop_body
                  _
                $region109: #{tpu_custom_call.1} parent=103 // loop_footer
                  %s4553 = sadd.s32 1, %s4549
                $region110: #{tpu_custom_call.1} parent=103 // loop_footer_branch
                  %4548 = sbr.rel target = $region106
                $region111: #{tpu_custom_call.1} parent=103 // loop_exit
                  _
                %s4557 = ssub.s32 16, 1
                loop: start=0, step=1, limit=1
                $region112: #{tpu_custom_call.1} parent=103 // loop_pre_header
                  _
                $region113: #{tpu_custom_call.1} parent=103 // loop_header
                  %s4559 = sphi 0, %s4563
                  %p4560 = scmp.ge.s32.totalorder %s4559, 1
                  %s4564 = sphi %s4459, %s4459
                  %s4565 = sphi %s4465, %s4465
                $region114: #{tpu_custom_call.1} parent=103 // loop_header_branch
                  %4562 = sbr.rel (%p4560) target = $region118
                $region115: #{tpu_custom_call.1} parent=103 // loop_body
                  %v4566 = vld [vmem:[%s4564] sm:%s4557]
                  %4567 = vst [vmem:[%s4565] sm:%s4557] %v4566
                  %v4568 = vld [vmem:[%s4564 + $0x4] sm:%s4557]
                  %4569 = vst [vmem:[%s4565 + $0x4] sm:%s4557] %v4568
                  %v4570 = vld [vmem:[%s4564 + $0x8] sm:%s4557]
                  %4571 = vst [vmem:[%s4565 + $0x8] sm:%s4557] %v4570
                  %v4572 = vld [vmem:[%s4564 + $0xc] sm:%s4557]
                  %4573 = vst [vmem:[%s4565 + $0xc] sm:%s4557] %v4572
                  %v4574 = vld [vmem:[%s4564 + $0x10] sm:%s4557]
                  %4575 = vst [vmem:[%s4565 + $0x10] sm:%s4557] %v4574
                  %v4576 = vld [vmem:[%s4564 + $0x14] sm:%s4557]
                  %4577 = vst [vmem:[%s4565 + $0x14] sm:%s4557] %v4576
                  %v4578 = vld [vmem:[%s4564 + $0x18] sm:%s4557]
                  %4579 = vst [vmem:[%s4565 + $0x18] sm:%s4557] %v4578
                  %v4580 = vld [vmem:[%s4564 + $0x1c] sm:%s4557]
                  %4581 = vst [vmem:[%s4565 + $0x1c] sm:%s4557] %v4580
                  %v4582 = vld [vmem:[%s4564 + $0x20] sm:%s4557]
                  %4583 = vst [vmem:[%s4565 + $0x20] sm:%s4557] %v4582
                  %v4584 = vld [vmem:[%s4564 + $0x24] sm:%s4557]
                  %4585 = vst [vmem:[%s4565 + $0x24] sm:%s4557] %v4584
                  %v4586 = vld [vmem:[%s4564 + $0x28] sm:%s4557]
                  %4587 = vst [vmem:[%s4565 + $0x28] sm:%s4557] %v4586
                  %v4588 = vld [vmem:[%s4564 + $0x2c] sm:%s4557]
                  %4589 = vst [vmem:[%s4565 + $0x2c] sm:%s4557] %v4588
                  %v4590 = vld [vmem:[%s4564 + $0x30] sm:%s4557]
                  %4591 = vst [vmem:[%s4565 + $0x30] sm:%s4557] %v4590
                  %v4592 = vld [vmem:[%s4564 + $0x34] sm:%s4557]
                  %4593 = vst [vmem:[%s4565 + $0x34] sm:%s4557] %v4592
                  %v4594 = vld [vmem:[%s4564 + $0x38] sm:%s4557]
                  %4595 = vst [vmem:[%s4565 + $0x38] sm:%s4557] %v4594
                  %v4596 = vld [vmem:[%s4564 + $0x3c] sm:%s4557]
                  %4597 = vst [vmem:[%s4565 + $0x3c] sm:%s4557] %v4596
                  %v4598 = vld [vmem:[%s4564 + $0x40] sm:%s4557]
                  %4599 = vst [vmem:[%s4565 + $0x80] sm:%s4557] %v4598
                  %v4600 = vld [vmem:[%s4564 + $0x44] sm:%s4557]
                  %4601 = vst [vmem:[%s4565 + $0x84] sm:%s4557] %v4600
                  %v4602 = vld [vmem:[%s4564 + $0x48] sm:%s4557]
                  %4603 = vst [vmem:[%s4565 + $0x88] sm:%s4557] %v4602
                  %v4604 = vld [vmem:[%s4564 + $0x4c] sm:%s4557]
                  %4605 = vst [vmem:[%s4565 + $0x8c] sm:%s4557] %v4604
                  %v4606 = vld [vmem:[%s4564 + $0x50] sm:%s4557]
                  %4607 = vst [vmem:[%s4565 + $0x90] sm:%s4557] %v4606
                  %v4608 = vld [vmem:[%s4564 + $0x54] sm:%s4557]
                  %4609 = vst [vmem:[%s4565 + $0x94] sm:%s4557] %v4608
                  %v4610 = vld [vmem:[%s4564 + $0x58] sm:%s4557]
                  %4611 = vst [vmem:[%s4565 + $0x98] sm:%s4557] %v4610
                  %v4612 = vld [vmem:[%s4564 + $0x5c] sm:%s4557]
                  %4613 = vst [vmem:[%s4565 + $0x9c] sm:%s4557] %v4612
                  %v4614 = vld [vmem:[%s4564 + $0x60] sm:%s4557]
                  %4615 = vst [vmem:[%s4565 + $0xa0] sm:%s4557] %v4614
                  %v4616 = vld [vmem:[%s4564 + $0x64] sm:%s4557]
                  %4617 = vst [vmem:[%s4565 + $0xa4] sm:%s4557] %v4616
                  %v4618 = vld [vmem:[%s4564 + $0x68] sm:%s4557]
                  %4619 = vst [vmem:[%s4565 + $0xa8] sm:%s4557] %v4618
                  %v4620 = vld [vmem:[%s4564 + $0x6c] sm:%s4557]
                  %4621 = vst [vmem:[%s4565 + $0xac] sm:%s4557] %v4620
                  %v4622 = vld [vmem:[%s4564 + $0x70] sm:%s4557]
                  %4623 = vst [vmem:[%s4565 + $0xb0] sm:%s4557] %v4622
                  %v4624 = vld [vmem:[%s4564 + $0x74] sm:%s4557]
                  %4625 = vst [vmem:[%s4565 + $0xb4] sm:%s4557] %v4624
                  %v4626 = vld [vmem:[%s4564 + $0x78] sm:%s4557]
                  %4627 = vst [vmem:[%s4565 + $0xb8] sm:%s4557] %v4626
                  %v4628 = vld [vmem:[%s4564 + $0x7c] sm:%s4557]
                  %4629 = vst [vmem:[%s4565 + $0xbc] sm:%s4557] %v4628
                $region116: #{tpu_custom_call.1} parent=103 // loop_footer
                  %s4563 = sadd.s32 1, %s4559
                $region117: #{tpu_custom_call.1} parent=103 // loop_footer_branch
                  %4558 = sbr.rel target = $region113
                $region118: #{tpu_custom_call.1} parent=103 // loop_exit
                  _
              $region104: #{tpu_custom_call.1} parent=88 // pred_fallthru
                _
            $region89: #{tpu_custom_call.1} parent=84 // pred_fallthru
              _
            // Predicated region
            $region90: #{tpu_custom_call.1} parent=84 // pred_check
              _
            $region91: #{tpu_custom_call.1} parent=84 // pred_check_branch
              %4471 = sbr.rel (0) target = $region93
            $region92: #{tpu_custom_call.1} parent=84 // pred_region
              %s4473 = ssub.s32 16, 1
              loop: start=0, step=1, limit=1
              $region94: #{tpu_custom_call.1} parent=92 // loop_pre_header
                _
              $region95: #{tpu_custom_call.1} parent=92 // loop_header
                %s4475 = sphi 0, %s4479
                %p4476 = scmp.ge.s32.totalorder %s4475, 1
                %s4480 = sphi %s4459, %s4459
                %s4481 = sphi %s4465, %s4465
              $region96: #{tpu_custom_call.1} parent=92 // loop_header_branch
                %4478 = sbr.rel (%p4476) target = $region100
              $region97: #{tpu_custom_call.1} parent=92 // loop_body
                %v4482 = vld [vmem:[%s4480] sm:%s4473]
                %4483 = vst [vmem:[%s4481] sm:%s4473] %v4482
                %v4484 = vld [vmem:[%s4480 + $0x4] sm:%s4473]
                %4485 = vst [vmem:[%s4481 + $0x4] sm:%s4473] %v4484
                %v4486 = vld [vmem:[%s4480 + $0x8] sm:%s4473]
                %4487 = vst [vmem:[%s4481 + $0x8] sm:%s4473] %v4486
                %v4488 = vld [vmem:[%s4480 + $0xc] sm:%s4473]
                %4489 = vst [vmem:[%s4481 + $0xc] sm:%s4473] %v4488
                %v4490 = vld [vmem:[%s4480 + $0x10] sm:%s4473]
                %4491 = vst [vmem:[%s4481 + $0x10] sm:%s4473] %v4490
                %v4492 = vld [vmem:[%s4480 + $0x14] sm:%s4473]
                %4493 = vst [vmem:[%s4481 + $0x14] sm:%s4473] %v4492
                %v4494 = vld [vmem:[%s4480 + $0x18] sm:%s4473]
                %4495 = vst [vmem:[%s4481 + $0x18] sm:%s4473] %v4494
                %v4496 = vld [vmem:[%s4480 + $0x1c] sm:%s4473]
                %4497 = vst [vmem:[%s4481 + $0x1c] sm:%s4473] %v4496
                %v4498 = vld [vmem:[%s4480 + $0x20] sm:%s4473]
                %4499 = vst [vmem:[%s4481 + $0x20] sm:%s4473] %v4498
                %v4500 = vld [vmem:[%s4480 + $0x24] sm:%s4473]
                %4501 = vst [vmem:[%s4481 + $0x24] sm:%s4473] %v4500
                %v4502 = vld [vmem:[%s4480 + $0x28] sm:%s4473]
                %4503 = vst [vmem:[%s4481 + $0x28] sm:%s4473] %v4502
                %v4504 = vld [vmem:[%s4480 + $0x2c] sm:%s4473]
                %4505 = vst [vmem:[%s4481 + $0x2c] sm:%s4473] %v4504
                %v4506 = vld [vmem:[%s4480 + $0x30] sm:%s4473]
                %4507 = vst [vmem:[%s4481 + $0x30] sm:%s4473] %v4506
                %v4508 = vld [vmem:[%s4480 + $0x34] sm:%s4473]
                %4509 = vst [vmem:[%s4481 + $0x34] sm:%s4473] %v4508
                %v4510 = vld [vmem:[%s4480 + $0x38] sm:%s4473]
                %4511 = vst [vmem:[%s4481 + $0x38] sm:%s4473] %v4510
                %v4512 = vld [vmem:[%s4480 + $0x3c] sm:%s4473]
                %4513 = vst [vmem:[%s4481 + $0x3c] sm:%s4473] %v4512
                %v4514 = vld [vmem:[%s4480 + $0x40] sm:%s4473]
                %4515 = vst [vmem:[%s4481 + $0x80] sm:%s4473] %v4514
                %v4516 = vld [vmem:[%s4480 + $0x44] sm:%s4473]
                %4517 = vst [vmem:[%s4481 + $0x84] sm:%s4473] %v4516
                %v4518 = vld [vmem:[%s4480 + $0x48] sm:%s4473]
                %4519 = vst [vmem:[%s4481 + $0x88] sm:%s4473] %v4518
                %v4520 = vld [vmem:[%s4480 + $0x4c] sm:%s4473]
                %4521 = vst [vmem:[%s4481 + $0x8c] sm:%s4473] %v4520
                %v4522 = vld [vmem:[%s4480 + $0x50] sm:%s4473]
                %4523 = vst [vmem:[%s4481 + $0x90] sm:%s4473] %v4522
                %v4524 = vld [vmem:[%s4480 + $0x54] sm:%s4473]
                %4525 = vst [vmem:[%s4481 + $0x94] sm:%s4473] %v4524
                %v4526 = vld [vmem:[%s4480 + $0x58] sm:%s4473]
                %4527 = vst [vmem:[%s4481 + $0x98] sm:%s4473] %v4526
                %v4528 = vld [vmem:[%s4480 + $0x5c] sm:%s4473]
                %4529 = vst [vmem:[%s4481 + $0x9c] sm:%s4473] %v4528
                %v4530 = vld [vmem:[%s4480 + $0x60] sm:%s4473]
                %4531 = vst [vmem:[%s4481 + $0xa0] sm:%s4473] %v4530
                %v4532 = vld [vmem:[%s4480 + $0x64] sm:%s4473]
                %4533 = vst [vmem:[%s4481 + $0xa4] sm:%s4473] %v4532
                %v4534 = vld [vmem:[%s4480 + $0x68] sm:%s4473]
                %4535 = vst [vmem:[%s4481 + $0xa8] sm:%s4473] %v4534
                %v4536 = vld [vmem:[%s4480 + $0x6c] sm:%s4473]
                %4537 = vst [vmem:[%s4481 + $0xac] sm:%s4473] %v4536
                %v4538 = vld [vmem:[%s4480 + $0x70] sm:%s4473]
                %4539 = vst [vmem:[%s4481 + $0xb0] sm:%s4473] %v4538
                %v4540 = vld [vmem:[%s4480 + $0x74] sm:%s4473]
                %4541 = vst [vmem:[%s4481 + $0xb4] sm:%s4473] %v4540
                %v4542 = vld [vmem:[%s4480 + $0x78] sm:%s4473]
                %4543 = vst [vmem:[%s4481 + $0xb8] sm:%s4473] %v4542
                %v4544 = vld [vmem:[%s4480 + $0x7c] sm:%s4473]
                %4545 = vst [vmem:[%s4481 + $0xbc] sm:%s4473] %v4544
              $region98: #{tpu_custom_call.1} parent=92 // loop_footer
                %s4479 = sadd.s32 1, %s4475
              $region99: #{tpu_custom_call.1} parent=92 // loop_footer_branch
                %4474 = sbr.rel target = $region95
              $region100: #{tpu_custom_call.1} parent=92 // loop_exit
                _
            $region93: #{tpu_custom_call.1} parent=84 // pred_fallthru
              _
          $region85: #{tpu_custom_call.1} parent=80 // pred_fallthru
            _
          %4630 = vnop
        $region81: #{tpu_custom_call.1} parent=68 // pred_fallthru
          _
      $region69: #{tpu_custom_call.1} parent=5 // pred_fallthru
        _
      %p4631 = scmp.le.s32.totalorder 2, %s9
      // Predicated region
      $region119: #{tpu_custom_call.1} parent=5 // pred_check
        %p4632 = pneg %p4631
      $region120: #{tpu_custom_call.1} parent=5 // pred_check_branch
        %4634 = sbr.rel (%p4632) target = $region122
      $region121: #{tpu_custom_call.1} parent=5 // pred_region
        %s4635 = ssub.s32 %s9, 2
        // Predicated region
        $region123: #{tpu_custom_call.1} parent=121 // pred_check
          %p4636 = pneg %p106
        $region124: #{tpu_custom_call.1} parent=121 // pred_check_branch
          %4638 = sbr.rel (%p4636) target = $region126
        $region125: #{tpu_custom_call.1} parent=121 // pred_region
          %s4639 = sand.u32 %s91, 1
          %s4640 = sand.u32 %s91, 1
          %s4641 = smul.addr %s4640, 128
          %s4642 = scalar_lea.vmem [#allocation6], %s4641
        $region126: #{tpu_custom_call.1} parent=121 // pred_fallthru
          _
      $region122: #{tpu_custom_call.1} parent=5 // pred_fallthru
        _
    $region6: #{tpu_custom_call.1} parent=1 // loop_footer
      %s13 = sadd.s32 1, %s9
    $region7: #{tpu_custom_call.1} parent=1 // loop_footer_branch
      %8 = sbr.rel target = $region3
    $region8: #{tpu_custom_call.1} parent=1 // loop_exit
      _

</llo_original>
